<compile_context>
chip_gen: v6e
topology: v6e:2x2x1
jax: 0.10.0
libtpu: 0.0.40
codegen_flags: <defaults>
</compile_context>

<pallas_src>
import functools
import math

import jax
import jax.numpy as jnp
from jax import lax
from jax.experimental import pallas as pl
from jax.experimental.pallas import tpu as pltpu

_PI = math.pi
_THRESHOLD = 1e-10
_LANE = 128           # vreg lane width; also padded logits width
_HALF = _LANE // 2    # 64: lane offset of the odd member of a window-position pair


def pack_codebook_paired(w_re, w_im):
    """Pack the complex codebook ONCE (outside the step loop) for the kernel.

    Layout (2V, 3*128), block-diagonal in the pair dimension:
      rows [0, V)  : token gathered into the EVEN half of a lane pair
      rows [V, 2V) : token gathered into the ODD  half of a lane pair
      lane groups  : [ re | im | |W| ], even token in lanes [0, K),
                     odd token in lanes [64, 64+K) of each 128-lane group.
    |W| is precomputed here so the per-element sqrt never runs in the kernel.
    """
    K, V = w_re.shape
    assert K <= _HALF, "lane-paired layout needs K <= 64"
    w_abs = jnp.sqrt(w_re * w_re + w_im * w_im)
    big = jnp.zeros((2 * V, 3 * _LANE), jnp.float32)
    for c, comp in enumerate((w_re, w_im, w_abs)):
        ct = comp.T.astype(jnp.float32)                                     # (V, K)
        big = big.at[:V, c * _LANE:c * _LANE + K].set(ct)                   # even member
        big = big.at[V:, c * _LANE + _HALF:c * _LANE + _HALF + K].set(ct)   # odd member
    return big


def _atan_01(t):
    """atan(t) for t in [0, 1]: Cephes atanf polynomial + tan(pi/8) reduction."""
    big = t > 0.4142135623730950488      # tan(pi/8)
    # Exact division (review correctness note): this quotient feeds the
    # polynomial directly and its error is summed over the whole window.
    tr = jnp.where(big, (t - 1.0) / (t + 1.0), t)
    z = tr * tr
    p = ((((8.05374449538e-2 * z - 1.38776856032e-1) * z
           + 1.99777106478e-1) * z - 3.33329491539e-1) * z * tr + tr)
    return jnp.where(big, jnp.float32(0.25 * _PI) + p, p)


def _abs_atan2(y, x):
    """|atan2(y, x)| from VPU-friendly ops (x, y are clamped away from 0)."""
    ay = jnp.abs(y)
    ax = jnp.abs(x)
    mx = jnp.maximum(ay, ax)
    mn = jnp.minimum(ay, ax)
    a = _atan_01(mn / mx)                # exact divide; mx >= 1e-10
    a = jnp.where(ay > ax, jnp.float32(0.5 * _PI) - a, a)
    return jnp.where(x < 0.0, jnp.float32(_PI) - a, a)


def _fruitfly_kernel(idsh_ref, aux_ref, table_ref, aw_ref, ab_ref, logits_ref,
                     *, k_dim, top_k):
    tb = logits_ref.shape[0]           # batch rows handled by this grid step
    n = idsh_ref.shape[0]              # tb * pairs (lane-paired window rows)
    pairs = n // tb
    two_v = table_ref.shape[0]         # 2 * vocab_size

    # ---- gather W[:, id] via a one-hot matmul on the (otherwise idle) MXU ----
    # idsh holds [id_even, id_odd + V]; the two one-hots are disjoint so their
    # float sum is their union.  One matmul gathers re, im and |W| for TWO
    # window positions per 128-lane vreg.  Exact: each output is a single
    # table element (all other products are exactly zero).
    col = lax.broadcasted_iota(jnp.int32, (n, two_v), 1)
    onehot = ((col == idsh_ref[:, 0:1]).astype(jnp.float32)
              + (col == idsh_ref[:, 1:2]).astype(jnp.float32))
    g = jnp.dot(onehot, table_ref[...], preferred_element_type=jnp.float32)  # (n, 384)

    wg_re = g[:, 0:_LANE]              # lanes [0,64)=even token, [64,128)=odd token
    wg_im = g[:, _LANE:2 * _LANE]
    w_abs = g[:, 2 * _LANE:3 * _LANE]  # |W| precomputed in the packed table

    orr = aux_ref[:, 0, :]             # cos(pos), paired into the same lane layout
    ori = aux_ref[:, 1, :]             # sin(pos)
    msk = aux_ref[:, 2, :]             # non-zero mask

    # phis = W[:, id] * conj(one_root)   (full 128-lane vregs)
    phi_re = wg_re * orr + wg_im * ori
    phi_im = wg_im * orr - wg_re * ori

    # clamp tiny real/imag components to +threshold (matches the torch module)
    t = jnp.float32(_THRESHOLD)
    phi_re = jnp.where(jnp.abs(phi_re) < t, t, phi_re)
    phi_im = jnp.where(jnp.abs(phi_im) < t, t, phi_im)

    ang = _abs_atan2(phi_im, phi_re)   # |angle(phis)|

    # added_factors=True: (|W| + |angle|) * non_zeros
    contrib = (w_abs + ang) * msk      # (n, 128)

    # ---- per-batch-row window sum via a tiny selection matmul (MXU) ----------
    row = lax.broadcasted_iota(jnp.int32, (tb, n), 0)
    cq = lax.broadcasted_iota(jnp.int32, (tb, n), 1)
    sel = ((cq >= row * pairs) & (cq < row * pairs + pairs)).astype(jnp.float32)
    pf2 = jnp.dot(sel, contrib, preferred_element_type=jnp.float32)   # (tb, 128)
    # fold the odd-token lane half onto the even half -> pf[b, k], k in [0, 64)
    pf = (pf2 + pltpu.roll(pf2, shift=_HALF, axis=1))[:, :_HALF]

    # ---- iterative top-k binarisation (k small & static, lowest-index ties) --
    # Batched over tb rows, so the 2*top_k cross-lane reductions cover the whole
    # block at once (review #9).
    kcol = lax.broadcasted_iota(jnp.int32, (tb, _HALF), 1)
    neg_inf = jnp.float32(-jnp.inf)
    pf = jnp.where(kcol < k_dim, pf, neg_inf)      # mask pad columns if K < 64
    feats = jnp.zeros((tb, _HALF), jnp.float32)
    for _ in range(top_k):
        mx = jnp.max(pf, axis=-1, keepdims=True)
        idx = jnp.min(jnp.where(pf == mx, kcol, _HALF), axis=-1, keepdims=True)
        oh = kcol == idx
        feats = jnp.where(oh, 1.0, feats)
        pf = jnp.where(oh, neg_inf, pf)

    # ---- action head, lane-dense (tb, 128) output -----------------------------
    logits_ref[...] = (jnp.dot(feats, aw_ref[...], preferred_element_type=jnp.float32)
                       + ab_ref[...])


def _choose_tb(batch):
    # Review #1/#6: amortize per-step overhead and feed the MXU many LHS rows.
    # Capped at 128 so the in-kernel (TB*P, 2V) one-hot stays comfortably in VMEM.
    for tb in (128, 64, 32, 16, 8):
        if batch >= tb:
            return tb
    return 8


def fruitfly_forward(obs, table, act_w, act_b, *, top_k):
    """Forward pass (logits) of IMPALAComplexFruitfly.

    obs   : (B, 1, S) int32 token ids, 0 = pad
    table : (2V, 384) packed codebook from pack_codebook_paired()
    act_w : (A, K) torch-style Linear weight, act_b : (A,) bias
    """
    ids = obs[:, 0, :].astype(jnp.int32)
    B, S = ids.shape
    A, K = act_w.shape
    V = table.shape[0] // 2
    assert table.shape == (2 * V, 3 * _LANE)
    assert K <= _HALF and A <= _LANE and top_k <= K

    # positional "roots of unity" + mask (torch semantics).
    nz = ids != 0
    nzf = nz.astype(jnp.float32)
    position_ids = jnp.cumsum(nzf, axis=-1)
    sent_len = jnp.sum(nzf, axis=-1)
    total = jnp.sum(nz)
    denom = jnp.where(total == 0, jnp.float32(S), sent_len)
    pos = jnp.float32(_PI) * position_ids / denom[:, None]
    orr, ori = jnp.cos(pos), jnp.sin(pos)

    # pad window length to even (the extra slot has mask 0) and batch to TB rows.
    TB = _choose_tb(B)
    S2 = S + (S % 2)
    P = S2 // 2
    B_pad = ((B + TB - 1) // TB) * TB

    def pad2(x):
        return jnp.pad(x, ((0, B_pad - B), (0, S2 - S)))

    ids_p, orr_p, ori_p, msk_p = pad2(ids), pad2(orr), pad2(ori), pad2(nzf)

    # lane-pair the window: even position -> lanes [0,64), odd -> lanes [64,128)
    def expand_pairs(x):                                    # (B_pad,S2)->(B_pad*P,128)
        xp = x.reshape(B_pad * P, 2)
        return jnp.concatenate([jnp.repeat(xp[:, 0:1], _HALF, axis=1),
                                jnp.repeat(xp[:, 1:2], _HALF, axis=1)], axis=1)

    aux = jnp.stack([expand_pairs(orr_p), expand_pairs(ori_p), expand_pairs(msk_p)],
                    axis=1).astype(jnp.float32)             # (B_pad*P, 3, 128)

    # shifted ids: the odd pair member indexes the second (row offset V) table half
    idsh = (ids_p.reshape(B_pad * P, 2)
            + jnp.array([0, V], jnp.int32)[None, :]).astype(jnp.int32)

    # zero-padded, lane-dense action head
    aw_pad = jnp.zeros((_HALF, _LANE), jnp.float32).at[:K, :A].set(act_w.T)
    ab_pad = jnp.zeros((1, _LANE), jnp.float32).at[0, :A].set(act_b)

    kernel = functools.partial(_fruitfly_kernel, k_dim=K, top_k=top_k)
    logits_pad = pl.pallas_call(
        kernel,
        out_shape=jax.ShapeDtypeStruct((B_pad, _LANE), jnp.float32),
        grid_spec=pltpu.PrefetchScalarGridSpec(
            num_scalar_prefetch=0,
            grid=(B_pad // TB,),
            in_specs=[
                pl.BlockSpec((TB * P, 2), lambda i: (i, 0)),
                pl.BlockSpec((TB * P, 3, _LANE), lambda i: (i, 0, 0)),
                # Resident packed codebook (1.5 MiB at V=512): constant block
                # index across the grid, no per-token gather DMAs.
                pl.BlockSpec(table.shape, lambda i: (0, 0)),
                pl.BlockSpec((_HALF, _LANE), lambda i: (0, 0)),
                pl.BlockSpec((1, _LANE), lambda i: (0, 0)),
            ],
            out_specs=pl.BlockSpec((TB, _LANE), lambda i: (i, 0)),
        ),
        compiler_params=pltpu.CompilerParams(
            # no cross-step state remains -> batch axis can be "parallel"
            # (v7x megacore sharding; no-op on single-TC v5e/v6e).
            dimension_semantics=("parallel",),
            vmem_limit_bytes=32 * 1024 * 1024,
        ),
    )(idsh, aux, table, aw_pad, ab_pad)
    return logits_pad[:B, :A]


def reference_forward(obs, w_re, w_im, act_w, act_b, top_k):
    """Pure-JAX reference mirroring the torch forward (sanity check only)."""
    ids = obs[:, 0, :].astype(jnp.int32)
    B, S = ids.shape
    nz = ids != 0
    position_ids = jnp.cumsum(nz.astype(jnp.float32), axis=-1)
    sent_len = jnp.sum(nz.astype(jnp.float32), axis=-1)
    total = jnp.sum(nz)
    denom = jnp.where(total == 0, jnp.float32(S), sent_len)
    pos = jnp.float32(_PI) * position_ids / denom[:, None]
    one_roots = jnp.cos(pos) + 1j * jnp.sin(pos)
    wg = (w_re + 1j * w_im).T[ids]                                    # (B, S, K)
    w_abs = jnp.abs(wg)
    phis = wg * jnp.conj(one_roots)[..., None]
    t = _THRESHOLD
    pr, pi_ = jnp.real(phis), jnp.imag(phis)
    pr = jnp.where((pr < t) & (pr > -t), t, pr)
    pi_ = jnp.where((pi_ < t) & (pi_ > -t), t, pi_)
    ang = jnp.abs(jnp.arctan2(pi_, pr))
    pf = jnp.sum((w_abs + ang) * nz.astype(jnp.float32)[..., None], axis=1)
    order = jnp.argsort(-pf, axis=-1)[:, :top_k]
    feats = jnp.zeros_like(pf).at[jnp.arange(B)[:, None], order].set(1.0)
    return feats @ act_w.T + act_b[None, :]


if __name__ == "__main__":
    B, S = 4, 11          # window_size = 11 in the module
    K, k_top = 64, 8      # fruit-fly hash width K, active units k
    V = 512               # synthetic vocab_size
    A = 6                 # num_outputs (action logits)

    key = jax.random.PRNGKey(0)
    k_ids, k_w, k_aw, k_ab = jax.random.split(key, 4)

    ids = jax.random.randint(k_ids, (B, 1, S), 1, V, dtype=jnp.int32)
    lengths = jnp.array([11, 7, 9, 4], dtype=jnp.int32)
    pad = (jnp.arange(S)[None, :] < lengths[:, None]).astype(jnp.int32)
    obs = ids * pad[:, None, :]                                       # (B, 1, S) zero padded

    # W = view_as_complex(randn(K, V, 2))
    w_ri = jax.random.normal(k_w, (K, V, 2), dtype=jnp.float32)
    w_re, w_im = w_ri[..., 0], w_ri[..., 1]
    # action_outputs = nn.Linear(K, num_outputs)
    act_w = jax.random.normal(k_aw, (A, K), dtype=jnp.float32) / jnp.sqrt(jnp.float32(K))
    act_b = jax.random.normal(k_ab, (A,), dtype=jnp.float32) * 0.01

    # Pack the codebook (with precomputed |W|, lane-paired layout) ONCE.
    table = pack_codebook_paired(w_re, w_im)

    fwd = jax.jit(functools.partial(fruitfly_forward, top_k=k_top))
    logits = fwd(obs, table, act_w, act_b)
    logits = jax.block_until_ready(logits)

    ref = reference_forward(obs, w_re, w_im, act_w, act_b, k_top)
    assert logits.shape == (B, A)
    assert jnp.allclose(logits, ref, atol=1e-4, rtol=1e-4)
    print("KERNEL_OK")
</pallas_src>

<mosaic_0001>
module attributes {stable_mosaic.version = 11 : i64} {
  func.func @_fruitfly_kernel(%arg0: i32, %arg1: memref<48x2xi32, #tpu.memory_space<vmem>>, %arg2: memref<48x3x128xf32, #tpu.memory_space<vmem>>, %arg3: memref<1024x384xf32, #tpu.memory_space<vmem>>, %arg4: memref<64x128xf32, #tpu.memory_space<vmem>>, %arg5: memref<1x128xf32, #tpu.memory_space<vmem>>, %arg6: memref<8x128xf32, #tpu.memory_space<vmem>>) attributes {dimension_semantics = [#tpu.dimension_semantics<parallel>], iteration_bounds = array<i64: 1>, scalar_prefetch = 0 : i64, scratch_operands = 0 : i64, tpu.core_type = #tpu.core_type<tc>, window_params = [{transform_indices = @transform_0, window_bounds = array<i64: 48, 2>}, {transform_indices = @transform_1, window_bounds = array<i64: 48, 3, 128>}, {pipeline_mode = #tpu.pipeline_mode<synchronous>, transform_indices = @transform_2, window_bounds = array<i64: 1024, 384>}, {pipeline_mode = #tpu.pipeline_mode<synchronous>, transform_indices = @transform_3, window_bounds = array<i64: 64, 128>}, {pipeline_mode = #tpu.pipeline_mode<synchronous>, transform_indices = @transform_4, window_bounds = array<i64: 1, 128>}, {transform_indices = @transform_5, window_bounds = array<i64: 8, 128>}]} {
    %0 = tpu.iota {dimensions = array<i32: 1>} : vector<48x1024xi32>
    %c0 = arith.constant 0 : index
    %c0_0 = arith.constant 0 : index
    %1 = vector.load %arg1[%c0, %c0_0] : memref<48x2xi32, #tpu.memory_space<vmem>>, vector<48x1xi32>
    %2 = vector.broadcast %1 : vector<48x1xi32> to vector<48x1024xi32>
    %3 = arith.cmpi eq, %0, %2 : vector<48x1024xi32>
    %4 = arith.extui %3 : vector<48x1024xi1> to vector<48x1024xi32>
    %5 = arith.sitofp %4 : vector<48x1024xi32> to vector<48x1024xf32>
    %c0_1 = arith.constant 0 : index
    %c1 = arith.constant 1 : index
    %6 = vector.load %arg1[%c0_1, %c1] : memref<48x2xi32, #tpu.memory_space<vmem>>, vector<48x1xi32>
    %7 = vector.broadcast %6 : vector<48x1xi32> to vector<48x1024xi32>
    %8 = arith.cmpi eq, %0, %7 : vector<48x1024xi32>
    %9 = arith.extui %8 : vector<48x1024xi1> to vector<48x1024xi32>
    %10 = arith.sitofp %9 : vector<48x1024xi32> to vector<48x1024xf32>
    %11 = arith.addf %5, %10 : vector<48x1024xf32>
    %c0_2 = arith.constant 0 : index
    %c0_3 = arith.constant 0 : index
    %12 = vector.load %arg3[%c0_2, %c0_3] : memref<1024x384xf32, #tpu.memory_space<vmem>>, vector<1024x384xf32>
    %cst = arith.constant dense<0.000000e+00> : vector<48x384xf32>
    %13 = tpu.matmul %11, %12, %cst {dimension_numbers = #tpu.dot_dimension_numbers<[1], [0], [0], [1], [0, 0, 1, 1], [], []>} : vector<48x1024xf32>, vector<1024x384xf32>, vector<48x384xf32> -> vector<48x384xf32>
    %14 = vector.extract_strided_slice %13 {offsets = [0, 0], sizes = [48, 128], strides = [1, 1]} : vector<48x384xf32> to vector<48x128xf32>
    %15 = vector.extract_strided_slice %13 {offsets = [0, 128], sizes = [48, 128], strides = [1, 1]} : vector<48x384xf32> to vector<48x128xf32>
    %16 = vector.extract_strided_slice %13 {offsets = [0, 256], sizes = [48, 128], strides = [1, 1]} : vector<48x384xf32> to vector<48x128xf32>
    %c0_4 = arith.constant 0 : index
    %c0_5 = arith.constant 0 : index
    %c0_6 = arith.constant 0 : index
    %17 = vector.load %arg2[%c0_4, %c0_5, %c0_6] : memref<48x3x128xf32, #tpu.memory_space<vmem>>, vector<48x1x128xf32>
    %18 = vector.shape_cast %17 : vector<48x1x128xf32> to vector<48x128xf32>
    %c0_7 = arith.constant 0 : index
    %c1_8 = arith.constant 1 : index
    %c0_9 = arith.constant 0 : index
    %19 = vector.load %arg2[%c0_7, %c1_8, %c0_9] : memref<48x3x128xf32, #tpu.memory_space<vmem>>, vector<48x1x128xf32>
    %20 = vector.shape_cast %19 : vector<48x1x128xf32> to vector<48x128xf32>
    %c0_10 = arith.constant 0 : index
    %c2 = arith.constant 2 : index
    %c0_11 = arith.constant 0 : index
    %21 = vector.load %arg2[%c0_10, %c2, %c0_11] : memref<48x3x128xf32, #tpu.memory_space<vmem>>, vector<48x1x128xf32>
    %22 = vector.shape_cast %21 : vector<48x1x128xf32> to vector<48x128xf32>
    %23 = arith.mulf %14, %18 : vector<48x128xf32>
    %24 = arith.mulf %15, %20 : vector<48x128xf32>
    %25 = arith.addf %23, %24 : vector<48x128xf32>
    %26 = arith.mulf %15, %18 : vector<48x128xf32>
    %27 = arith.mulf %14, %20 : vector<48x128xf32>
    %28 = arith.subf %26, %27 : vector<48x128xf32>
    %29 = math.absf %25 : vector<48x128xf32>
    %cst_12 = arith.constant 1.000000e-10 : f32
    %30 = vector.broadcast %cst_12 : f32 to vector<48x128xf32>
    %31 = arith.cmpf olt, %29, %30 : vector<48x128xf32>
    %cst_13 = arith.constant 1.000000e-10 : f32
    %32 = vector.broadcast %cst_13 : f32 to vector<48x128xf32>
    %33 = arith.select %31, %32, %25 : vector<48x128xi1>, vector<48x128xf32>
    %34 = math.absf %28 : vector<48x128xf32>
    %cst_14 = arith.constant 1.000000e-10 : f32
    %35 = vector.broadcast %cst_14 : f32 to vector<48x128xf32>
    %36 = arith.cmpf olt, %34, %35 : vector<48x128xf32>
    %cst_15 = arith.constant 1.000000e-10 : f32
    %37 = vector.broadcast %cst_15 : f32 to vector<48x128xf32>
    %38 = arith.select %36, %37, %28 : vector<48x128xi1>, vector<48x128xf32>
    %39 = math.absf %38 : vector<48x128xf32>
    %40 = math.absf %33 : vector<48x128xf32>
    %41 = arith.maximumf %39, %40 : vector<48x128xf32>
    %42 = arith.minimumf %39, %40 : vector<48x128xf32>
    %43 = arith.divf %42, %41 : vector<48x128xf32>
    %cst_16 = arith.constant 0.414213568 : f32
    %44 = vector.broadcast %cst_16 : f32 to vector<48x128xf32>
    %45 = arith.cmpf ogt, %43, %44 : vector<48x128xf32>
    %cst_17 = arith.constant 1.000000e+00 : f32
    %46 = vector.broadcast %cst_17 : f32 to vector<48x128xf32>
    %47 = arith.subf %43, %46 : vector<48x128xf32>
    %cst_18 = arith.constant 1.000000e+00 : f32
    %48 = vector.broadcast %cst_18 : f32 to vector<48x128xf32>
    %49 = arith.addf %43, %48 : vector<48x128xf32>
    %50 = arith.divf %47, %49 : vector<48x128xf32>
    %51 = arith.select %45, %50, %43 : vector<48x128xi1>, vector<48x128xf32>
    %52 = arith.mulf %51, %51 : vector<48x128xf32>
    %cst_19 = arith.constant 0.0805374458 : f32
    %53 = vector.broadcast %cst_19 : f32 to vector<48x128xf32>
    %54 = arith.mulf %53, %52 : vector<48x128xf32>
    %cst_20 = arith.constant 0.138776854 : f32
    %55 = vector.broadcast %cst_20 : f32 to vector<48x128xf32>
    %56 = arith.subf %54, %55 : vector<48x128xf32>
    %57 = arith.mulf %56, %52 : vector<48x128xf32>
    %cst_21 = arith.constant 0.199777111 : f32
    %58 = vector.broadcast %cst_21 : f32 to vector<48x128xf32>
    %59 = arith.addf %57, %58 : vector<48x128xf32>
    %60 = arith.mulf %59, %52 : vector<48x128xf32>
    %cst_22 = arith.constant 0.333329499 : f32
    %61 = vector.broadcast %cst_22 : f32 to vector<48x128xf32>
    %62 = arith.subf %60, %61 : vector<48x128xf32>
    %63 = arith.mulf %62, %52 : vector<48x128xf32>
    %64 = arith.mulf %63, %51 : vector<48x128xf32>
    %65 = arith.addf %64, %51 : vector<48x128xf32>
    %cst_23 = arith.constant 0.785398185 : f32
    %66 = vector.broadcast %cst_23 : f32 to vector<48x128xf32>
    %67 = arith.addf %66, %65 : vector<48x128xf32>
    %68 = arith.select %45, %67, %65 : vector<48x128xi1>, vector<48x128xf32>
    %69 = arith.cmpf ogt, %39, %40 : vector<48x128xf32>
    %cst_24 = arith.constant 1.57079637 : f32
    %70 = vector.broadcast %cst_24 : f32 to vector<48x128xf32>
    %71 = arith.subf %70, %68 : vector<48x128xf32>
    %72 = arith.select %69, %71, %68 : vector<48x128xi1>, vector<48x128xf32>
    %cst_25 = arith.constant 0.000000e+00 : f32
    %73 = vector.broadcast %cst_25 : f32 to vector<48x128xf32>
    %74 = arith.cmpf olt, %33, %73 : vector<48x128xf32>
    %cst_26 = arith.constant 3.14159274 : f32
    %75 = vector.broadcast %cst_26 : f32 to vector<48x128xf32>
    %76 = arith.subf %75, %72 : vector<48x128xf32>
    %77 = arith.select %74, %76, %72 : vector<48x128xi1>, vector<48x128xf32>
    %78 = arith.addf %16, %77 : vector<48x128xf32>
    %79 = arith.mulf %78, %22 : vector<48x128xf32>
    %80 = tpu.iota {dimensions = array<i32: 0>} : vector<8x48xi32>
    %81 = tpu.iota {dimensions = array<i32: 1>} : vector<8x48xi32>
    %c6_i32 = arith.constant 6 : i32
    %82 = vector.broadcast %c6_i32 : i32 to vector<8x48xi32>
    %83 = arith.muli %80, %82 : vector<8x48xi32>
    %84 = arith.cmpi sge, %81, %83 : vector<8x48xi32>
    %c6_i32_27 = arith.constant 6 : i32
    %85 = vector.broadcast %c6_i32_27 : i32 to vector<8x48xi32>
    %86 = arith.muli %80, %85 : vector<8x48xi32>
    %c6_i32_28 = arith.constant 6 : i32
    %87 = vector.broadcast %c6_i32_28 : i32 to vector<8x48xi32>
    %88 = arith.addi %86, %87 : vector<8x48xi32>
    %89 = arith.cmpi slt, %81, %88 : vector<8x48xi32>
    %90 = arith.andi %84, %89 : vector<8x48xi1>
    %91 = arith.extui %90 : vector<8x48xi1> to vector<8x48xi32>
    %92 = arith.sitofp %91 : vector<8x48xi32> to vector<8x48xf32>
    %cst_29 = arith.constant dense<0.000000e+00> : vector<8x128xf32>
    %93 = tpu.matmul %92, %79, %cst_29 {dimension_numbers = #tpu.dot_dimension_numbers<[1], [0], [0], [1], [0, 0, 1, 1], [], []>} : vector<8x48xf32>, vector<48x128xf32>, vector<8x128xf32> -> vector<8x128xf32>
    %c64_i32 = arith.constant 64 : i32
    %94 = tpu.dynamic_rotate %93 by %c64_i32 dim 1 : vector<8x128xf32>, i32 -> vector<8x128xf32>
    %95 = arith.addf %93, %94 : vector<8x128xf32>
    %96 = vector.extract_strided_slice %95 {offsets = [0, 0], sizes = [8, 64], strides = [1, 1]} : vector<8x128xf32> to vector<8x64xf32>
    %97 = tpu.iota {dimensions = array<i32: 1>} : vector<8x64xi32>
    %c64_i32_30 = arith.constant 64 : i32
    %98 = vector.broadcast %c64_i32_30 : i32 to vector<8x64xi32>
    %99 = arith.cmpi slt, %97, %98 : vector<8x64xi32>
    %cst_31 = arith.constant 0xFF800000 : f32
    %100 = vector.broadcast %cst_31 : f32 to vector<8x64xf32>
    %101 = arith.select %99, %96, %100 : vector<8x64xi1>, vector<8x64xf32>
    %cst_32 = arith.constant 0.000000e+00 : f32
    %102 = vector.broadcast %cst_32 : f32 to vector<8x64xf32>
    %cst_33 = arith.constant dense<0xFF800000> : vector<8xf32>
    %103 = vector.multi_reduction <maximumf>, %101, %cst_33 [1] : vector<8x64xf32> to vector<8xf32>
    %104 = vector.shape_cast %103 : vector<8xf32> to vector<8x1xf32>
    %105 = vector.broadcast %104 : vector<8x1xf32> to vector<8x64xf32>
    %106 = arith.cmpf oeq, %101, %105 : vector<8x64xf32>
    %c64_i32_34 = arith.constant 64 : i32
    %107 = vector.broadcast %c64_i32_34 : i32 to vector<8x64xi32>
    %108 = arith.select %106, %97, %107 : vector<8x64xi1>, vector<8x64xi32>
    %cst_35 = arith.constant dense<2147483647> : vector<8xi32>
    %109 = vector.multi_reduction <minsi>, %108, %cst_35 [1] : vector<8x64xi32> to vector<8xi32>
    %110 = vector.shape_cast %109 : vector<8xi32> to vector<8x1xi32>
    %111 = vector.broadcast %110 : vector<8x1xi32> to vector<8x64xi32>
    %112 = arith.cmpi eq, %97, %111 : vector<8x64xi32>
    %cst_36 = arith.constant 1.000000e+00 : f32
    %113 = vector.broadcast %cst_36 : f32 to vector<8x64xf32>
    %114 = arith.select %112, %113, %102 : vector<8x64xi1>, vector<8x64xf32>
    %cst_37 = arith.constant 0xFF800000 : f32
    %115 = vector.broadcast %cst_37 : f32 to vector<8x64xf32>
    %116 = arith.select %112, %115, %101 : vector<8x64xi1>, vector<8x64xf32>
    %cst_38 = arith.constant dense<0xFF800000> : vector<8xf32>
    %117 = vector.multi_reduction <maximumf>, %116, %cst_38 [1] : vector<8x64xf32> to vector<8xf32>
    %118 = vector.shape_cast %117 : vector<8xf32> to vector<8x1xf32>
    %119 = vector.broadcast %118 : vector<8x1xf32> to vector<8x64xf32>
    %120 = arith.cmpf oeq, %116, %119 : vector<8x64xf32>
    %c64_i32_39 = arith.constant 64 : i32
    %121 = vector.broadcast %c64_i32_39 : i32 to vector<8x64xi32>
    %122 = arith.select %120, %97, %121 : vector<8x64xi1>, vector<8x64xi32>
    %cst_40 = arith.constant dense<2147483647> : vector<8xi32>
    %123 = vector.multi_reduction <minsi>, %122, %cst_40 [1] : vector<8x64xi32> to vector<8xi32>
    %124 = vector.shape_cast %123 : vector<8xi32> to vector<8x1xi32>
    %125 = vector.broadcast %124 : vector<8x1xi32> to vector<8x64xi32>
    %126 = arith.cmpi eq, %97, %125 : vector<8x64xi32>
    %cst_41 = arith.constant 1.000000e+00 : f32
    %127 = vector.broadcast %cst_41 : f32 to vector<8x64xf32>
    %128 = arith.select %126, %127, %114 : vector<8x64xi1>, vector<8x64xf32>
    %cst_42 = arith.constant 0xFF800000 : f32
    %129 = vector.broadcast %cst_42 : f32 to vector<8x64xf32>
    %130 = arith.select %126, %129, %116 : vector<8x64xi1>, vector<8x64xf32>
    %cst_43 = arith.constant dense<0xFF800000> : vector<8xf32>
    %131 = vector.multi_reduction <maximumf>, %130, %cst_43 [1] : vector<8x64xf32> to vector<8xf32>
    %132 = vector.shape_cast %131 : vector<8xf32> to vector<8x1xf32>
    %133 = vector.broadcast %132 : vector<8x1xf32> to vector<8x64xf32>
    %134 = arith.cmpf oeq, %130, %133 : vector<8x64xf32>
    %c64_i32_44 = arith.constant 64 : i32
    %135 = vector.broadcast %c64_i32_44 : i32 to vector<8x64xi32>
    %136 = arith.select %134, %97, %135 : vector<8x64xi1>, vector<8x64xi32>
    %cst_45 = arith.constant dense<2147483647> : vector<8xi32>
    %137 = vector.multi_reduction <minsi>, %136, %cst_45 [1] : vector<8x64xi32> to vector<8xi32>
    %138 = vector.shape_cast %137 : vector<8xi32> to vector<8x1xi32>
    %139 = vector.broadcast %138 : vector<8x1xi32> to vector<8x64xi32>
    %140 = arith.cmpi eq, %97, %139 : vector<8x64xi32>
    %cst_46 = arith.constant 1.000000e+00 : f32
    %141 = vector.broadcast %cst_46 : f32 to vector<8x64xf32>
    %142 = arith.select %140, %141, %128 : vector<8x64xi1>, vector<8x64xf32>
    %cst_47 = arith.constant 0xFF800000 : f32
    %143 = vector.broadcast %cst_47 : f32 to vector<8x64xf32>
    %144 = arith.select %140, %143, %130 : vector<8x64xi1>, vector<8x64xf32>
    %cst_48 = arith.constant dense<0xFF800000> : vector<8xf32>
    %145 = vector.multi_reduction <maximumf>, %144, %cst_48 [1] : vector<8x64xf32> to vector<8xf32>
    %146 = vector.shape_cast %145 : vector<8xf32> to vector<8x1xf32>
    %147 = vector.broadcast %146 : vector<8x1xf32> to vector<8x64xf32>
    %148 = arith.cmpf oeq, %144, %147 : vector<8x64xf32>
    %c64_i32_49 = arith.constant 64 : i32
    %149 = vector.broadcast %c64_i32_49 : i32 to vector<8x64xi32>
    %150 = arith.select %148, %97, %149 : vector<8x64xi1>, vector<8x64xi32>
    %cst_50 = arith.constant dense<2147483647> : vector<8xi32>
    %151 = vector.multi_reduction <minsi>, %150, %cst_50 [1] : vector<8x64xi32> to vector<8xi32>
    %152 = vector.shape_cast %151 : vector<8xi32> to vector<8x1xi32>
    %153 = vector.broadcast %152 : vector<8x1xi32> to vector<8x64xi32>
    %154 = arith.cmpi eq, %97, %153 : vector<8x64xi32>
    %cst_51 = arith.constant 1.000000e+00 : f32
    %155 = vector.broadcast %cst_51 : f32 to vector<8x64xf32>
    %156 = arith.select %154, %155, %142 : vector<8x64xi1>, vector<8x64xf32>
    %cst_52 = arith.constant 0xFF800000 : f32
    %157 = vector.broadcast %cst_52 : f32 to vector<8x64xf32>
    %158 = arith.select %154, %157, %144 : vector<8x64xi1>, vector<8x64xf32>
    %cst_53 = arith.constant dense<0xFF800000> : vector<8xf32>
    %159 = vector.multi_reduction <maximumf>, %158, %cst_53 [1] : vector<8x64xf32> to vector<8xf32>
    %160 = vector.shape_cast %159 : vector<8xf32> to vector<8x1xf32>
    %161 = vector.broadcast %160 : vector<8x1xf32> to vector<8x64xf32>
    %162 = arith.cmpf oeq, %158, %161 : vector<8x64xf32>
    %c64_i32_54 = arith.constant 64 : i32
    %163 = vector.broadcast %c64_i32_54 : i32 to vector<8x64xi32>
    %164 = arith.select %162, %97, %163 : vector<8x64xi1>, vector<8x64xi32>
    %cst_55 = arith.constant dense<2147483647> : vector<8xi32>
    %165 = vector.multi_reduction <minsi>, %164, %cst_55 [1] : vector<8x64xi32> to vector<8xi32>
    %166 = vector.shape_cast %165 : vector<8xi32> to vector<8x1xi32>
    %167 = vector.broadcast %166 : vector<8x1xi32> to vector<8x64xi32>
    %168 = arith.cmpi eq, %97, %167 : vector<8x64xi32>
    %cst_56 = arith.constant 1.000000e+00 : f32
    %169 = vector.broadcast %cst_56 : f32 to vector<8x64xf32>
    %170 = arith.select %168, %169, %156 : vector<8x64xi1>, vector<8x64xf32>
    %cst_57 = arith.constant 0xFF800000 : f32
    %171 = vector.broadcast %cst_57 : f32 to vector<8x64xf32>
    %172 = arith.select %168, %171, %158 : vector<8x64xi1>, vector<8x64xf32>
    %cst_58 = arith.constant dense<0xFF800000> : vector<8xf32>
    %173 = vector.multi_reduction <maximumf>, %172, %cst_58 [1] : vector<8x64xf32> to vector<8xf32>
    %174 = vector.shape_cast %173 : vector<8xf32> to vector<8x1xf32>
    %175 = vector.broadcast %174 : vector<8x1xf32> to vector<8x64xf32>
    %176 = arith.cmpf oeq, %172, %175 : vector<8x64xf32>
    %c64_i32_59 = arith.constant 64 : i32
    %177 = vector.broadcast %c64_i32_59 : i32 to vector<8x64xi32>
    %178 = arith.select %176, %97, %177 : vector<8x64xi1>, vector<8x64xi32>
    %cst_60 = arith.constant dense<2147483647> : vector<8xi32>
    %179 = vector.multi_reduction <minsi>, %178, %cst_60 [1] : vector<8x64xi32> to vector<8xi32>
    %180 = vector.shape_cast %179 : vector<8xi32> to vector<8x1xi32>
    %181 = vector.broadcast %180 : vector<8x1xi32> to vector<8x64xi32>
    %182 = arith.cmpi eq, %97, %181 : vector<8x64xi32>
    %cst_61 = arith.constant 1.000000e+00 : f32
    %183 = vector.broadcast %cst_61 : f32 to vector<8x64xf32>
    %184 = arith.select %182, %183, %170 : vector<8x64xi1>, vector<8x64xf32>
    %cst_62 = arith.constant 0xFF800000 : f32
    %185 = vector.broadcast %cst_62 : f32 to vector<8x64xf32>
    %186 = arith.select %182, %185, %172 : vector<8x64xi1>, vector<8x64xf32>
    %cst_63 = arith.constant dense<0xFF800000> : vector<8xf32>
    %187 = vector.multi_reduction <maximumf>, %186, %cst_63 [1] : vector<8x64xf32> to vector<8xf32>
    %188 = vector.shape_cast %187 : vector<8xf32> to vector<8x1xf32>
    %189 = vector.broadcast %188 : vector<8x1xf32> to vector<8x64xf32>
    %190 = arith.cmpf oeq, %186, %189 : vector<8x64xf32>
    %c64_i32_64 = arith.constant 64 : i32
    %191 = vector.broadcast %c64_i32_64 : i32 to vector<8x64xi32>
    %192 = arith.select %190, %97, %191 : vector<8x64xi1>, vector<8x64xi32>
    %cst_65 = arith.constant dense<2147483647> : vector<8xi32>
    %193 = vector.multi_reduction <minsi>, %192, %cst_65 [1] : vector<8x64xi32> to vector<8xi32>
    %194 = vector.shape_cast %193 : vector<8xi32> to vector<8x1xi32>
    %195 = vector.broadcast %194 : vector<8x1xi32> to vector<8x64xi32>
    %196 = arith.cmpi eq, %97, %195 : vector<8x64xi32>
    %cst_66 = arith.constant 1.000000e+00 : f32
    %197 = vector.broadcast %cst_66 : f32 to vector<8x64xf32>
    %198 = arith.select %196, %197, %184 : vector<8x64xi1>, vector<8x64xf32>
    %cst_67 = arith.constant 0xFF800000 : f32
    %199 = vector.broadcast %cst_67 : f32 to vector<8x64xf32>
    %200 = arith.select %196, %199, %186 : vector<8x64xi1>, vector<8x64xf32>
    %cst_68 = arith.constant dense<0xFF800000> : vector<8xf32>
    %201 = vector.multi_reduction <maximumf>, %200, %cst_68 [1] : vector<8x64xf32> to vector<8xf32>
    %202 = vector.shape_cast %201 : vector<8xf32> to vector<8x1xf32>
    %203 = vector.broadcast %202 : vector<8x1xf32> to vector<8x64xf32>
    %204 = arith.cmpf oeq, %200, %203 : vector<8x64xf32>
    %c64_i32_69 = arith.constant 64 : i32
    %205 = vector.broadcast %c64_i32_69 : i32 to vector<8x64xi32>
    %206 = arith.select %204, %97, %205 : vector<8x64xi1>, vector<8x64xi32>
    %cst_70 = arith.constant dense<2147483647> : vector<8xi32>
    %207 = vector.multi_reduction <minsi>, %206, %cst_70 [1] : vector<8x64xi32> to vector<8xi32>
    %208 = vector.shape_cast %207 : vector<8xi32> to vector<8x1xi32>
    %209 = vector.broadcast %208 : vector<8x1xi32> to vector<8x64xi32>
    %210 = arith.cmpi eq, %97, %209 : vector<8x64xi32>
    %cst_71 = arith.constant 1.000000e+00 : f32
    %211 = vector.broadcast %cst_71 : f32 to vector<8x64xf32>
    %212 = arith.select %210, %211, %198 : vector<8x64xi1>, vector<8x64xf32>
    %c0_72 = arith.constant 0 : index
    %c0_73 = arith.constant 0 : index
    %213 = vector.load %arg4[%c0_72, %c0_73] : memref<64x128xf32, #tpu.memory_space<vmem>>, vector<64x128xf32>
    %cst_74 = arith.constant dense<0.000000e+00> : vector<8x128xf32>
    %214 = tpu.matmul %212, %213, %cst_74 {dimension_numbers = #tpu.dot_dimension_numbers<[1], [0], [0], [1], [0, 0, 1, 1], [], []>} : vector<8x64xf32>, vector<64x128xf32>, vector<8x128xf32> -> vector<8x128xf32>
    %c0_75 = arith.constant 0 : index
    %c0_76 = arith.constant 0 : index
    %215 = vector.load %arg5[%c0_75, %c0_76] : memref<1x128xf32, #tpu.memory_space<vmem>>, vector<1x128xf32>
    %216 = vector.broadcast %215 : vector<1x128xf32> to vector<8x128xf32>
    %217 = arith.addf %214, %216 : vector<8x128xf32>
    %c0_77 = arith.constant 0 : index
    %c0_78 = arith.constant 0 : index
    %218 = vector.load %arg6[%c0_77, %c0_78] : memref<8x128xf32, #tpu.memory_space<vmem>>, vector<8x128xf32>
    tpu.vector_store %arg6[%c0_77, %c0_78], %217 {strides = array<i32>} : memref<8x128xf32, #tpu.memory_space<vmem>>, vector<8x128xf32>,
    return
  }
  func.func @transform_0(%arg0: i32) -> (i32, i32) {
    %c0_i32 = arith.constant 0 : i32
    %c0_i32_0 = arith.constant 0 : i32
    return %arg0, %c0_i32 : i32, i32
  }
  func.func @transform_1(%arg0: i32) -> (i32, i32, i32) {
    %c0_i32 = arith.constant 0 : i32
    %c0_i32_0 = arith.constant 0 : i32
    %c0_i32_1 = arith.constant 0 : i32
    return %arg0, %c0_i32, %c0_i32_0 : i32, i32, i32
  }
  func.func @transform_2(%arg0: i32) -> (i32, i32) {
    %c0_i32 = arith.constant 0 : i32
    %c0_i32_0 = arith.constant 0 : i32
    %c0_i32_1 = arith.constant 0 : i32
    return %c0_i32, %c0_i32_0 : i32, i32
  }
  func.func @transform_3(%arg0: i32) -> (i32, i32) {
    %c0_i32 = arith.constant 0 : i32
    %c0_i32_0 = arith.constant 0 : i32
    %c0_i32_1 = arith.constant 0 : i32
    return %c0_i32, %c0_i32_0 : i32, i32
  }
  func.func @transform_4(%arg0: i32) -> (i32, i32) {
    %c0_i32 = arith.constant 0 : i32
    %c0_i32_0 = arith.constant 0 : i32
    %c0_i32_1 = arith.constant 0 : i32
    return %c0_i32, %c0_i32_0 : i32, i32
  }
  func.func @transform_5(%arg0: i32) -> (i32, i32) {
    %c0_i32 = arith.constant 0 : i32
    %c0_i32_0 = arith.constant 0 : i32
    return %arg0, %c0_i32 : i32, i32
  }
}

</mosaic_0001>

<llo_original>
// kernel: fruitfly_forward.1
$region0: #{fruitfly_forward.1}
  #allocation0 [shape = 'u32[]', space=smem, size = 0x4, offset = 0x4, fixed_abs, tag = 'smem constant byte address 0x4 - core index']
  #allocation1 [shape = 'u32[144,128]{1,0:T(1,128)}', space=vmem, size = 0x12000, scoped, tag = 'internal scratch']
  %s0 = inlined_call_operand.vmem [shape: s32[48,2], index: 0, kind: input, shape index: {}]
  %s1 = inlined_call_operand.vmem [shape: f32[48,3,128], index: 1, kind: input, shape index: {}]
  %s2 = inlined_call_operand.hbm [shape: f32[1024,384], index: 2, kind: input, shape index: {}]
  %s3 = inlined_call_operand.vmem [shape: f32[64,128], index: 3, kind: input, shape index: {}]
  %s4 = inlined_call_operand.vmem [shape: f32[1,128], index: 4, kind: input, shape index: {}]
  %s5 = inlined_call_operand.vmem [shape: f32[8,128], index: 5, kind: output, shape index: {}]
  %s6 = sld [smem:[#allocation0]]
  $region34: #{fruitfly_forward.1} parent=0
    _
  %s8 = ssub.s32 1, %s6
  %s9 = scalar_select 0, %s8, %s6
  $region1: #{fruitfly_forward.1} parent=0
    #allocation2 [shape = 'u8[1572864]{0}', space=vmem, size = 0x180000, scoped, tag = 'input window, operand 2, single buffered']
    #allocation3 [shape = 's32[1]{0}', space=sflag, size = 0x4, scoped, tag = 'scoped memory for fruitfly_forward.1']
    %10 = vsyncpa [#allocation3], 0
    // Predicated region
    $region2: #{fruitfly_forward.1} parent=1 // pred_check
      _
    $region3: #{fruitfly_forward.1} parent=1 // pred_check_branch
      %12 = sbr.rel (0) target = $region5
    $region4: #{fruitfly_forward.1} parent=1 // pred_region
      _
    $region5: #{fruitfly_forward.1} parent=1 // pred_fallthru
      _
    // Predicated region
    $region6: #{fruitfly_forward.1} parent=1 // pred_check
      _
    $region7: #{fruitfly_forward.1} parent=1 // pred_check_branch
      %14 = sbr.rel (0) target = $region9
    $region8: #{fruitfly_forward.1} parent=1 // pred_region
      _
    $region9: #{fruitfly_forward.1} parent=1 // pred_fallthru
      _
    // Predicated region
    $region10: #{fruitfly_forward.1} parent=1 // pred_check
      _
    $region11: #{fruitfly_forward.1} parent=1 // pred_check_branch
      %16 = sbr.rel (0) target = $region13
    $region12: #{fruitfly_forward.1} parent=1 // pred_region
      %s18 = ssub.s32 49152, 49152
      %19 = vsyncadd [#allocation3], %s18
      %s20 = sshll.u32 [#allocation2], 4
      %s21 = int_to_ptr.vmem [resolvable:$true] %s20
      %26 = dma.hbm_to_vmem [thread:$0]  %s2, 49152, %s21, [#allocation3], 384, 384, 24
    $region13: #{fruitfly_forward.1} parent=1 // pred_fallthru
      _
    // Predicated region
    $region14: #{fruitfly_forward.1} parent=1 // pred_check
      _
    $region15: #{fruitfly_forward.1} parent=1 // pred_check_branch
      %28 = sbr.rel (0) target = $region17
    $region16: #{fruitfly_forward.1} parent=1 // pred_region
      _
    $region17: #{fruitfly_forward.1} parent=1 // pred_fallthru
      _
    // Predicated region
    $region18: #{fruitfly_forward.1} parent=1 // pred_check
      _
    $region19: #{fruitfly_forward.1} parent=1 // pred_check_branch
      %30 = sbr.rel (0) target = $region21
    $region20: #{fruitfly_forward.1} parent=1 // pred_region
      _
    $region21: #{fruitfly_forward.1} parent=1 // pred_fallthru
      _
    // Predicated region
    $region22: #{fruitfly_forward.1} parent=1 // pred_check
      _
    $region23: #{fruitfly_forward.1} parent=1 // pred_check_branch
      %32 = sbr.rel (0) target = $region25
    $region24: #{fruitfly_forward.1} parent=1 // pred_region
      %33 = dma.done [#allocation3], 49152
    $region25: #{fruitfly_forward.1} parent=1 // pred_fallthru
      _
    %v34 = vlaneseq
    %v35 = vand.u32 %v34, 127
    %v36 = vadd.s32 %v35, 128
    %v37 = vadd.s32 %v35, 256
    %v38 = vadd.s32 %v35, 384
    %v39 = vadd.s32 %v35, 512
    %v40 = vadd.s32 %v35, 640
    %v41 = vadd.s32 %v35, 768
    %v42 = vadd.s32 %v35, 896
    %v43 = vld [vmem:[%s0] sm:$0xff]
    %v44 = vld [vmem:[%s0 + $0x8] sm:$0xff]
    %v45 = vld [vmem:[%s0 + $0x10] sm:$0xff]
    %v46 = vld [vmem:[%s0 + $0x18] sm:$0xff]
    %v47 = vld [vmem:[%s0 + $0x20] sm:$0xff]
    %v48 = vld [vmem:[%s0 + $0x28] sm:$0xff]
    %49 = vset.pattern.permute.xlu0 0
    %50 = vperm.xlu0 %49, %v43
    %v51 = vpop.permute.xlu0 %50
    %52 = vset.pattern.permute.xlu0 0
    %53 = vperm.xlu0 %52, %v44
    %v54 = vpop.permute.xlu0 %53
    %55 = vset.pattern.permute.xlu0 0
    %56 = vperm.xlu0 %55, %v45
    %v57 = vpop.permute.xlu0 %56
    %58 = vset.pattern.permute.xlu0 0
    %59 = vperm.xlu0 %58, %v46
    %v60 = vpop.permute.xlu0 %59
    %61 = vset.pattern.permute.xlu0 0
    %62 = vperm.xlu0 %61, %v47
    %v63 = vpop.permute.xlu0 %62
    %64 = vset.pattern.permute.xlu0 0
    %65 = vperm.xlu0 %64, %v48
    %v66 = vpop.permute.xlu0 %65
    %vm67 = vcmp.eq.s32.totalorder %v35, %v51
    %vm68 = vcmp.eq.s32.totalorder %v36, %v51
    %vm69 = vcmp.eq.s32.totalorder %v37, %v51
    %vm70 = vcmp.eq.s32.totalorder %v38, %v51
    %vm71 = vcmp.eq.s32.totalorder %v39, %v51
    %vm72 = vcmp.eq.s32.totalorder %v40, %v51
    %vm73 = vcmp.eq.s32.totalorder %v41, %v51
    %vm74 = vcmp.eq.s32.totalorder %v42, %v51
    %vm75 = vcmp.eq.s32.totalorder %v35, %v54
    %vm76 = vcmp.eq.s32.totalorder %v36, %v54
    %vm77 = vcmp.eq.s32.totalorder %v37, %v54
    %vm78 = vcmp.eq.s32.totalorder %v38, %v54
    %vm79 = vcmp.eq.s32.totalorder %v39, %v54
    %vm80 = vcmp.eq.s32.totalorder %v40, %v54
    %vm81 = vcmp.eq.s32.totalorder %v41, %v54
    %vm82 = vcmp.eq.s32.totalorder %v42, %v54
    %vm83 = vcmp.eq.s32.totalorder %v35, %v57
    %vm84 = vcmp.eq.s32.totalorder %v36, %v57
    %vm85 = vcmp.eq.s32.totalorder %v37, %v57
    %vm86 = vcmp.eq.s32.totalorder %v38, %v57
    %vm87 = vcmp.eq.s32.totalorder %v39, %v57
    %vm88 = vcmp.eq.s32.totalorder %v40, %v57
    %vm89 = vcmp.eq.s32.totalorder %v41, %v57
    %vm90 = vcmp.eq.s32.totalorder %v42, %v57
    %vm91 = vcmp.eq.s32.totalorder %v35, %v60
    %vm92 = vcmp.eq.s32.totalorder %v36, %v60
    %vm93 = vcmp.eq.s32.totalorder %v37, %v60
    %vm94 = vcmp.eq.s32.totalorder %v38, %v60
    %vm95 = vcmp.eq.s32.totalorder %v39, %v60
    %vm96 = vcmp.eq.s32.totalorder %v40, %v60
    %vm97 = vcmp.eq.s32.totalorder %v41, %v60
    %vm98 = vcmp.eq.s32.totalorder %v42, %v60
    %vm99 = vcmp.eq.s32.totalorder %v35, %v63
    %vm100 = vcmp.eq.s32.totalorder %v36, %v63
    %vm101 = vcmp.eq.s32.totalorder %v37, %v63
    %vm102 = vcmp.eq.s32.totalorder %v38, %v63
    %vm103 = vcmp.eq.s32.totalorder %v39, %v63
    %vm104 = vcmp.eq.s32.totalorder %v40, %v63
    %vm105 = vcmp.eq.s32.totalorder %v41, %v63
    %vm106 = vcmp.eq.s32.totalorder %v42, %v63
    %vm107 = vcmp.eq.s32.totalorder %v35, %v66
    %vm108 = vcmp.eq.s32.totalorder %v36, %v66
    %vm109 = vcmp.eq.s32.totalorder %v37, %v66
    %vm110 = vcmp.eq.s32.totalorder %v38, %v66
    %vm111 = vcmp.eq.s32.totalorder %v39, %v66
    %vm112 = vcmp.eq.s32.totalorder %v40, %v66
    %vm113 = vcmp.eq.s32.totalorder %v41, %v66
    %vm114 = vcmp.eq.s32.totalorder %v42, %v66
    %v115 = vsel %vm67, 1, 0
    %v116 = vsel %vm68, 1, 0
    %v117 = vsel %vm69, 1, 0
    %v118 = vsel %vm70, 1, 0
    %v119 = vsel %vm71, 1, 0
    %v120 = vsel %vm72, 1, 0
    %v121 = vsel %vm73, 1, 0
    %v122 = vsel %vm74, 1, 0
    %v123 = vsel %vm75, 1, 0
    %v124 = vsel %vm76, 1, 0
    %v125 = vsel %vm77, 1, 0
    %v126 = vsel %vm78, 1, 0
    %v127 = vsel %vm79, 1, 0
    %v128 = vsel %vm80, 1, 0
    %v129 = vsel %vm81, 1, 0
    %v130 = vsel %vm82, 1, 0
    %v131 = vsel %vm83, 1, 0
    %v132 = vsel %vm84, 1, 0
    %v133 = vsel %vm85, 1, 0
    %v134 = vsel %vm86, 1, 0
    %v135 = vsel %vm87, 1, 0
    %v136 = vsel %vm88, 1, 0
    %v137 = vsel %vm89, 1, 0
    %v138 = vsel %vm90, 1, 0
    %v139 = vsel %vm91, 1, 0
    %v140 = vsel %vm92, 1, 0
    %v141 = vsel %vm93, 1, 0
    %v142 = vsel %vm94, 1, 0
    %v143 = vsel %vm95, 1, 0
    %v144 = vsel %vm96, 1, 0
    %v145 = vsel %vm97, 1, 0
    %v146 = vsel %vm98, 1, 0
    %v147 = vsel %vm99, 1, 0
    %v148 = vsel %vm100, 1, 0
    %v149 = vsel %vm101, 1, 0
    %v150 = vsel %vm102, 1, 0
    %v151 = vsel %vm103, 1, 0
    %v152 = vsel %vm104, 1, 0
    %v153 = vsel %vm105, 1, 0
    %v154 = vsel %vm106, 1, 0
    %v155 = vsel %vm107, 1, 0
    %v156 = vsel %vm108, 1, 0
    %v157 = vsel %vm109, 1, 0
    %v158 = vsel %vm110, 1, 0
    %v159 = vsel %vm111, 1, 0
    %v160 = vsel %vm112, 1, 0
    %v161 = vsel %vm113, 1, 0
    %v162 = vsel %vm114, 1, 0
    %v163 = vcvt.s32.f32 %v115
    %v164 = vcvt.s32.f32 %v116
    %v165 = vcvt.s32.f32 %v117
    %v166 = vcvt.s32.f32 %v118
    %v167 = vcvt.s32.f32 %v119
    %v168 = vcvt.s32.f32 %v120
    %v169 = vcvt.s32.f32 %v121
    %v170 = vcvt.s32.f32 %v122
    %v171 = vcvt.s32.f32 %v123
    %v172 = vcvt.s32.f32 %v124
    %v173 = vcvt.s32.f32 %v125
    %v174 = vcvt.s32.f32 %v126
    %v175 = vcvt.s32.f32 %v127
    %v176 = vcvt.s32.f32 %v128
    %v177 = vcvt.s32.f32 %v129
    %v178 = vcvt.s32.f32 %v130
    %v179 = vcvt.s32.f32 %v131
    %v180 = vcvt.s32.f32 %v132
    %v181 = vcvt.s32.f32 %v133
    %v182 = vcvt.s32.f32 %v134
    %v183 = vcvt.s32.f32 %v135
    %v184 = vcvt.s32.f32 %v136
    %v185 = vcvt.s32.f32 %v137
    %v186 = vcvt.s32.f32 %v138
    %v187 = vcvt.s32.f32 %v139
    %v188 = vcvt.s32.f32 %v140
    %v189 = vcvt.s32.f32 %v141
    %v190 = vcvt.s32.f32 %v142
    %v191 = vcvt.s32.f32 %v143
    %v192 = vcvt.s32.f32 %v144
    %v193 = vcvt.s32.f32 %v145
    %v194 = vcvt.s32.f32 %v146
    %v195 = vcvt.s32.f32 %v147
    %v196 = vcvt.s32.f32 %v148
    %v197 = vcvt.s32.f32 %v149
    %v198 = vcvt.s32.f32 %v150
    %v199 = vcvt.s32.f32 %v151
    %v200 = vcvt.s32.f32 %v152
    %v201 = vcvt.s32.f32 %v153
    %v202 = vcvt.s32.f32 %v154
    %v203 = vcvt.s32.f32 %v155
    %v204 = vcvt.s32.f32 %v156
    %v205 = vcvt.s32.f32 %v157
    %v206 = vcvt.s32.f32 %v158
    %v207 = vcvt.s32.f32 %v159
    %v208 = vcvt.s32.f32 %v160
    %v209 = vcvt.s32.f32 %v161
    %v210 = vcvt.s32.f32 %v162
    %211 = vset.pattern.permute.xlu0 1
    %212 = vperm.xlu0 %211, %v43
    %v213 = vpop.permute.xlu0 %212
    %214 = vset.pattern.permute.xlu0 1
    %215 = vperm.xlu0 %214, %v44
    %v216 = vpop.permute.xlu0 %215
    %217 = vset.pattern.permute.xlu0 1
    %218 = vperm.xlu0 %217, %v45
    %v219 = vpop.permute.xlu0 %218
    %220 = vset.pattern.permute.xlu0 1
    %221 = vperm.xlu0 %220, %v46
    %v222 = vpop.permute.xlu0 %221
    %223 = vset.pattern.permute.xlu0 1
    %224 = vperm.xlu0 %223, %v47
    %v225 = vpop.permute.xlu0 %224
    %226 = vset.pattern.permute.xlu0 1
    %227 = vperm.xlu0 %226, %v48
    %v228 = vpop.permute.xlu0 %227
    %vm229 = vcmp.eq.s32.totalorder %v35, %v213
    %vm230 = vcmp.eq.s32.totalorder %v36, %v213
    %vm231 = vcmp.eq.s32.totalorder %v37, %v213
    %vm232 = vcmp.eq.s32.totalorder %v38, %v213
    %vm233 = vcmp.eq.s32.totalorder %v39, %v213
    %vm234 = vcmp.eq.s32.totalorder %v40, %v213
    %vm235 = vcmp.eq.s32.totalorder %v41, %v213
    %vm236 = vcmp.eq.s32.totalorder %v42, %v213
    %vm237 = vcmp.eq.s32.totalorder %v35, %v216
    %vm238 = vcmp.eq.s32.totalorder %v36, %v216
    %vm239 = vcmp.eq.s32.totalorder %v37, %v216
    %vm240 = vcmp.eq.s32.totalorder %v38, %v216
    %vm241 = vcmp.eq.s32.totalorder %v39, %v216
    %vm242 = vcmp.eq.s32.totalorder %v40, %v216
    %vm243 = vcmp.eq.s32.totalorder %v41, %v216
    %vm244 = vcmp.eq.s32.totalorder %v42, %v216
    %vm245 = vcmp.eq.s32.totalorder %v35, %v219
    %vm246 = vcmp.eq.s32.totalorder %v36, %v219
    %vm247 = vcmp.eq.s32.totalorder %v37, %v219
    %vm248 = vcmp.eq.s32.totalorder %v38, %v219
    %vm249 = vcmp.eq.s32.totalorder %v39, %v219
    %vm250 = vcmp.eq.s32.totalorder %v40, %v219
    %vm251 = vcmp.eq.s32.totalorder %v41, %v219
    %vm252 = vcmp.eq.s32.totalorder %v42, %v219
    %vm253 = vcmp.eq.s32.totalorder %v35, %v222
    %vm254 = vcmp.eq.s32.totalorder %v36, %v222
    %vm255 = vcmp.eq.s32.totalorder %v37, %v222
    %vm256 = vcmp.eq.s32.totalorder %v38, %v222
    %vm257 = vcmp.eq.s32.totalorder %v39, %v222
    %vm258 = vcmp.eq.s32.totalorder %v40, %v222
    %vm259 = vcmp.eq.s32.totalorder %v41, %v222
    %vm260 = vcmp.eq.s32.totalorder %v42, %v222
    %vm261 = vcmp.eq.s32.totalorder %v35, %v225
    %vm262 = vcmp.eq.s32.totalorder %v36, %v225
    %vm263 = vcmp.eq.s32.totalorder %v37, %v225
    %vm264 = vcmp.eq.s32.totalorder %v38, %v225
    %vm265 = vcmp.eq.s32.totalorder %v39, %v225
    %vm266 = vcmp.eq.s32.totalorder %v40, %v225
    %vm267 = vcmp.eq.s32.totalorder %v41, %v225
    %vm268 = vcmp.eq.s32.totalorder %v42, %v225
    %vm269 = vcmp.eq.s32.totalorder %v35, %v228
    %vm270 = vcmp.eq.s32.totalorder %v36, %v228
    %vm271 = vcmp.eq.s32.totalorder %v37, %v228
    %vm272 = vcmp.eq.s32.totalorder %v38, %v228
    %vm273 = vcmp.eq.s32.totalorder %v39, %v228
    %vm274 = vcmp.eq.s32.totalorder %v40, %v228
    %vm275 = vcmp.eq.s32.totalorder %v41, %v228
    %vm276 = vcmp.eq.s32.totalorder %v42, %v228
    %v277 = vsel %vm229, 1, 0
    %v278 = vsel %vm230, 1, 0
    %v279 = vsel %vm231, 1, 0
    %v280 = vsel %vm232, 1, 0
    %v281 = vsel %vm233, 1, 0
    %v282 = vsel %vm234, 1, 0
    %v283 = vsel %vm235, 1, 0
    %v284 = vsel %vm236, 1, 0
    %v285 = vsel %vm237, 1, 0
    %v286 = vsel %vm238, 1, 0
    %v287 = vsel %vm239, 1, 0
    %v288 = vsel %vm240, 1, 0
    %v289 = vsel %vm241, 1, 0
    %v290 = vsel %vm242, 1, 0
    %v291 = vsel %vm243, 1, 0
    %v292 = vsel %vm244, 1, 0
    %v293 = vsel %vm245, 1, 0
    %v294 = vsel %vm246, 1, 0
    %v295 = vsel %vm247, 1, 0
    %v296 = vsel %vm248, 1, 0
    %v297 = vsel %vm249, 1, 0
    %v298 = vsel %vm250, 1, 0
    %v299 = vsel %vm251, 1, 0
    %v300 = vsel %vm252, 1, 0
    %v301 = vsel %vm253, 1, 0
    %v302 = vsel %vm254, 1, 0
    %v303 = vsel %vm255, 1, 0
    %v304 = vsel %vm256, 1, 0
    %v305 = vsel %vm257, 1, 0
    %v306 = vsel %vm258, 1, 0
    %v307 = vsel %vm259, 1, 0
    %v308 = vsel %vm260, 1, 0
    %v309 = vsel %vm261, 1, 0
    %v310 = vsel %vm262, 1, 0
    %v311 = vsel %vm263, 1, 0
    %v312 = vsel %vm264, 1, 0
    %v313 = vsel %vm265, 1, 0
    %v314 = vsel %vm266, 1, 0
    %v315 = vsel %vm267, 1, 0
    %v316 = vsel %vm268, 1, 0
    %v317 = vsel %vm269, 1, 0
    %v318 = vsel %vm270, 1, 0
    %v319 = vsel %vm271, 1, 0
    %v320 = vsel %vm272, 1, 0
    %v321 = vsel %vm273, 1, 0
    %v322 = vsel %vm274, 1, 0
    %v323 = vsel %vm275, 1, 0
    %v324 = vsel %vm276, 1, 0
    %v325 = vcvt.s32.f32 %v277
    %v326 = vcvt.s32.f32 %v278
    %v327 = vcvt.s32.f32 %v279
    %v328 = vcvt.s32.f32 %v280
    %v329 = vcvt.s32.f32 %v281
    %v330 = vcvt.s32.f32 %v282
    %v331 = vcvt.s32.f32 %v283
    %v332 = vcvt.s32.f32 %v284
    %v333 = vcvt.s32.f32 %v285
    %v334 = vcvt.s32.f32 %v286
    %v335 = vcvt.s32.f32 %v287
    %v336 = vcvt.s32.f32 %v288
    %v337 = vcvt.s32.f32 %v289
    %v338 = vcvt.s32.f32 %v290
    %v339 = vcvt.s32.f32 %v291
    %v340 = vcvt.s32.f32 %v292
    %v341 = vcvt.s32.f32 %v293
    %v342 = vcvt.s32.f32 %v294
    %v343 = vcvt.s32.f32 %v295
    %v344 = vcvt.s32.f32 %v296
    %v345 = vcvt.s32.f32 %v297
    %v346 = vcvt.s32.f32 %v298
    %v347 = vcvt.s32.f32 %v299
    %v348 = vcvt.s32.f32 %v300
    %v349 = vcvt.s32.f32 %v301
    %v350 = vcvt.s32.f32 %v302
    %v351 = vcvt.s32.f32 %v303
    %v352 = vcvt.s32.f32 %v304
    %v353 = vcvt.s32.f32 %v305
    %v354 = vcvt.s32.f32 %v306
    %v355 = vcvt.s32.f32 %v307
    %v356 = vcvt.s32.f32 %v308
    %v357 = vcvt.s32.f32 %v309
    %v358 = vcvt.s32.f32 %v310
    %v359 = vcvt.s32.f32 %v311
    %v360 = vcvt.s32.f32 %v312
    %v361 = vcvt.s32.f32 %v313
    %v362 = vcvt.s32.f32 %v314
    %v363 = vcvt.s32.f32 %v315
    %v364 = vcvt.s32.f32 %v316
    %v365 = vcvt.s32.f32 %v317
    %v366 = vcvt.s32.f32 %v318
    %v367 = vcvt.s32.f32 %v319
    %v368 = vcvt.s32.f32 %v320
    %v369 = vcvt.s32.f32 %v321
    %v370 = vcvt.s32.f32 %v322
    %v371 = vcvt.s32.f32 %v323
    %v372 = vcvt.s32.f32 %v324
    %v373 = vadd.f32 %v163, %v325
    %v374 = vadd.f32 %v164, %v326
    %v375 = vadd.f32 %v165, %v327
    %v376 = vadd.f32 %v166, %v328
    %v377 = vadd.f32 %v167, %v329
    %v378 = vadd.f32 %v168, %v330
    %v379 = vadd.f32 %v169, %v331
    %v380 = vadd.f32 %v170, %v332
    %v381 = vadd.f32 %v171, %v333
    %v382 = vadd.f32 %v172, %v334
    %v383 = vadd.f32 %v173, %v335
    %v384 = vadd.f32 %v174, %v336
    %v385 = vadd.f32 %v175, %v337
    %v386 = vadd.f32 %v176, %v338
    %v387 = vadd.f32 %v177, %v339
    %v388 = vadd.f32 %v178, %v340
    %v389 = vadd.f32 %v179, %v341
    %v390 = vadd.f32 %v180, %v342
    %v391 = vadd.f32 %v181, %v343
    %v392 = vadd.f32 %v182, %v344
    %v393 = vadd.f32 %v183, %v345
    %v394 = vadd.f32 %v184, %v346
    %v395 = vadd.f32 %v185, %v347
    %v396 = vadd.f32 %v186, %v348
    %v397 = vadd.f32 %v187, %v349
    %v398 = vadd.f32 %v188, %v350
    %v399 = vadd.f32 %v189, %v351
    %v400 = vadd.f32 %v190, %v352
    %v401 = vadd.f32 %v191, %v353
    %v402 = vadd.f32 %v192, %v354
    %v403 = vadd.f32 %v193, %v355
    %v404 = vadd.f32 %v194, %v356
    %v405 = vadd.f32 %v195, %v357
    %v406 = vadd.f32 %v196, %v358
    %v407 = vadd.f32 %v197, %v359
    %v408 = vadd.f32 %v198, %v360
    %v409 = vadd.f32 %v199, %v361
    %v410 = vadd.f32 %v200, %v362
    %v411 = vadd.f32 %v201, %v363
    %v412 = vadd.f32 %v202, %v364
    %v413 = vadd.f32 %v203, %v365
    %v414 = vadd.f32 %v204, %v366
    %v415 = vadd.f32 %v205, %v367
    %v416 = vadd.f32 %v206, %v368
    %v417 = vadd.f32 %v207, %v369
    %v418 = vadd.f32 %v208, %v370
    %v419 = vadd.f32 %v209, %v371
    %v420 = vadd.f32 %v210, %v372
    %v421 = vld [vmem:[#allocation2] sm:$0xff]
    %v422 = vld [vmem:[#allocation2 + $0x8] sm:$0xff]
    %v423 = vld [vmem:[#allocation2 + $0x10] sm:$0xff]
    %v424 = vld [vmem:[#allocation2 + $0x18] sm:$0xff]
    %v425 = vld [vmem:[#allocation2 + $0x20] sm:$0xff]
    %v426 = vld [vmem:[#allocation2 + $0x28] sm:$0xff]
    %v427 = vld [vmem:[#allocation2 + $0x30] sm:$0xff]
    %v428 = vld [vmem:[#allocation2 + $0x38] sm:$0xff]
    %v429 = vld [vmem:[#allocation2 + $0x40] sm:$0xff]
    %v430 = vld [vmem:[#allocation2 + $0x48] sm:$0xff]
    %v431 = vld [vmem:[#allocation2 + $0x50] sm:$0xff]
    %v432 = vld [vmem:[#allocation2 + $0x58] sm:$0xff]
    %v433 = vld [vmem:[#allocation2 + $0x60] sm:$0xff]
    %v434 = vld [vmem:[#allocation2 + $0x68] sm:$0xff]
    %v435 = vld [vmem:[#allocation2 + $0x70] sm:$0xff]
    %v436 = vld [vmem:[#allocation2 + $0x78] sm:$0xff]
    %v437 = vld [vmem:[#allocation2 + $0x80] sm:$0xff]
    %v438 = vld [vmem:[#allocation2 + $0x88] sm:$0xff]
    %v439 = vld [vmem:[#allocation2 + $0x90] sm:$0xff]
    %v440 = vld [vmem:[#allocation2 + $0x98] sm:$0xff]
    %v441 = vld [vmem:[#allocation2 + $0xa0] sm:$0xff]
    %v442 = vld [vmem:[#allocation2 + $0xa8] sm:$0xff]
    %v443 = vld [vmem:[#allocation2 + $0xb0] sm:$0xff]
    %v444 = vld [vmem:[#allocation2 + $0xb8] sm:$0xff]
    %v445 = vld [vmem:[#allocation2 + $0xc0] sm:$0xff]
    %v446 = vld [vmem:[#allocation2 + $0xc8] sm:$0xff]
    %v447 = vld [vmem:[#allocation2 + $0xd0] sm:$0xff]
    %v448 = vld [vmem:[#allocation2 + $0xd8] sm:$0xff]
    %v449 = vld [vmem:[#allocation2 + $0xe0] sm:$0xff]
    %v450 = vld [vmem:[#allocation2 + $0xe8] sm:$0xff]
    %v451 = vld [vmem:[#allocation2 + $0xf0] sm:$0xff]
    %v452 = vld [vmem:[#allocation2 + $0xf8] sm:$0xff]
    %v453 = vld [vmem:[#allocation2 + $0x100] sm:$0xff]
    %v454 = vld [vmem:[#allocation2 + $0x108] sm:$0xff]
    %v455 = vld [vmem:[#allocation2 + $0x110] sm:$0xff]
    %v456 = vld [vmem:[#allocation2 + $0x118] sm:$0xff]
    %v457 = vld [vmem:[#allocation2 + $0x120] sm:$0xff]
    %v458 = vld [vmem:[#allocation2 + $0x128] sm:$0xff]
    %v459 = vld [vmem:[#allocation2 + $0x130] sm:$0xff]
    %v460 = vld [vmem:[#allocation2 + $0x138] sm:$0xff]
    %v461 = vld [vmem:[#allocation2 + $0x140] sm:$0xff]
    %v462 = vld [vmem:[#allocation2 + $0x148] sm:$0xff]
    %v463 = vld [vmem:[#allocation2 + $0x150] sm:$0xff]
    %v464 = vld [vmem:[#allocation2 + $0x158] sm:$0xff]
    %v465 = vld [vmem:[#allocation2 + $0x160] sm:$0xff]
    %v466 = vld [vmem:[#allocation2 + $0x168] sm:$0xff]
    %v467 = vld [vmem:[#allocation2 + $0x170] sm:$0xff]
    %v468 = vld [vmem:[#allocation2 + $0x178] sm:$0xff]
    %v469 = vld [vmem:[#allocation2 + $0x180] sm:$0xff]
    %v470 = vld [vmem:[#allocation2 + $0x188] sm:$0xff]
    %v471 = vld [vmem:[#allocation2 + $0x190] sm:$0xff]
    %v472 = vld [vmem:[#allocation2 + $0x198] sm:$0xff]
    %v473 = vld [vmem:[#allocation2 + $0x1a0] sm:$0xff]
    %v474 = vld [vmem:[#allocation2 + $0x1a8] sm:$0xff]
    %v475 = vld [vmem:[#allocation2 + $0x1b0] sm:$0xff]
    %v476 = vld [vmem:[#allocation2 + $0x1b8] sm:$0xff]
    %v477 = vld [vmem:[#allocation2 + $0x1c0] sm:$0xff]
    %v478 = vld [vmem:[#allocation2 + $0x1c8] sm:$0xff]
    %v479 = vld [vmem:[#allocation2 + $0x1d0] sm:$0xff]
    %v480 = vld [vmem:[#allocation2 + $0x1d8] sm:$0xff]
    %v481 = vld [vmem:[#allocation2 + $0x1e0] sm:$0xff]
    %v482 = vld [vmem:[#allocation2 + $0x1e8] sm:$0xff]
    %v483 = vld [vmem:[#allocation2 + $0x1f0] sm:$0xff]
    %v484 = vld [vmem:[#allocation2 + $0x1f8] sm:$0xff]
    %v485 = vld [vmem:[#allocation2 + $0x200] sm:$0xff]
    %v486 = vld [vmem:[#allocation2 + $0x208] sm:$0xff]
    %v487 = vld [vmem:[#allocation2 + $0x210] sm:$0xff]
    %v488 = vld [vmem:[#allocation2 + $0x218] sm:$0xff]
    %v489 = vld [vmem:[#allocation2 + $0x220] sm:$0xff]
    %v490 = vld [vmem:[#allocation2 + $0x228] sm:$0xff]
    %v491 = vld [vmem:[#allocation2 + $0x230] sm:$0xff]
    %v492 = vld [vmem:[#allocation2 + $0x238] sm:$0xff]
    %v493 = vld [vmem:[#allocation2 + $0x240] sm:$0xff]
    %v494 = vld [vmem:[#allocation2 + $0x248] sm:$0xff]
    %v495 = vld [vmem:[#allocation2 + $0x250] sm:$0xff]
    %v496 = vld [vmem:[#allocation2 + $0x258] sm:$0xff]
    %v497 = vld [vmem:[#allocation2 + $0x260] sm:$0xff]
    %v498 = vld [vmem:[#allocation2 + $0x268] sm:$0xff]
    %v499 = vld [vmem:[#allocation2 + $0x270] sm:$0xff]
    %v500 = vld [vmem:[#allocation2 + $0x278] sm:$0xff]
    %v501 = vld [vmem:[#allocation2 + $0x280] sm:$0xff]
    %v502 = vld [vmem:[#allocation2 + $0x288] sm:$0xff]
    %v503 = vld [vmem:[#allocation2 + $0x290] sm:$0xff]
    %v504 = vld [vmem:[#allocation2 + $0x298] sm:$0xff]
    %v505 = vld [vmem:[#allocation2 + $0x2a0] sm:$0xff]
    %v506 = vld [vmem:[#allocation2 + $0x2a8] sm:$0xff]
    %v507 = vld [vmem:[#allocation2 + $0x2b0] sm:$0xff]
    %v508 = vld [vmem:[#allocation2 + $0x2b8] sm:$0xff]
    %v509 = vld [vmem:[#allocation2 + $0x2c0] sm:$0xff]
    %v510 = vld [vmem:[#allocation2 + $0x2c8] sm:$0xff]
    %v511 = vld [vmem:[#allocation2 + $0x2d0] sm:$0xff]
    %v512 = vld [vmem:[#allocation2 + $0x2d8] sm:$0xff]
    %v513 = vld [vmem:[#allocation2 + $0x2e0] sm:$0xff]
    %v514 = vld [vmem:[#allocation2 + $0x2e8] sm:$0xff]
    %v515 = vld [vmem:[#allocation2 + $0x2f0] sm:$0xff]
    %v516 = vld [vmem:[#allocation2 + $0x2f8] sm:$0xff]
    %v517 = vld [vmem:[#allocation2 + $0x300] sm:$0xff]
    %v518 = vld [vmem:[#allocation2 + $0x308] sm:$0xff]
    %v519 = vld [vmem:[#allocation2 + $0x310] sm:$0xff]
    %v520 = vld [vmem:[#allocation2 + $0x318] sm:$0xff]
    %v521 = vld [vmem:[#allocation2 + $0x320] sm:$0xff]
    %v522 = vld [vmem:[#allocation2 + $0x328] sm:$0xff]
    %v523 = vld [vmem:[#allocation2 + $0x330] sm:$0xff]
    %v524 = vld [vmem:[#allocation2 + $0x338] sm:$0xff]
    %v525 = vld [vmem:[#allocation2 + $0x340] sm:$0xff]
    %v526 = vld [vmem:[#allocation2 + $0x348] sm:$0xff]
    %v527 = vld [vmem:[#allocation2 + $0x350] sm:$0xff]
    %v528 = vld [vmem:[#allocation2 + $0x358] sm:$0xff]
    %v529 = vld [vmem:[#allocation2 + $0x360] sm:$0xff]
    %v530 = vld [vmem:[#allocation2 + $0x368] sm:$0xff]
    %v531 = vld [vmem:[#allocation2 + $0x370] sm:$0xff]
    %v532 = vld [vmem:[#allocation2 + $0x378] sm:$0xff]
    %v533 = vld [vmem:[#allocation2 + $0x380] sm:$0xff]
    %v534 = vld [vmem:[#allocation2 + $0x388] sm:$0xff]
    %v535 = vld [vmem:[#allocation2 + $0x390] sm:$0xff]
    %v536 = vld [vmem:[#allocation2 + $0x398] sm:$0xff]
    %v537 = vld [vmem:[#allocation2 + $0x3a0] sm:$0xff]
    %v538 = vld [vmem:[#allocation2 + $0x3a8] sm:$0xff]
    %v539 = vld [vmem:[#allocation2 + $0x3b0] sm:$0xff]
    %v540 = vld [vmem:[#allocation2 + $0x3b8] sm:$0xff]
    %v541 = vld [vmem:[#allocation2 + $0x3c0] sm:$0xff]
    %v542 = vld [vmem:[#allocation2 + $0x3c8] sm:$0xff]
    %v543 = vld [vmem:[#allocation2 + $0x3d0] sm:$0xff]
    %v544 = vld [vmem:[#allocation2 + $0x3d8] sm:$0xff]
    %v545 = vld [vmem:[#allocation2 + $0x3e0] sm:$0xff]
    %v546 = vld [vmem:[#allocation2 + $0x3e8] sm:$0xff]
    %v547 = vld [vmem:[#allocation2 + $0x3f0] sm:$0xff]
    %v548 = vld [vmem:[#allocation2 + $0x3f8] sm:$0xff]
    %v549 = vld [vmem:[#allocation2 + $0x400] sm:$0xff]
    %v550 = vld [vmem:[#allocation2 + $0x408] sm:$0xff]
    %v551 = vld [vmem:[#allocation2 + $0x410] sm:$0xff]
    %v552 = vld [vmem:[#allocation2 + $0x418] sm:$0xff]
    %v553 = vld [vmem:[#allocation2 + $0x420] sm:$0xff]
    %v554 = vld [vmem:[#allocation2 + $0x428] sm:$0xff]
    %v555 = vld [vmem:[#allocation2 + $0x430] sm:$0xff]
    %v556 = vld [vmem:[#allocation2 + $0x438] sm:$0xff]
    %v557 = vld [vmem:[#allocation2 + $0x440] sm:$0xff]
    %v558 = vld [vmem:[#allocation2 + $0x448] sm:$0xff]
    %v559 = vld [vmem:[#allocation2 + $0x450] sm:$0xff]
    %v560 = vld [vmem:[#allocation2 + $0x458] sm:$0xff]
    %v561 = vld [vmem:[#allocation2 + $0x460] sm:$0xff]
    %v562 = vld [vmem:[#allocation2 + $0x468] sm:$0xff]
    %v563 = vld [vmem:[#allocation2 + $0x470] sm:$0xff]
    %v564 = vld [vmem:[#allocation2 + $0x478] sm:$0xff]
    %v565 = vld [vmem:[#allocation2 + $0x480] sm:$0xff]
    %v566 = vld [vmem:[#allocation2 + $0x488] sm:$0xff]
    %v567 = vld [vmem:[#allocation2 + $0x490] sm:$0xff]
    %v568 = vld [vmem:[#allocation2 + $0x498] sm:$0xff]
    %v569 = vld [vmem:[#allocation2 + $0x4a0] sm:$0xff]
    %v570 = vld [vmem:[#allocation2 + $0x4a8] sm:$0xff]
    %v571 = vld [vmem:[#allocation2 + $0x4b0] sm:$0xff]
    %v572 = vld [vmem:[#allocation2 + $0x4b8] sm:$0xff]
    %v573 = vld [vmem:[#allocation2 + $0x4c0] sm:$0xff]
    %v574 = vld [vmem:[#allocation2 + $0x4c8] sm:$0xff]
    %v575 = vld [vmem:[#allocation2 + $0x4d0] sm:$0xff]
    %v576 = vld [vmem:[#allocation2 + $0x4d8] sm:$0xff]
    %v577 = vld [vmem:[#allocation2 + $0x4e0] sm:$0xff]
    %v578 = vld [vmem:[#allocation2 + $0x4e8] sm:$0xff]
    %v579 = vld [vmem:[#allocation2 + $0x4f0] sm:$0xff]
    %v580 = vld [vmem:[#allocation2 + $0x4f8] sm:$0xff]
    %v581 = vld [vmem:[#allocation2 + $0x500] sm:$0xff]
    %v582 = vld [vmem:[#allocation2 + $0x508] sm:$0xff]
    %v583 = vld [vmem:[#allocation2 + $0x510] sm:$0xff]
    %v584 = vld [vmem:[#allocation2 + $0x518] sm:$0xff]
    %v585 = vld [vmem:[#allocation2 + $0x520] sm:$0xff]
    %v586 = vld [vmem:[#allocation2 + $0x528] sm:$0xff]
    %v587 = vld [vmem:[#allocation2 + $0x530] sm:$0xff]
    %v588 = vld [vmem:[#allocation2 + $0x538] sm:$0xff]
    %v589 = vld [vmem:[#allocation2 + $0x540] sm:$0xff]
    %v590 = vld [vmem:[#allocation2 + $0x548] sm:$0xff]
    %v591 = vld [vmem:[#allocation2 + $0x550] sm:$0xff]
    %v592 = vld [vmem:[#allocation2 + $0x558] sm:$0xff]
    %v593 = vld [vmem:[#allocation2 + $0x560] sm:$0xff]
    %v594 = vld [vmem:[#allocation2 + $0x568] sm:$0xff]
    %v595 = vld [vmem:[#allocation2 + $0x570] sm:$0xff]
    %v596 = vld [vmem:[#allocation2 + $0x578] sm:$0xff]
    %v597 = vld [vmem:[#allocation2 + $0x580] sm:$0xff]
    %v598 = vld [vmem:[#allocation2 + $0x588] sm:$0xff]
    %v599 = vld [vmem:[#allocation2 + $0x590] sm:$0xff]
    %v600 = vld [vmem:[#allocation2 + $0x598] sm:$0xff]
    %v601 = vld [vmem:[#allocation2 + $0x5a0] sm:$0xff]
    %v602 = vld [vmem:[#allocation2 + $0x5a8] sm:$0xff]
    %v603 = vld [vmem:[#allocation2 + $0x5b0] sm:$0xff]
    %v604 = vld [vmem:[#allocation2 + $0x5b8] sm:$0xff]
    %v605 = vld [vmem:[#allocation2 + $0x5c0] sm:$0xff]
    %v606 = vld [vmem:[#allocation2 + $0x5c8] sm:$0xff]
    %v607 = vld [vmem:[#allocation2 + $0x5d0] sm:$0xff]
    %v608 = vld [vmem:[#allocation2 + $0x5d8] sm:$0xff]
    %v609 = vld [vmem:[#allocation2 + $0x5e0] sm:$0xff]
    %v610 = vld [vmem:[#allocation2 + $0x5e8] sm:$0xff]
    %v611 = vld [vmem:[#allocation2 + $0x5f0] sm:$0xff]
    %v612 = vld [vmem:[#allocation2 + $0x5f8] sm:$0xff]
    %v613 = vld [vmem:[#allocation2 + $0x600] sm:$0xff]
    %v614 = vld [vmem:[#allocation2 + $0x608] sm:$0xff]
    %v615 = vld [vmem:[#allocation2 + $0x610] sm:$0xff]
    %v616 = vld [vmem:[#allocation2 + $0x618] sm:$0xff]
    %v617 = vld [vmem:[#allocation2 + $0x620] sm:$0xff]
    %v618 = vld [vmem:[#allocation2 + $0x628] sm:$0xff]
    %v619 = vld [vmem:[#allocation2 + $0x630] sm:$0xff]
    %v620 = vld [vmem:[#allocation2 + $0x638] sm:$0xff]
    %v621 = vld [vmem:[#allocation2 + $0x640] sm:$0xff]
    %v622 = vld [vmem:[#allocation2 + $0x648] sm:$0xff]
    %v623 = vld [vmem:[#allocation2 + $0x650] sm:$0xff]
    %v624 = vld [vmem:[#allocation2 + $0x658] sm:$0xff]
    %v625 = vld [vmem:[#allocation2 + $0x660] sm:$0xff]
    %v626 = vld [vmem:[#allocation2 + $0x668] sm:$0xff]
    %v627 = vld [vmem:[#allocation2 + $0x670] sm:$0xff]
    %v628 = vld [vmem:[#allocation2 + $0x678] sm:$0xff]
    %v629 = vld [vmem:[#allocation2 + $0x680] sm:$0xff]
    %v630 = vld [vmem:[#allocation2 + $0x688] sm:$0xff]
    %v631 = vld [vmem:[#allocation2 + $0x690] sm:$0xff]
    %v632 = vld [vmem:[#allocation2 + $0x698] sm:$0xff]
    %v633 = vld [vmem:[#allocation2 + $0x6a0] sm:$0xff]
    %v634 = vld [vmem:[#allocation2 + $0x6a8] sm:$0xff]
    %v635 = vld [vmem:[#allocation2 + $0x6b0] sm:$0xff]
    %v636 = vld [vmem:[#allocation2 + $0x6b8] sm:$0xff]
    %v637 = vld [vmem:[#allocation2 + $0x6c0] sm:$0xff]
    %v638 = vld [vmem:[#allocation2 + $0x6c8] sm:$0xff]
    %v639 = vld [vmem:[#allocation2 + $0x6d0] sm:$0xff]
    %v640 = vld [vmem:[#allocation2 + $0x6d8] sm:$0xff]
    %v641 = vld [vmem:[#allocation2 + $0x6e0] sm:$0xff]
    %v642 = vld [vmem:[#allocation2 + $0x6e8] sm:$0xff]
    %v643 = vld [vmem:[#allocation2 + $0x6f0] sm:$0xff]
    %v644 = vld [vmem:[#allocation2 + $0x6f8] sm:$0xff]
    %v645 = vld [vmem:[#allocation2 + $0x700] sm:$0xff]
    %v646 = vld [vmem:[#allocation2 + $0x708] sm:$0xff]
    %v647 = vld [vmem:[#allocation2 + $0x710] sm:$0xff]
    %v648 = vld [vmem:[#allocation2 + $0x718] sm:$0xff]
    %v649 = vld [vmem:[#allocation2 + $0x720] sm:$0xff]
    %v650 = vld [vmem:[#allocation2 + $0x728] sm:$0xff]
    %v651 = vld [vmem:[#allocation2 + $0x730] sm:$0xff]
    %v652 = vld [vmem:[#allocation2 + $0x738] sm:$0xff]
    %v653 = vld [vmem:[#allocation2 + $0x740] sm:$0xff]
    %v654 = vld [vmem:[#allocation2 + $0x748] sm:$0xff]
    %v655 = vld [vmem:[#allocation2 + $0x750] sm:$0xff]
    %v656 = vld [vmem:[#allocation2 + $0x758] sm:$0xff]
    %v657 = vld [vmem:[#allocation2 + $0x760] sm:$0xff]
    %v658 = vld [vmem:[#allocation2 + $0x768] sm:$0xff]
    %v659 = vld [vmem:[#allocation2 + $0x770] sm:$0xff]
    %v660 = vld [vmem:[#allocation2 + $0x778] sm:$0xff]
    %v661 = vld [vmem:[#allocation2 + $0x780] sm:$0xff]
    %v662 = vld [vmem:[#allocation2 + $0x788] sm:$0xff]
    %v663 = vld [vmem:[#allocation2 + $0x790] sm:$0xff]
    %v664 = vld [vmem:[#allocation2 + $0x798] sm:$0xff]
    %v665 = vld [vmem:[#allocation2 + $0x7a0] sm:$0xff]
    %v666 = vld [vmem:[#allocation2 + $0x7a8] sm:$0xff]
    %v667 = vld [vmem:[#allocation2 + $0x7b0] sm:$0xff]
    %v668 = vld [vmem:[#allocation2 + $0x7b8] sm:$0xff]
    %v669 = vld [vmem:[#allocation2 + $0x7c0] sm:$0xff]
    %v670 = vld [vmem:[#allocation2 + $0x7c8] sm:$0xff]
    %v671 = vld [vmem:[#allocation2 + $0x7d0] sm:$0xff]
    %v672 = vld [vmem:[#allocation2 + $0x7d8] sm:$0xff]
    %v673 = vld [vmem:[#allocation2 + $0x7e0] sm:$0xff]
    %v674 = vld [vmem:[#allocation2 + $0x7e8] sm:$0xff]
    %v675 = vld [vmem:[#allocation2 + $0x7f0] sm:$0xff]
    %v676 = vld [vmem:[#allocation2 + $0x7f8] sm:$0xff]
    %v677 = vld [vmem:[#allocation2 + $0x800] sm:$0xff]
    %v678 = vld [vmem:[#allocation2 + $0x808] sm:$0xff]
    %v679 = vld [vmem:[#allocation2 + $0x810] sm:$0xff]
    %v680 = vld [vmem:[#allocation2 + $0x818] sm:$0xff]
    %v681 = vld [vmem:[#allocation2 + $0x820] sm:$0xff]
    %v682 = vld [vmem:[#allocation2 + $0x828] sm:$0xff]
    %v683 = vld [vmem:[#allocation2 + $0x830] sm:$0xff]
    %v684 = vld [vmem:[#allocation2 + $0x838] sm:$0xff]
    %v685 = vld [vmem:[#allocation2 + $0x840] sm:$0xff]
    %v686 = vld [vmem:[#allocation2 + $0x848] sm:$0xff]
    %v687 = vld [vmem:[#allocation2 + $0x850] sm:$0xff]
    %v688 = vld [vmem:[#allocation2 + $0x858] sm:$0xff]
    %v689 = vld [vmem:[#allocation2 + $0x860] sm:$0xff]
    %v690 = vld [vmem:[#allocation2 + $0x868] sm:$0xff]
    %v691 = vld [vmem:[#allocation2 + $0x870] sm:$0xff]
    %v692 = vld [vmem:[#allocation2 + $0x878] sm:$0xff]
    %v693 = vld [vmem:[#allocation2 + $0x880] sm:$0xff]
    %v694 = vld [vmem:[#allocation2 + $0x888] sm:$0xff]
    %v695 = vld [vmem:[#allocation2 + $0x890] sm:$0xff]
    %v696 = vld [vmem:[#allocation2 + $0x898] sm:$0xff]
    %v697 = vld [vmem:[#allocation2 + $0x8a0] sm:$0xff]
    %v698 = vld [vmem:[#allocation2 + $0x8a8] sm:$0xff]
    %v699 = vld [vmem:[#allocation2 + $0x8b0] sm:$0xff]
    %v700 = vld [vmem:[#allocation2 + $0x8b8] sm:$0xff]
    %v701 = vld [vmem:[#allocation2 + $0x8c0] sm:$0xff]
    %v702 = vld [vmem:[#allocation2 + $0x8c8] sm:$0xff]
    %v703 = vld [vmem:[#allocation2 + $0x8d0] sm:$0xff]
    %v704 = vld [vmem:[#allocation2 + $0x8d8] sm:$0xff]
    %v705 = vld [vmem:[#allocation2 + $0x8e0] sm:$0xff]
    %v706 = vld [vmem:[#allocation2 + $0x8e8] sm:$0xff]
    %v707 = vld [vmem:[#allocation2 + $0x8f0] sm:$0xff]
    %v708 = vld [vmem:[#allocation2 + $0x8f8] sm:$0xff]
    %v709 = vld [vmem:[#allocation2 + $0x900] sm:$0xff]
    %v710 = vld [vmem:[#allocation2 + $0x908] sm:$0xff]
    %v711 = vld [vmem:[#allocation2 + $0x910] sm:$0xff]
    %v712 = vld [vmem:[#allocation2 + $0x918] sm:$0xff]
    %v713 = vld [vmem:[#allocation2 + $0x920] sm:$0xff]
    %v714 = vld [vmem:[#allocation2 + $0x928] sm:$0xff]
    %v715 = vld [vmem:[#allocation2 + $0x930] sm:$0xff]
    %v716 = vld [vmem:[#allocation2 + $0x938] sm:$0xff]
    %v717 = vld [vmem:[#allocation2 + $0x940] sm:$0xff]
    %v718 = vld [vmem:[#allocation2 + $0x948] sm:$0xff]
    %v719 = vld [vmem:[#allocation2 + $0x950] sm:$0xff]
    %v720 = vld [vmem:[#allocation2 + $0x958] sm:$0xff]
    %v721 = vld [vmem:[#allocation2 + $0x960] sm:$0xff]
    %v722 = vld [vmem:[#allocation2 + $0x968] sm:$0xff]
    %v723 = vld [vmem:[#allocation2 + $0x970] sm:$0xff]
    %v724 = vld [vmem:[#allocation2 + $0x978] sm:$0xff]
    %v725 = vld [vmem:[#allocation2 + $0x980] sm:$0xff]
    %v726 = vld [vmem:[#allocation2 + $0x988] sm:$0xff]
    %v727 = vld [vmem:[#allocation2 + $0x990] sm:$0xff]
    %v728 = vld [vmem:[#allocation2 + $0x998] sm:$0xff]
    %v729 = vld [vmem:[#allocation2 + $0x9a0] sm:$0xff]
    %v730 = vld [vmem:[#allocation2 + $0x9a8] sm:$0xff]
    %v731 = vld [vmem:[#allocation2 + $0x9b0] sm:$0xff]
    %v732 = vld [vmem:[#allocation2 + $0x9b8] sm:$0xff]
    %v733 = vld [vmem:[#allocation2 + $0x9c0] sm:$0xff]
    %v734 = vld [vmem:[#allocation2 + $0x9c8] sm:$0xff]
    %v735 = vld [vmem:[#allocation2 + $0x9d0] sm:$0xff]
    %v736 = vld [vmem:[#allocation2 + $0x9d8] sm:$0xff]
    %v737 = vld [vmem:[#allocation2 + $0x9e0] sm:$0xff]
    %v738 = vld [vmem:[#allocation2 + $0x9e8] sm:$0xff]
    %v739 = vld [vmem:[#allocation2 + $0x9f0] sm:$0xff]
    %v740 = vld [vmem:[#allocation2 + $0x9f8] sm:$0xff]
    %v741 = vld [vmem:[#allocation2 + $0xa00] sm:$0xff]
    %v742 = vld [vmem:[#allocation2 + $0xa08] sm:$0xff]
    %v743 = vld [vmem:[#allocation2 + $0xa10] sm:$0xff]
    %v744 = vld [vmem:[#allocation2 + $0xa18] sm:$0xff]
    %v745 = vld [vmem:[#allocation2 + $0xa20] sm:$0xff]
    %v746 = vld [vmem:[#allocation2 + $0xa28] sm:$0xff]
    %v747 = vld [vmem:[#allocation2 + $0xa30] sm:$0xff]
    %v748 = vld [vmem:[#allocation2 + $0xa38] sm:$0xff]
    %v749 = vld [vmem:[#allocation2 + $0xa40] sm:$0xff]
    %v750 = vld [vmem:[#allocation2 + $0xa48] sm:$0xff]
    %v751 = vld [vmem:[#allocation2 + $0xa50] sm:$0xff]
    %v752 = vld [vmem:[#allocation2 + $0xa58] sm:$0xff]
    %v753 = vld [vmem:[#allocation2 + $0xa60] sm:$0xff]
    %v754 = vld [vmem:[#allocation2 + $0xa68] sm:$0xff]
    %v755 = vld [vmem:[#allocation2 + $0xa70] sm:$0xff]
    %v756 = vld [vmem:[#allocation2 + $0xa78] sm:$0xff]
    %v757 = vld [vmem:[#allocation2 + $0xa80] sm:$0xff]
    %v758 = vld [vmem:[#allocation2 + $0xa88] sm:$0xff]
    %v759 = vld [vmem:[#allocation2 + $0xa90] sm:$0xff]
    %v760 = vld [vmem:[#allocation2 + $0xa98] sm:$0xff]
    %v761 = vld [vmem:[#allocation2 + $0xaa0] sm:$0xff]
    %v762 = vld [vmem:[#allocation2 + $0xaa8] sm:$0xff]
    %v763 = vld [vmem:[#allocation2 + $0xab0] sm:$0xff]
    %v764 = vld [vmem:[#allocation2 + $0xab8] sm:$0xff]
    %v765 = vld [vmem:[#allocation2 + $0xac0] sm:$0xff]
    %v766 = vld [vmem:[#allocation2 + $0xac8] sm:$0xff]
    %v767 = vld [vmem:[#allocation2 + $0xad0] sm:$0xff]
    %v768 = vld [vmem:[#allocation2 + $0xad8] sm:$0xff]
    %v769 = vld [vmem:[#allocation2 + $0xae0] sm:$0xff]
    %v770 = vld [vmem:[#allocation2 + $0xae8] sm:$0xff]
    %v771 = vld [vmem:[#allocation2 + $0xaf0] sm:$0xff]
    %v772 = vld [vmem:[#allocation2 + $0xaf8] sm:$0xff]
    %v773 = vld [vmem:[#allocation2 + $0xb00] sm:$0xff]
    %v774 = vld [vmem:[#allocation2 + $0xb08] sm:$0xff]
    %v775 = vld [vmem:[#allocation2 + $0xb10] sm:$0xff]
    %v776 = vld [vmem:[#allocation2 + $0xb18] sm:$0xff]
    %v777 = vld [vmem:[#allocation2 + $0xb20] sm:$0xff]
    %v778 = vld [vmem:[#allocation2 + $0xb28] sm:$0xff]
    %v779 = vld [vmem:[#allocation2 + $0xb30] sm:$0xff]
    %v780 = vld [vmem:[#allocation2 + $0xb38] sm:$0xff]
    %v781 = vld [vmem:[#allocation2 + $0xb40] sm:$0xff]
    %v782 = vld [vmem:[#allocation2 + $0xb48] sm:$0xff]
    %v783 = vld [vmem:[#allocation2 + $0xb50] sm:$0xff]
    %v784 = vld [vmem:[#allocation2 + $0xb58] sm:$0xff]
    %v785 = vld [vmem:[#allocation2 + $0xb60] sm:$0xff]
    %v786 = vld [vmem:[#allocation2 + $0xb68] sm:$0xff]
    %v787 = vld [vmem:[#allocation2 + $0xb70] sm:$0xff]
    %v788 = vld [vmem:[#allocation2 + $0xb78] sm:$0xff]
    %v789 = vld [vmem:[#allocation2 + $0xb80] sm:$0xff]
    %v790 = vld [vmem:[#allocation2 + $0xb88] sm:$0xff]
    %v791 = vld [vmem:[#allocation2 + $0xb90] sm:$0xff]
    %v792 = vld [vmem:[#allocation2 + $0xb98] sm:$0xff]
    %v793 = vld [vmem:[#allocation2 + $0xba0] sm:$0xff]
    %v794 = vld [vmem:[#allocation2 + $0xba8] sm:$0xff]
    %v795 = vld [vmem:[#allocation2 + $0xbb0] sm:$0xff]
    %v796 = vld [vmem:[#allocation2 + $0xbb8] sm:$0xff]
    %v797 = vld [vmem:[#allocation2 + $0xbc0] sm:$0xff]
    %v798 = vld [vmem:[#allocation2 + $0xbc8] sm:$0xff]
    %v799 = vld [vmem:[#allocation2 + $0xbd0] sm:$0xff]
    %v800 = vld [vmem:[#allocation2 + $0xbd8] sm:$0xff]
    %v801 = vld [vmem:[#allocation2 + $0xbe0] sm:$0xff]
    %v802 = vld [vmem:[#allocation2 + $0xbe8] sm:$0xff]
    %v803 = vld [vmem:[#allocation2 + $0xbf0] sm:$0xff]
    %v804 = vld [vmem:[#allocation2 + $0xbf8] sm:$0xff]
    %805 = vmatprep.subr.mxu0 %v467
    %806 = vmatpush1.msra.mxu0 %v466
    %807 = vmatprep.subr.mxu0 %v464
    %808 = vmatpush1.msra.mxu0 %v463
    %809 = vmatprep.subr.mxu0 %v461
    %810 = vmatpush1.msra.mxu0 %v460
    %811 = vmatprep.subr.mxu0 %v458
    %812 = vmatpush1.msra.mxu0 %v457
    %813 = vmatprep.subr.mxu0 %v455
    %814 = vmatpush1.msra.mxu0 %v454
    %815 = vmatprep.subr.mxu0 %v452
    %816 = vmatpush1.msra.mxu0 %v451
    %817 = vmatprep.subr.mxu0 %v449
    %818 = vmatpush1.msra.mxu0 %v448
    %819 = vmatprep.subr.mxu0 %v446
    %820 = vmatpush1.msra.mxu0 %v445
    %821 = vmatprep.subr.mxu0 %v443
    %822 = vmatpush1.msra.mxu0 %v442
    %823 = vmatprep.subr.mxu0 %v440
    %824 = vmatpush1.msra.mxu0 %v439
    %825 = vmatprep.subr.mxu0 %v437
    %826 = vmatpush1.msra.mxu0 %v436
    %827 = vmatprep.subr.mxu0 %v434
    %828 = vmatpush1.msra.mxu0 %v433
    %829 = vmatprep.subr.mxu0 %v431
    %830 = vmatpush1.msra.mxu0 %v430
    %831 = vmatprep.subr.mxu0 %v428
    %832 = vmatpush1.msra.mxu0 %v427
    %833 = vmatprep.subr.mxu0 %v425
    %834 = vmatpush1.msra.mxu0 %v424
    %835 = vmatprep.subr.mxu0 %v422
    %836 = vmatpush1.msra.mxu0 %v421
    %837 = vmatprep.subr.mxu0 %v515
    %838 = vmatpush2.msra.mxu0 %v514
    %839 = vmatprep.subr.mxu0 %v512
    %840 = vmatpush2.msra.mxu0 %v511
    %841 = vmatprep.subr.mxu0 %v509
    %842 = vmatpush2.msra.mxu0 %v508
    %843 = vmatprep.subr.mxu0 %v506
    %844 = vmatpush2.msra.mxu0 %v505
    %845 = vmatprep.subr.mxu0 %v503
    %846 = vmatpush2.msra.mxu0 %v502
    %847 = vmatprep.subr.mxu0 %v500
    %848 = vmatpush2.msra.mxu0 %v499
    %849 = vmatprep.subr.mxu0 %v497
    %850 = vmatpush2.msra.mxu0 %v496
    %851 = vmatprep.subr.mxu0 %v494
    %852 = vmatpush2.msra.mxu0 %v493
    %853 = vmatprep.subr.mxu0 %v491
    %854 = vmatpush2.msra.mxu0 %v490
    %855 = vmatprep.subr.mxu0 %v488
    %856 = vmatpush2.msra.mxu0 %v487
    %857 = vmatprep.subr.mxu0 %v485
    %858 = vmatpush2.msra.mxu0 %v484
    %859 = vmatprep.subr.mxu0 %v482
    %860 = vmatpush2.msra.mxu0 %v481
    %861 = vmatprep.subr.mxu0 %v479
    %862 = vmatpush2.msra.mxu0 %v478
    %863 = vmatprep.subr.mxu0 %v476
    %864 = vmatpush2.msra.mxu0 %v475
    %865 = vmatprep.subr.mxu0 %v473
    %866 = vmatpush2.msra.mxu0 %v472
    %867 = vmatprep.subr.mxu0 %v470
    %868 = vmatpush2.msra.mxu0 %v469
    %869 = vmatprep.mubr.f32.mxu0 %v374
    %870 = vmatmul.mubr.f32.gmra.mxu0 %v373
    %v871 = vpop.f32.mrf.mxu0
    %v872 = vadd.f32 0.0, %v871
    %v873 = vpop.f32.mrf.mxu0
    %v874 = vadd.f32 0.0, %v873
    %875 = vmatprep.mubr.f32.mxu0 %v382
    %876 = vmatmul.mubr.f32.gmra.mxu0 %v381
    %v877 = vpop.f32.mrf.mxu0
    %v878 = vadd.f32 0.0, %v877
    %v879 = vpop.f32.mrf.mxu0
    %v880 = vadd.f32 0.0, %v879
    %881 = vmatprep.mubr.f32.mxu0 %v390
    %882 = vmatmul.mubr.f32.gmra.mxu0 %v389
    %v883 = vpop.f32.mrf.mxu0
    %v884 = vadd.f32 0.0, %v883
    %v885 = vpop.f32.mrf.mxu0
    %v886 = vadd.f32 0.0, %v885
    %887 = vmatprep.mubr.f32.mxu0 %v398
    %888 = vmatmul.mubr.f32.gmra.mxu0 %v397
    %v889 = vpop.f32.mrf.mxu0
    %v890 = vadd.f32 0.0, %v889
    %v891 = vpop.f32.mrf.mxu0
    %v892 = vadd.f32 0.0, %v891
    %893 = vmatprep.mubr.f32.mxu0 %v406
    %894 = vmatmul.mubr.f32.gmra.mxu0 %v405
    %v895 = vpop.f32.mrf.mxu0
    %v896 = vadd.f32 0.0, %v895
    %v897 = vpop.f32.mrf.mxu0
    %v898 = vadd.f32 0.0, %v897
    %899 = vmatprep.mubr.f32.mxu0 %v414
    %900 = vmatmul.mubr.f32.gmra.mxu0 %v413
    %v901 = vpop.f32.mrf.mxu0
    %v902 = vadd.f32 0.0, %v901
    %v903 = vpop.f32.mrf.mxu0
    %v904 = vadd.f32 0.0, %v903
    %905 = vdwg.mxu0
    %906 = vmatprep.subr.mxu0 %v563
    %907 = vmatpush1.msra.mxu0 %v562
    %908 = vmatprep.subr.mxu0 %v560
    %909 = vmatpush1.msra.mxu0 %v559
    %910 = vmatprep.subr.mxu0 %v557
    %911 = vmatpush1.msra.mxu0 %v556
    %912 = vmatprep.subr.mxu0 %v554
    %913 = vmatpush1.msra.mxu0 %v553
    %914 = vmatprep.subr.mxu0 %v551
    %915 = vmatpush1.msra.mxu0 %v550
    %916 = vmatprep.subr.mxu0 %v548
    %917 = vmatpush1.msra.mxu0 %v547
    %918 = vmatprep.subr.mxu0 %v545
    %919 = vmatpush1.msra.mxu0 %v544
    %920 = vmatprep.subr.mxu0 %v542
    %921 = vmatpush1.msra.mxu0 %v541
    %922 = vmatprep.subr.mxu0 %v539
    %923 = vmatpush1.msra.mxu0 %v538
    %924 = vmatprep.subr.mxu0 %v536
    %925 = vmatpush1.msra.mxu0 %v535
    %926 = vmatprep.subr.mxu0 %v533
    %927 = vmatpush1.msra.mxu0 %v532
    %928 = vmatprep.subr.mxu0 %v530
    %929 = vmatpush1.msra.mxu0 %v529
    %930 = vmatprep.subr.mxu0 %v527
    %931 = vmatpush1.msra.mxu0 %v526
    %932 = vmatprep.subr.mxu0 %v524
    %933 = vmatpush1.msra.mxu0 %v523
    %934 = vmatprep.subr.mxu0 %v521
    %935 = vmatpush1.msra.mxu0 %v520
    %936 = vmatprep.subr.mxu0 %v518
    %937 = vmatpush1.msra.mxu0 %v517
    %938 = vmatprep.subr.mxu0 %v611
    %939 = vmatpush2.msra.mxu0 %v610
    %940 = vmatprep.subr.mxu0 %v608
    %941 = vmatpush2.msra.mxu0 %v607
    %942 = vmatprep.subr.mxu0 %v605
    %943 = vmatpush2.msra.mxu0 %v604
    %944 = vmatprep.subr.mxu0 %v602
    %945 = vmatpush2.msra.mxu0 %v601
    %946 = vmatprep.subr.mxu0 %v599
    %947 = vmatpush2.msra.mxu0 %v598
    %948 = vmatprep.subr.mxu0 %v596
    %949 = vmatpush2.msra.mxu0 %v595
    %950 = vmatprep.subr.mxu0 %v593
    %951 = vmatpush2.msra.mxu0 %v592
    %952 = vmatprep.subr.mxu0 %v590
    %953 = vmatpush2.msra.mxu0 %v589
    %954 = vmatprep.subr.mxu0 %v587
    %955 = vmatpush2.msra.mxu0 %v586
    %956 = vmatprep.subr.mxu0 %v584
    %957 = vmatpush2.msra.mxu0 %v583
    %958 = vmatprep.subr.mxu0 %v581
    %959 = vmatpush2.msra.mxu0 %v580
    %960 = vmatprep.subr.mxu0 %v578
    %961 = vmatpush2.msra.mxu0 %v577
    %962 = vmatprep.subr.mxu0 %v575
    %963 = vmatpush2.msra.mxu0 %v574
    %964 = vmatprep.subr.mxu0 %v572
    %965 = vmatpush2.msra.mxu0 %v571
    %966 = vmatprep.subr.mxu0 %v569
    %967 = vmatpush2.msra.mxu0 %v568
    %968 = vmatprep.subr.mxu0 %v566
    %969 = vmatpush2.msra.mxu0 %v565
    %970 = vmatprep.mubr.f32.mxu0 %v376
    %971 = vmatmul.mubr.f32.gmra.mxu0 %v375
    %v972 = vpop.f32.mrf.mxu0
    %v973 = vadd.f32 %v872, %v972
    %v974 = vpop.f32.mrf.mxu0
    %v975 = vadd.f32 %v874, %v974
    %976 = vmatprep.mubr.f32.mxu0 %v384
    %977 = vmatmul.mubr.f32.gmra.mxu0 %v383
    %v978 = vpop.f32.mrf.mxu0
    %v979 = vadd.f32 %v878, %v978
    %v980 = vpop.f32.mrf.mxu0
    %v981 = vadd.f32 %v880, %v980
    %982 = vmatprep.mubr.f32.mxu0 %v392
    %983 = vmatmul.mubr.f32.gmra.mxu0 %v391
    %v984 = vpop.f32.mrf.mxu0
    %v985 = vadd.f32 %v884, %v984
    %v986 = vpop.f32.mrf.mxu0
    %v987 = vadd.f32 %v886, %v986
    %988 = vmatprep.mubr.f32.mxu0 %v400
    %989 = vmatmul.mubr.f32.gmra.mxu0 %v399
    %v990 = vpop.f32.mrf.mxu0
    %v991 = vadd.f32 %v890, %v990
    %v992 = vpop.f32.mrf.mxu0
    %v993 = vadd.f32 %v892, %v992
    %994 = vmatprep.mubr.f32.mxu0 %v408
    %995 = vmatmul.mubr.f32.gmra.mxu0 %v407
    %v996 = vpop.f32.mrf.mxu0
    %v997 = vadd.f32 %v896, %v996
    %v998 = vpop.f32.mrf.mxu0
    %v999 = vadd.f32 %v898, %v998
    %1000 = vmatprep.mubr.f32.mxu0 %v416
    %1001 = vmatmul.mubr.f32.gmra.mxu0 %v415
    %v1002 = vpop.f32.mrf.mxu0
    %v1003 = vadd.f32 %v902, %v1002
    %v1004 = vpop.f32.mrf.mxu0
    %v1005 = vadd.f32 %v904, %v1004
    %1006 = vdwg.mxu0
    %1007 = vmatprep.subr.mxu0 %v659
    %1008 = vmatpush1.msra.mxu0 %v658
    %1009 = vmatprep.subr.mxu0 %v656
    %1010 = vmatpush1.msra.mxu0 %v655
    %1011 = vmatprep.subr.mxu0 %v653
    %1012 = vmatpush1.msra.mxu0 %v652
    %1013 = vmatprep.subr.mxu0 %v650
    %1014 = vmatpush1.msra.mxu0 %v649
    %1015 = vmatprep.subr.mxu0 %v647
    %1016 = vmatpush1.msra.mxu0 %v646
    %1017 = vmatprep.subr.mxu0 %v644
    %1018 = vmatpush1.msra.mxu0 %v643
    %1019 = vmatprep.subr.mxu0 %v641
    %1020 = vmatpush1.msra.mxu0 %v640
    %1021 = vmatprep.subr.mxu0 %v638
    %1022 = vmatpush1.msra.mxu0 %v637
    %1023 = vmatprep.subr.mxu0 %v635
    %1024 = vmatpush1.msra.mxu0 %v634
    %1025 = vmatprep.subr.mxu0 %v632
    %1026 = vmatpush1.msra.mxu0 %v631
    %1027 = vmatprep.subr.mxu0 %v629
    %1028 = vmatpush1.msra.mxu0 %v628
    %1029 = vmatprep.subr.mxu0 %v626
    %1030 = vmatpush1.msra.mxu0 %v625
    %1031 = vmatprep.subr.mxu0 %v623
    %1032 = vmatpush1.msra.mxu0 %v622
    %1033 = vmatprep.subr.mxu0 %v620
    %1034 = vmatpush1.msra.mxu0 %v619
    %1035 = vmatprep.subr.mxu0 %v617
    %1036 = vmatpush1.msra.mxu0 %v616
    %1037 = vmatprep.subr.mxu0 %v614
    %1038 = vmatpush1.msra.mxu0 %v613
    %1039 = vmatprep.subr.mxu0 %v707
    %1040 = vmatpush2.msra.mxu0 %v706
    %1041 = vmatprep.subr.mxu0 %v704
    %1042 = vmatpush2.msra.mxu0 %v703
    %1043 = vmatprep.subr.mxu0 %v701
    %1044 = vmatpush2.msra.mxu0 %v700
    %1045 = vmatprep.subr.mxu0 %v698
    %1046 = vmatpush2.msra.mxu0 %v697
    %1047 = vmatprep.subr.mxu0 %v695
    %1048 = vmatpush2.msra.mxu0 %v694
    %1049 = vmatprep.subr.mxu0 %v692
    %1050 = vmatpush2.msra.mxu0 %v691
    %1051 = vmatprep.subr.mxu0 %v689
    %1052 = vmatpush2.msra.mxu0 %v688
    %1053 = vmatprep.subr.mxu0 %v686
    %1054 = vmatpush2.msra.mxu0 %v685
    %1055 = vmatprep.subr.mxu0 %v683
    %1056 = vmatpush2.msra.mxu0 %v682
    %1057 = vmatprep.subr.mxu0 %v680
    %1058 = vmatpush2.msra.mxu0 %v679
    %1059 = vmatprep.subr.mxu0 %v677
    %1060 = vmatpush2.msra.mxu0 %v676
    %1061 = vmatprep.subr.mxu0 %v674
    %1062 = vmatpush2.msra.mxu0 %v673
    %1063 = vmatprep.subr.mxu0 %v671
    %1064 = vmatpush2.msra.mxu0 %v670
    %1065 = vmatprep.subr.mxu0 %v668
    %1066 = vmatpush2.msra.mxu0 %v667
    %1067 = vmatprep.subr.mxu0 %v665
    %1068 = vmatpush2.msra.mxu0 %v664
    %1069 = vmatprep.subr.mxu0 %v662
    %1070 = vmatpush2.msra.mxu0 %v661
    %1071 = vmatprep.mubr.f32.mxu0 %v378
    %1072 = vmatmul.mubr.f32.gmra.mxu0 %v377
    %v1073 = vpop.f32.mrf.mxu0
    %v1074 = vadd.f32 %v973, %v1073
    %v1075 = vpop.f32.mrf.mxu0
    %v1076 = vadd.f32 %v975, %v1075
    %1077 = vmatprep.mubr.f32.mxu0 %v386
    %1078 = vmatmul.mubr.f32.gmra.mxu0 %v385
    %v1079 = vpop.f32.mrf.mxu0
    %v1080 = vadd.f32 %v979, %v1079
    %v1081 = vpop.f32.mrf.mxu0
    %v1082 = vadd.f32 %v981, %v1081
    %1083 = vmatprep.mubr.f32.mxu0 %v394
    %1084 = vmatmul.mubr.f32.gmra.mxu0 %v393
    %v1085 = vpop.f32.mrf.mxu0
    %v1086 = vadd.f32 %v985, %v1085
    %v1087 = vpop.f32.mrf.mxu0
    %v1088 = vadd.f32 %v987, %v1087
    %1089 = vmatprep.mubr.f32.mxu0 %v402
    %1090 = vmatmul.mubr.f32.gmra.mxu0 %v401
    %v1091 = vpop.f32.mrf.mxu0
    %v1092 = vadd.f32 %v991, %v1091
    %v1093 = vpop.f32.mrf.mxu0
    %v1094 = vadd.f32 %v993, %v1093
    %1095 = vmatprep.mubr.f32.mxu0 %v410
    %1096 = vmatmul.mubr.f32.gmra.mxu0 %v409
    %v1097 = vpop.f32.mrf.mxu0
    %v1098 = vadd.f32 %v997, %v1097
    %v1099 = vpop.f32.mrf.mxu0
    %v1100 = vadd.f32 %v999, %v1099
    %1101 = vmatprep.mubr.f32.mxu0 %v418
    %1102 = vmatmul.mubr.f32.gmra.mxu0 %v417
    %v1103 = vpop.f32.mrf.mxu0
    %v1104 = vadd.f32 %v1003, %v1103
    %v1105 = vpop.f32.mrf.mxu0
    %v1106 = vadd.f32 %v1005, %v1105
    %1107 = vdwg.mxu0
    %1108 = vmatprep.subr.mxu0 %v755
    %1109 = vmatpush1.msra.mxu0 %v754
    %1110 = vmatprep.subr.mxu0 %v752
    %1111 = vmatpush1.msra.mxu0 %v751
    %1112 = vmatprep.subr.mxu0 %v749
    %1113 = vmatpush1.msra.mxu0 %v748
    %1114 = vmatprep.subr.mxu0 %v746
    %1115 = vmatpush1.msra.mxu0 %v745
    %1116 = vmatprep.subr.mxu0 %v743
    %1117 = vmatpush1.msra.mxu0 %v742
    %1118 = vmatprep.subr.mxu0 %v740
    %1119 = vmatpush1.msra.mxu0 %v739
    %1120 = vmatprep.subr.mxu0 %v737
    %1121 = vmatpush1.msra.mxu0 %v736
    %1122 = vmatprep.subr.mxu0 %v734
    %1123 = vmatpush1.msra.mxu0 %v733
    %1124 = vmatprep.subr.mxu0 %v731
    %1125 = vmatpush1.msra.mxu0 %v730
    %1126 = vmatprep.subr.mxu0 %v728
    %1127 = vmatpush1.msra.mxu0 %v727
    %1128 = vmatprep.subr.mxu0 %v725
    %1129 = vmatpush1.msra.mxu0 %v724
    %1130 = vmatprep.subr.mxu0 %v722
    %1131 = vmatpush1.msra.mxu0 %v721
    %1132 = vmatprep.subr.mxu0 %v719
    %1133 = vmatpush1.msra.mxu0 %v718
    %1134 = vmatprep.subr.mxu0 %v716
    %1135 = vmatpush1.msra.mxu0 %v715
    %1136 = vmatprep.subr.mxu0 %v713
    %1137 = vmatpush1.msra.mxu0 %v712
    %1138 = vmatprep.subr.mxu0 %v710
    %1139 = vmatpush1.msra.mxu0 %v709
    %1140 = vmatprep.subr.mxu0 %v803
    %1141 = vmatpush2.msra.mxu0 %v802
    %1142 = vmatprep.subr.mxu0 %v800
    %1143 = vmatpush2.msra.mxu0 %v799
    %1144 = vmatprep.subr.mxu0 %v797
    %1145 = vmatpush2.msra.mxu0 %v796
    %1146 = vmatprep.subr.mxu0 %v794
    %1147 = vmatpush2.msra.mxu0 %v793
    %1148 = vmatprep.subr.mxu0 %v791
    %1149 = vmatpush2.msra.mxu0 %v790
    %1150 = vmatprep.subr.mxu0 %v788
    %1151 = vmatpush2.msra.mxu0 %v787
    %1152 = vmatprep.subr.mxu0 %v785
    %1153 = vmatpush2.msra.mxu0 %v784
    %1154 = vmatprep.subr.mxu0 %v782
    %1155 = vmatpush2.msra.mxu0 %v781
    %1156 = vmatprep.subr.mxu0 %v779
    %1157 = vmatpush2.msra.mxu0 %v778
    %1158 = vmatprep.subr.mxu0 %v776
    %1159 = vmatpush2.msra.mxu0 %v775
    %1160 = vmatprep.subr.mxu0 %v773
    %1161 = vmatpush2.msra.mxu0 %v772
    %1162 = vmatprep.subr.mxu0 %v770
    %1163 = vmatpush2.msra.mxu0 %v769
    %1164 = vmatprep.subr.mxu0 %v767
    %1165 = vmatpush2.msra.mxu0 %v766
    %1166 = vmatprep.subr.mxu0 %v764
    %1167 = vmatpush2.msra.mxu0 %v763
    %1168 = vmatprep.subr.mxu0 %v761
    %1169 = vmatpush2.msra.mxu0 %v760
    %1170 = vmatprep.subr.mxu0 %v758
    %1171 = vmatpush2.msra.mxu0 %v757
    %1172 = vmatprep.mubr.f32.mxu0 %v380
    %1173 = vmatmul.mubr.f32.gmra.mxu0 %v379
    %v1174 = vpop.f32.mrf.mxu0
    %v1175 = vadd.f32 %v1074, %v1174
    %v1176 = vpop.f32.mrf.mxu0
    %v1177 = vadd.f32 %v1076, %v1176
    %1178 = vmatprep.mubr.f32.mxu0 %v388
    %1179 = vmatmul.mubr.f32.gmra.mxu0 %v387
    %v1180 = vpop.f32.mrf.mxu0
    %v1181 = vadd.f32 %v1080, %v1180
    %v1182 = vpop.f32.mrf.mxu0
    %v1183 = vadd.f32 %v1082, %v1182
    %1184 = vmatprep.mubr.f32.mxu0 %v396
    %1185 = vmatmul.mubr.f32.gmra.mxu0 %v395
    %v1186 = vpop.f32.mrf.mxu0
    %v1187 = vadd.f32 %v1086, %v1186
    %v1188 = vpop.f32.mrf.mxu0
    %v1189 = vadd.f32 %v1088, %v1188
    %1190 = vmatprep.mubr.f32.mxu0 %v404
    %1191 = vmatmul.mubr.f32.gmra.mxu0 %v403
    %v1192 = vpop.f32.mrf.mxu0
    %v1193 = vadd.f32 %v1092, %v1192
    %v1194 = vpop.f32.mrf.mxu0
    %v1195 = vadd.f32 %v1094, %v1194
    %1196 = vmatprep.mubr.f32.mxu0 %v412
    %1197 = vmatmul.mubr.f32.gmra.mxu0 %v411
    %v1198 = vpop.f32.mrf.mxu0
    %v1199 = vadd.f32 %v1098, %v1198
    %v1200 = vpop.f32.mrf.mxu0
    %v1201 = vadd.f32 %v1100, %v1200
    %1202 = vmatprep.mubr.f32.mxu0 %v420
    %1203 = vmatmul.mubr.f32.gmra.mxu0 %v419
    %v1204 = vpop.f32.mrf.mxu0
    %v1205 = vadd.f32 %v1104, %v1204
    %v1206 = vpop.f32.mrf.mxu0
    %v1207 = vadd.f32 %v1106, %v1206
    %1208 = vdwg.mxu0
    %1209 = vmatprep.subr.mxu0 0.0
    %1210 = vmatpush1.msra.mxu0 %v468
    %1211 = vmatprep.subr.mxu0 0.0
    %1212 = vmatpush1.msra.mxu0 %v465
    %1213 = vmatprep.subr.mxu0 0.0
    %1214 = vmatpush1.msra.mxu0 %v462
    %1215 = vmatprep.subr.mxu0 0.0
    %1216 = vmatpush1.msra.mxu0 %v459
    %1217 = vmatprep.subr.mxu0 0.0
    %1218 = vmatpush1.msra.mxu0 %v456
    %1219 = vmatprep.subr.mxu0 0.0
    %1220 = vmatpush1.msra.mxu0 %v453
    %1221 = vmatprep.subr.mxu0 0.0
    %1222 = vmatpush1.msra.mxu0 %v450
    %1223 = vmatprep.subr.mxu0 0.0
    %1224 = vmatpush1.msra.mxu0 %v447
    %1225 = vmatprep.subr.mxu0 0.0
    %1226 = vmatpush1.msra.mxu0 %v444
    %1227 = vmatprep.subr.mxu0 0.0
    %1228 = vmatpush1.msra.mxu0 %v441
    %1229 = vmatprep.subr.mxu0 0.0
    %1230 = vmatpush1.msra.mxu0 %v438
    %1231 = vmatprep.subr.mxu0 0.0
    %1232 = vmatpush1.msra.mxu0 %v435
    %1233 = vmatprep.subr.mxu0 0.0
    %1234 = vmatpush1.msra.mxu0 %v432
    %1235 = vmatprep.subr.mxu0 0.0
    %1236 = vmatpush1.msra.mxu0 %v429
    %1237 = vmatprep.subr.mxu0 0.0
    %1238 = vmatpush1.msra.mxu0 %v426
    %1239 = vmatprep.subr.mxu0 0.0
    %1240 = vmatpush1.msra.mxu0 %v423
    %1241 = vmatprep.subr.mxu0 0.0
    %1242 = vmatpush2.msra.mxu0 %v516
    %1243 = vmatprep.subr.mxu0 0.0
    %1244 = vmatpush2.msra.mxu0 %v513
    %1245 = vmatprep.subr.mxu0 0.0
    %1246 = vmatpush2.msra.mxu0 %v510
    %1247 = vmatprep.subr.mxu0 0.0
    %1248 = vmatpush2.msra.mxu0 %v507
    %1249 = vmatprep.subr.mxu0 0.0
    %1250 = vmatpush2.msra.mxu0 %v504
    %1251 = vmatprep.subr.mxu0 0.0
    %1252 = vmatpush2.msra.mxu0 %v501
    %1253 = vmatprep.subr.mxu0 0.0
    %1254 = vmatpush2.msra.mxu0 %v498
    %1255 = vmatprep.subr.mxu0 0.0
    %1256 = vmatpush2.msra.mxu0 %v495
    %1257 = vmatprep.subr.mxu0 0.0
    %1258 = vmatpush2.msra.mxu0 %v492
    %1259 = vmatprep.subr.mxu0 0.0
    %1260 = vmatpush2.msra.mxu0 %v489
    %1261 = vmatprep.subr.mxu0 0.0
    %1262 = vmatpush2.msra.mxu0 %v486
    %1263 = vmatprep.subr.mxu0 0.0
    %1264 = vmatpush2.msra.mxu0 %v483
    %1265 = vmatprep.subr.mxu0 0.0
    %1266 = vmatpush2.msra.mxu0 %v480
    %1267 = vmatprep.subr.mxu0 0.0
    %1268 = vmatpush2.msra.mxu0 %v477
    %1269 = vmatprep.subr.mxu0 0.0
    %1270 = vmatpush2.msra.mxu0 %v474
    %1271 = vmatprep.subr.mxu0 0.0
    %1272 = vmatpush2.msra.mxu0 %v471
    %1273 = vmatprep.mubr.f32.mxu0 %v374
    %1274 = vmatmul.mubr.f32.gmra.mxu0 %v373
    %v1275 = vpop.f32.mrf.mxu0
    %v1276 = vadd.f32 0.0, %v1275
    %v1277 = vpop.f32.mrf.mxu0
    %1278 = vmatprep.mubr.f32.mxu0 %v382
    %1279 = vmatmul.mubr.f32.gmra.mxu0 %v381
    %v1280 = vpop.f32.mrf.mxu0
    %v1281 = vadd.f32 0.0, %v1280
    %v1282 = vpop.f32.mrf.mxu0
    %1283 = vmatprep.mubr.f32.mxu0 %v390
    %1284 = vmatmul.mubr.f32.gmra.mxu0 %v389
    %v1285 = vpop.f32.mrf.mxu0
    %v1286 = vadd.f32 0.0, %v1285
    %v1287 = vpop.f32.mrf.mxu0
    %1288 = vmatprep.mubr.f32.mxu0 %v398
    %1289 = vmatmul.mubr.f32.gmra.mxu0 %v397
    %v1290 = vpop.f32.mrf.mxu0
    %v1291 = vadd.f32 0.0, %v1290
    %v1292 = vpop.f32.mrf.mxu0
    %1293 = vmatprep.mubr.f32.mxu0 %v406
    %1294 = vmatmul.mubr.f32.gmra.mxu0 %v405
    %v1295 = vpop.f32.mrf.mxu0
    %v1296 = vadd.f32 0.0, %v1295
    %v1297 = vpop.f32.mrf.mxu0
    %1298 = vmatprep.mubr.f32.mxu0 %v414
    %1299 = vmatmul.mubr.f32.gmra.mxu0 %v413
    %v1300 = vpop.f32.mrf.mxu0
    %v1301 = vadd.f32 0.0, %v1300
    %v1302 = vpop.f32.mrf.mxu0
    %1303 = vdwg.mxu0
    %1304 = vmatprep.subr.mxu0 0.0
    %1305 = vmatpush1.msra.mxu0 %v564
    %1306 = vmatprep.subr.mxu0 0.0
    %1307 = vmatpush1.msra.mxu0 %v561
    %1308 = vmatprep.subr.mxu0 0.0
    %1309 = vmatpush1.msra.mxu0 %v558
    %1310 = vmatprep.subr.mxu0 0.0
    %1311 = vmatpush1.msra.mxu0 %v555
    %1312 = vmatprep.subr.mxu0 0.0
    %1313 = vmatpush1.msra.mxu0 %v552
    %1314 = vmatprep.subr.mxu0 0.0
    %1315 = vmatpush1.msra.mxu0 %v549
    %1316 = vmatprep.subr.mxu0 0.0
    %1317 = vmatpush1.msra.mxu0 %v546
    %1318 = vmatprep.subr.mxu0 0.0
    %1319 = vmatpush1.msra.mxu0 %v543
    %1320 = vmatprep.subr.mxu0 0.0
    %1321 = vmatpush1.msra.mxu0 %v540
    %1322 = vmatprep.subr.mxu0 0.0
    %1323 = vmatpush1.msra.mxu0 %v537
    %1324 = vmatprep.subr.mxu0 0.0
    %1325 = vmatpush1.msra.mxu0 %v534
    %1326 = vmatprep.subr.mxu0 0.0
    %1327 = vmatpush1.msra.mxu0 %v531
    %1328 = vmatprep.subr.mxu0 0.0
    %1329 = vmatpush1.msra.mxu0 %v528
    %1330 = vmatprep.subr.mxu0 0.0
    %1331 = vmatpush1.msra.mxu0 %v525
    %1332 = vmatprep.subr.mxu0 0.0
    %1333 = vmatpush1.msra.mxu0 %v522
    %1334 = vmatprep.subr.mxu0 0.0
    %1335 = vmatpush1.msra.mxu0 %v519
    %1336 = vmatprep.subr.mxu0 0.0
    %1337 = vmatpush2.msra.mxu0 %v612
    %1338 = vmatprep.subr.mxu0 0.0
    %1339 = vmatpush2.msra.mxu0 %v609
    %1340 = vmatprep.subr.mxu0 0.0
    %1341 = vmatpush2.msra.mxu0 %v606
    %1342 = vmatprep.subr.mxu0 0.0
    %1343 = vmatpush2.msra.mxu0 %v603
    %1344 = vmatprep.subr.mxu0 0.0
    %1345 = vmatpush2.msra.mxu0 %v600
    %1346 = vmatprep.subr.mxu0 0.0
    %1347 = vmatpush2.msra.mxu0 %v597
    %1348 = vmatprep.subr.mxu0 0.0
    %1349 = vmatpush2.msra.mxu0 %v594
    %1350 = vmatprep.subr.mxu0 0.0
    %1351 = vmatpush2.msra.mxu0 %v591
    %1352 = vmatprep.subr.mxu0 0.0
    %1353 = vmatpush2.msra.mxu0 %v588
    %1354 = vmatprep.subr.mxu0 0.0
    %1355 = vmatpush2.msra.mxu0 %v585
    %1356 = vmatprep.subr.mxu0 0.0
    %1357 = vmatpush2.msra.mxu0 %v582
    %1358 = vmatprep.subr.mxu0 0.0
    %1359 = vmatpush2.msra.mxu0 %v579
    %1360 = vmatprep.subr.mxu0 0.0
    %1361 = vmatpush2.msra.mxu0 %v576
    %1362 = vmatprep.subr.mxu0 0.0
    %1363 = vmatpush2.msra.mxu0 %v573
    %1364 = vmatprep.subr.mxu0 0.0
    %1365 = vmatpush2.msra.mxu0 %v570
    %1366 = vmatprep.subr.mxu0 0.0
    %1367 = vmatpush2.msra.mxu0 %v567
    %1368 = vmatprep.mubr.f32.mxu0 %v376
    %1369 = vmatmul.mubr.f32.gmra.mxu0 %v375
    %v1370 = vpop.f32.mrf.mxu0
    %v1371 = vadd.f32 %v1276, %v1370
    %v1372 = vpop.f32.mrf.mxu0
    %1373 = vmatprep.mubr.f32.mxu0 %v384
    %1374 = vmatmul.mubr.f32.gmra.mxu0 %v383
    %v1375 = vpop.f32.mrf.mxu0
    %v1376 = vadd.f32 %v1281, %v1375
    %v1377 = vpop.f32.mrf.mxu0
    %1378 = vmatprep.mubr.f32.mxu0 %v392
    %1379 = vmatmul.mubr.f32.gmra.mxu0 %v391
    %v1380 = vpop.f32.mrf.mxu0
    %v1381 = vadd.f32 %v1286, %v1380
    %v1382 = vpop.f32.mrf.mxu0
    %1383 = vmatprep.mubr.f32.mxu0 %v400
    %1384 = vmatmul.mubr.f32.gmra.mxu0 %v399
    %v1385 = vpop.f32.mrf.mxu0
    %v1386 = vadd.f32 %v1291, %v1385
    %v1387 = vpop.f32.mrf.mxu0
    %1388 = vmatprep.mubr.f32.mxu0 %v408
    %1389 = vmatmul.mubr.f32.gmra.mxu0 %v407
    %v1390 = vpop.f32.mrf.mxu0
    %v1391 = vadd.f32 %v1296, %v1390
    %v1392 = vpop.f32.mrf.mxu0
    %1393 = vmatprep.mubr.f32.mxu0 %v416
    %1394 = vmatmul.mubr.f32.gmra.mxu0 %v415
    %v1395 = vpop.f32.mrf.mxu0
    %v1396 = vadd.f32 %v1301, %v1395
    %v1397 = vpop.f32.mrf.mxu0
    %1398 = vdwg.mxu0
    %1399 = vmatprep.subr.mxu0 0.0
    %1400 = vmatpush1.msra.mxu0 %v660
    %1401 = vmatprep.subr.mxu0 0.0
    %1402 = vmatpush1.msra.mxu0 %v657
    %1403 = vmatprep.subr.mxu0 0.0
    %1404 = vmatpush1.msra.mxu0 %v654
    %1405 = vmatprep.subr.mxu0 0.0
    %1406 = vmatpush1.msra.mxu0 %v651
    %1407 = vmatprep.subr.mxu0 0.0
    %1408 = vmatpush1.msra.mxu0 %v648
    %1409 = vmatprep.subr.mxu0 0.0
    %1410 = vmatpush1.msra.mxu0 %v645
    %1411 = vmatprep.subr.mxu0 0.0
    %1412 = vmatpush1.msra.mxu0 %v642
    %1413 = vmatprep.subr.mxu0 0.0
    %1414 = vmatpush1.msra.mxu0 %v639
    %1415 = vmatprep.subr.mxu0 0.0
    %1416 = vmatpush1.msra.mxu0 %v636
    %1417 = vmatprep.subr.mxu0 0.0
    %1418 = vmatpush1.msra.mxu0 %v633
    %1419 = vmatprep.subr.mxu0 0.0
    %1420 = vmatpush1.msra.mxu0 %v630
    %1421 = vmatprep.subr.mxu0 0.0
    %1422 = vmatpush1.msra.mxu0 %v627
    %1423 = vmatprep.subr.mxu0 0.0
    %1424 = vmatpush1.msra.mxu0 %v624
    %1425 = vmatprep.subr.mxu0 0.0
    %1426 = vmatpush1.msra.mxu0 %v621
    %1427 = vmatprep.subr.mxu0 0.0
    %1428 = vmatpush1.msra.mxu0 %v618
    %1429 = vmatprep.subr.mxu0 0.0
    %1430 = vmatpush1.msra.mxu0 %v615
    %1431 = vmatprep.subr.mxu0 0.0
    %1432 = vmatpush2.msra.mxu0 %v708
    %1433 = vmatprep.subr.mxu0 0.0
    %1434 = vmatpush2.msra.mxu0 %v705
    %1435 = vmatprep.subr.mxu0 0.0
    %1436 = vmatpush2.msra.mxu0 %v702
    %1437 = vmatprep.subr.mxu0 0.0
    %1438 = vmatpush2.msra.mxu0 %v699
    %1439 = vmatprep.subr.mxu0 0.0
    %1440 = vmatpush2.msra.mxu0 %v696
    %1441 = vmatprep.subr.mxu0 0.0
    %1442 = vmatpush2.msra.mxu0 %v693
    %1443 = vmatprep.subr.mxu0 0.0
    %1444 = vmatpush2.msra.mxu0 %v690
    %1445 = vmatprep.subr.mxu0 0.0
    %1446 = vmatpush2.msra.mxu0 %v687
    %1447 = vmatprep.subr.mxu0 0.0
    %1448 = vmatpush2.msra.mxu0 %v684
    %1449 = vmatprep.subr.mxu0 0.0
    %1450 = vmatpush2.msra.mxu0 %v681
    %1451 = vmatprep.subr.mxu0 0.0
    %1452 = vmatpush2.msra.mxu0 %v678
    %1453 = vmatprep.subr.mxu0 0.0
    %1454 = vmatpush2.msra.mxu0 %v675
    %1455 = vmatprep.subr.mxu0 0.0
    %1456 = vmatpush2.msra.mxu0 %v672
    %1457 = vmatprep.subr.mxu0 0.0
    %1458 = vmatpush2.msra.mxu0 %v669
    %1459 = vmatprep.subr.mxu0 0.0
    %1460 = vmatpush2.msra.mxu0 %v666
    %1461 = vmatprep.subr.mxu0 0.0
    %1462 = vmatpush2.msra.mxu0 %v663
    %1463 = vmatprep.mubr.f32.mxu0 %v378
    %1464 = vmatmul.mubr.f32.gmra.mxu0 %v377
    %v1465 = vpop.f32.mrf.mxu0
    %v1466 = vadd.f32 %v1371, %v1465
    %v1467 = vpop.f32.mrf.mxu0
    %1468 = vmatprep.mubr.f32.mxu0 %v386
    %1469 = vmatmul.mubr.f32.gmra.mxu0 %v385
    %v1470 = vpop.f32.mrf.mxu0
    %v1471 = vadd.f32 %v1376, %v1470
    %v1472 = vpop.f32.mrf.mxu0
    %1473 = vmatprep.mubr.f32.mxu0 %v394
    %1474 = vmatmul.mubr.f32.gmra.mxu0 %v393
    %v1475 = vpop.f32.mrf.mxu0
    %v1476 = vadd.f32 %v1381, %v1475
    %v1477 = vpop.f32.mrf.mxu0
    %1478 = vmatprep.mubr.f32.mxu0 %v402
    %1479 = vmatmul.mubr.f32.gmra.mxu0 %v401
    %v1480 = vpop.f32.mrf.mxu0
    %v1481 = vadd.f32 %v1386, %v1480
    %v1482 = vpop.f32.mrf.mxu0
    %1483 = vmatprep.mubr.f32.mxu0 %v410
    %1484 = vmatmul.mubr.f32.gmra.mxu0 %v409
    %v1485 = vpop.f32.mrf.mxu0
    %v1486 = vadd.f32 %v1391, %v1485
    %v1487 = vpop.f32.mrf.mxu0
    %1488 = vmatprep.mubr.f32.mxu0 %v418
    %1489 = vmatmul.mubr.f32.gmra.mxu0 %v417
    %v1490 = vpop.f32.mrf.mxu0
    %v1491 = vadd.f32 %v1396, %v1490
    %v1492 = vpop.f32.mrf.mxu0
    %1493 = vdwg.mxu0
    %1494 = vmatprep.subr.mxu0 0.0
    %1495 = vmatpush1.msra.mxu0 %v756
    %1496 = vmatprep.subr.mxu0 0.0
    %1497 = vmatpush1.msra.mxu0 %v753
    %1498 = vmatprep.subr.mxu0 0.0
    %1499 = vmatpush1.msra.mxu0 %v750
    %1500 = vmatprep.subr.mxu0 0.0
    %1501 = vmatpush1.msra.mxu0 %v747
    %1502 = vmatprep.subr.mxu0 0.0
    %1503 = vmatpush1.msra.mxu0 %v744
    %1504 = vmatprep.subr.mxu0 0.0
    %1505 = vmatpush1.msra.mxu0 %v741
    %1506 = vmatprep.subr.mxu0 0.0
    %1507 = vmatpush1.msra.mxu0 %v738
    %1508 = vmatprep.subr.mxu0 0.0
    %1509 = vmatpush1.msra.mxu0 %v735
    %1510 = vmatprep.subr.mxu0 0.0
    %1511 = vmatpush1.msra.mxu0 %v732
    %1512 = vmatprep.subr.mxu0 0.0
    %1513 = vmatpush1.msra.mxu0 %v729
    %1514 = vmatprep.subr.mxu0 0.0
    %1515 = vmatpush1.msra.mxu0 %v726
    %1516 = vmatprep.subr.mxu0 0.0
    %1517 = vmatpush1.msra.mxu0 %v723
    %1518 = vmatprep.subr.mxu0 0.0
    %1519 = vmatpush1.msra.mxu0 %v720
    %1520 = vmatprep.subr.mxu0 0.0
    %1521 = vmatpush1.msra.mxu0 %v717
    %1522 = vmatprep.subr.mxu0 0.0
    %1523 = vmatpush1.msra.mxu0 %v714
    %1524 = vmatprep.subr.mxu0 0.0
    %1525 = vmatpush1.msra.mxu0 %v711
    %1526 = vmatprep.subr.mxu0 0.0
    %1527 = vmatpush2.msra.mxu0 %v804
    %1528 = vmatprep.subr.mxu0 0.0
    %1529 = vmatpush2.msra.mxu0 %v801
    %1530 = vmatprep.subr.mxu0 0.0
    %1531 = vmatpush2.msra.mxu0 %v798
    %1532 = vmatprep.subr.mxu0 0.0
    %1533 = vmatpush2.msra.mxu0 %v795
    %1534 = vmatprep.subr.mxu0 0.0
    %1535 = vmatpush2.msra.mxu0 %v792
    %1536 = vmatprep.subr.mxu0 0.0
    %1537 = vmatpush2.msra.mxu0 %v789
    %1538 = vmatprep.subr.mxu0 0.0
    %1539 = vmatpush2.msra.mxu0 %v786
    %1540 = vmatprep.subr.mxu0 0.0
    %1541 = vmatpush2.msra.mxu0 %v783
    %1542 = vmatprep.subr.mxu0 0.0
    %1543 = vmatpush2.msra.mxu0 %v780
    %1544 = vmatprep.subr.mxu0 0.0
    %1545 = vmatpush2.msra.mxu0 %v777
    %1546 = vmatprep.subr.mxu0 0.0
    %1547 = vmatpush2.msra.mxu0 %v774
    %1548 = vmatprep.subr.mxu0 0.0
    %1549 = vmatpush2.msra.mxu0 %v771
    %1550 = vmatprep.subr.mxu0 0.0
    %1551 = vmatpush2.msra.mxu0 %v768
    %1552 = vmatprep.subr.mxu0 0.0
    %1553 = vmatpush2.msra.mxu0 %v765
    %1554 = vmatprep.subr.mxu0 0.0
    %1555 = vmatpush2.msra.mxu0 %v762
    %1556 = vmatprep.subr.mxu0 0.0
    %1557 = vmatpush2.msra.mxu0 %v759
    %1558 = vmatprep.mubr.f32.mxu0 %v380
    %1559 = vmatmul.mubr.f32.gmra.mxu0 %v379
    %v1560 = vpop.f32.mrf.mxu0
    %v1561 = vadd.f32 %v1466, %v1560
    %v1562 = vpop.f32.mrf.mxu0
    %1563 = vmatprep.mubr.f32.mxu0 %v388
    %1564 = vmatmul.mubr.f32.gmra.mxu0 %v387
    %v1565 = vpop.f32.mrf.mxu0
    %v1566 = vadd.f32 %v1471, %v1565
    %v1567 = vpop.f32.mrf.mxu0
    %1568 = vmatprep.mubr.f32.mxu0 %v396
    %1569 = vmatmul.mubr.f32.gmra.mxu0 %v395
    %v1570 = vpop.f32.mrf.mxu0
    %v1571 = vadd.f32 %v1476, %v1570
    %v1572 = vpop.f32.mrf.mxu0
    %1573 = vmatprep.mubr.f32.mxu0 %v404
    %1574 = vmatmul.mubr.f32.gmra.mxu0 %v403
    %v1575 = vpop.f32.mrf.mxu0
    %v1576 = vadd.f32 %v1481, %v1575
    %v1577 = vpop.f32.mrf.mxu0
    %1578 = vmatprep.mubr.f32.mxu0 %v412
    %1579 = vmatmul.mubr.f32.gmra.mxu0 %v411
    %v1580 = vpop.f32.mrf.mxu0
    %v1581 = vadd.f32 %v1486, %v1580
    %v1582 = vpop.f32.mrf.mxu0
    %1583 = vmatprep.mubr.f32.mxu0 %v420
    %1584 = vmatmul.mubr.f32.gmra.mxu0 %v419
    %v1585 = vpop.f32.mrf.mxu0
    %v1586 = vadd.f32 %v1491, %v1585
    %v1587 = vpop.f32.mrf.mxu0
    %1588 = vdwg.mxu0
    %v1589 = vld [vmem:[%s1] sm:$0x1]
    %v1590 = vld [vmem:[%s1 + $0x4] sm:$0x1]
    %v1591 = vld [vmem:[%s1 + $0x8] sm:$0x1]
    %v1592 = vld [vmem:[%s1 + $0xc] sm:$0x1]
    %v1593 = vld [vmem:[%s1 + $0x10] sm:$0x1]
    %v1594 = vld [vmem:[%s1 + $0x14] sm:$0x1]
    %v1595 = vld [vmem:[%s1 + $0x18] sm:$0x1]
    %v1596 = vld [vmem:[%s1 + $0x1c] sm:$0x1]
    %v1597 = vld [vmem:[%s1 + $0x20] sm:$0x1]
    %v1598 = vld [vmem:[%s1 + $0x24] sm:$0x1]
    %v1599 = vld [vmem:[%s1 + $0x28] sm:$0x1]
    %v1600 = vld [vmem:[%s1 + $0x2c] sm:$0x1]
    %v1601 = vld [vmem:[%s1 + $0x30] sm:$0x1]
    %v1602 = vld [vmem:[%s1 + $0x34] sm:$0x1]
    %v1603 = vld [vmem:[%s1 + $0x38] sm:$0x1]
    %v1604 = vld [vmem:[%s1 + $0x3c] sm:$0x1]
    %v1605 = vld [vmem:[%s1 + $0x40] sm:$0x1]
    %v1606 = vld [vmem:[%s1 + $0x44] sm:$0x1]
    %v1607 = vld [vmem:[%s1 + $0x48] sm:$0x1]
    %v1608 = vld [vmem:[%s1 + $0x4c] sm:$0x1]
    %v1609 = vld [vmem:[%s1 + $0x50] sm:$0x1]
    %v1610 = vld [vmem:[%s1 + $0x54] sm:$0x1]
    %v1611 = vld [vmem:[%s1 + $0x58] sm:$0x1]
    %v1612 = vld [vmem:[%s1 + $0x5c] sm:$0x1]
    %v1613 = vld [vmem:[%s1 + $0x60] sm:$0x1]
    %v1614 = vld [vmem:[%s1 + $0x64] sm:$0x1]
    %v1615 = vld [vmem:[%s1 + $0x68] sm:$0x1]
    %v1616 = vld [vmem:[%s1 + $0x6c] sm:$0x1]
    %v1617 = vld [vmem:[%s1 + $0x70] sm:$0x1]
    %v1618 = vld [vmem:[%s1 + $0x74] sm:$0x1]
    %v1619 = vld [vmem:[%s1 + $0x78] sm:$0x1]
    %v1620 = vld [vmem:[%s1 + $0x7c] sm:$0x1]
    %v1621 = vld [vmem:[%s1 + $0x80] sm:$0x1]
    %v1622 = vld [vmem:[%s1 + $0x84] sm:$0x1]
    %v1623 = vld [vmem:[%s1 + $0x88] sm:$0x1]
    %v1624 = vld [vmem:[%s1 + $0x8c] sm:$0x1]
    %v1625 = vld [vmem:[%s1 + $0x90] sm:$0x1]
    %v1626 = vld [vmem:[%s1 + $0x94] sm:$0x1]
    %v1627 = vld [vmem:[%s1 + $0x98] sm:$0x1]
    %v1628 = vld [vmem:[%s1 + $0x9c] sm:$0x1]
    %v1629 = vld [vmem:[%s1 + $0xa0] sm:$0x1]
    %v1630 = vld [vmem:[%s1 + $0xa4] sm:$0x1]
    %v1631 = vld [vmem:[%s1 + $0xa8] sm:$0x1]
    %v1632 = vld [vmem:[%s1 + $0xac] sm:$0x1]
    %v1633 = vld [vmem:[%s1 + $0xb0] sm:$0x1]
    %v1634 = vld [vmem:[%s1 + $0xb4] sm:$0x1]
    %v1635 = vld [vmem:[%s1 + $0xb8] sm:$0x1]
    %v1636 = vld [vmem:[%s1 + $0xbc] sm:$0x1]
    %v1637 = vld [vmem:[%s1 + $0x1] sm:$0x1]
    %v1638 = vld [vmem:[%s1 + $0x5] sm:$0x1]
    %v1639 = vld [vmem:[%s1 + $0x9] sm:$0x1]
    %v1640 = vld [vmem:[%s1 + $0xd] sm:$0x1]
    %v1641 = vld [vmem:[%s1 + $0x11] sm:$0x1]
    %v1642 = vld [vmem:[%s1 + $0x15] sm:$0x1]
    %v1643 = vld [vmem:[%s1 + $0x19] sm:$0x1]
    %v1644 = vld [vmem:[%s1 + $0x1d] sm:$0x1]
    %v1645 = vld [vmem:[%s1 + $0x21] sm:$0x1]
    %v1646 = vld [vmem:[%s1 + $0x25] sm:$0x1]
    %v1647 = vld [vmem:[%s1 + $0x29] sm:$0x1]
    %v1648 = vld [vmem:[%s1 + $0x2d] sm:$0x1]
    %v1649 = vld [vmem:[%s1 + $0x31] sm:$0x1]
    %v1650 = vld [vmem:[%s1 + $0x35] sm:$0x1]
    %v1651 = vld [vmem:[%s1 + $0x39] sm:$0x1]
    %v1652 = vld [vmem:[%s1 + $0x3d] sm:$0x1]
    %v1653 = vld [vmem:[%s1 + $0x41] sm:$0x1]
    %v1654 = vld [vmem:[%s1 + $0x45] sm:$0x1]
    %v1655 = vld [vmem:[%s1 + $0x49] sm:$0x1]
    %v1656 = vld [vmem:[%s1 + $0x4d] sm:$0x1]
    %v1657 = vld [vmem:[%s1 + $0x51] sm:$0x1]
    %v1658 = vld [vmem:[%s1 + $0x55] sm:$0x1]
    %v1659 = vld [vmem:[%s1 + $0x59] sm:$0x1]
    %v1660 = vld [vmem:[%s1 + $0x5d] sm:$0x1]
    %v1661 = vld [vmem:[%s1 + $0x61] sm:$0x1]
    %v1662 = vld [vmem:[%s1 + $0x65] sm:$0x1]
    %v1663 = vld [vmem:[%s1 + $0x69] sm:$0x1]
    %v1664 = vld [vmem:[%s1 + $0x6d] sm:$0x1]
    %v1665 = vld [vmem:[%s1 + $0x71] sm:$0x1]
    %v1666 = vld [vmem:[%s1 + $0x75] sm:$0x1]
    %v1667 = vld [vmem:[%s1 + $0x79] sm:$0x1]
    %v1668 = vld [vmem:[%s1 + $0x7d] sm:$0x1]
    %v1669 = vld [vmem:[%s1 + $0x81] sm:$0x1]
    %v1670 = vld [vmem:[%s1 + $0x85] sm:$0x1]
    %v1671 = vld [vmem:[%s1 + $0x89] sm:$0x1]
    %v1672 = vld [vmem:[%s1 + $0x8d] sm:$0x1]
    %v1673 = vld [vmem:[%s1 + $0x91] sm:$0x1]
    %v1674 = vld [vmem:[%s1 + $0x95] sm:$0x1]
    %v1675 = vld [vmem:[%s1 + $0x99] sm:$0x1]
    %v1676 = vld [vmem:[%s1 + $0x9d] sm:$0x1]
    %v1677 = vld [vmem:[%s1 + $0xa1] sm:$0x1]
    %v1678 = vld [vmem:[%s1 + $0xa5] sm:$0x1]
    %v1679 = vld [vmem:[%s1 + $0xa9] sm:$0x1]
    %v1680 = vld [vmem:[%s1 + $0xad] sm:$0x1]
    %v1681 = vld [vmem:[%s1 + $0xb1] sm:$0x1]
    %v1682 = vld [vmem:[%s1 + $0xb5] sm:$0x1]
    %v1683 = vld [vmem:[%s1 + $0xb9] sm:$0x1]
    %v1684 = vld [vmem:[%s1 + $0xbd] sm:$0x1]
    %v1685 = vld [vmem:[%s1 + $0x2] sm:$0x1]
    %v1686 = vld [vmem:[%s1 + $0x6] sm:$0x1]
    %v1687 = vld [vmem:[%s1 + $0xa] sm:$0x1]
    %v1688 = vld [vmem:[%s1 + $0xe] sm:$0x1]
    %v1689 = vld [vmem:[%s1 + $0x12] sm:$0x1]
    %v1690 = vld [vmem:[%s1 + $0x16] sm:$0x1]
    %v1691 = vld [vmem:[%s1 + $0x1a] sm:$0x1]
    %v1692 = vld [vmem:[%s1 + $0x1e] sm:$0x1]
    %v1693 = vld [vmem:[%s1 + $0x22] sm:$0x1]
    %v1694 = vld [vmem:[%s1 + $0x26] sm:$0x1]
    %v1695 = vld [vmem:[%s1 + $0x2a] sm:$0x1]
    %v1696 = vld [vmem:[%s1 + $0x2e] sm:$0x1]
    %v1697 = vld [vmem:[%s1 + $0x32] sm:$0x1]
    %v1698 = vld [vmem:[%s1 + $0x36] sm:$0x1]
    %v1699 = vld [vmem:[%s1 + $0x3a] sm:$0x1]
    %v1700 = vld [vmem:[%s1 + $0x3e] sm:$0x1]
    %v1701 = vld [vmem:[%s1 + $0x42] sm:$0x1]
    %v1702 = vld [vmem:[%s1 + $0x46] sm:$0x1]
    %v1703 = vld [vmem:[%s1 + $0x4a] sm:$0x1]
    %v1704 = vld [vmem:[%s1 + $0x4e] sm:$0x1]
    %v1705 = vld [vmem:[%s1 + $0x52] sm:$0x1]
    %v1706 = vld [vmem:[%s1 + $0x56] sm:$0x1]
    %v1707 = vld [vmem:[%s1 + $0x5a] sm:$0x1]
    %v1708 = vld [vmem:[%s1 + $0x5e] sm:$0x1]
    %v1709 = vld [vmem:[%s1 + $0x62] sm:$0x1]
    %v1710 = vld [vmem:[%s1 + $0x66] sm:$0x1]
    %v1711 = vld [vmem:[%s1 + $0x6a] sm:$0x1]
    %v1712 = vld [vmem:[%s1 + $0x6e] sm:$0x1]
    %v1713 = vld [vmem:[%s1 + $0x72] sm:$0x1]
    %v1714 = vld [vmem:[%s1 + $0x76] sm:$0x1]
    %v1715 = vld [vmem:[%s1 + $0x7a] sm:$0x1]
    %v1716 = vld [vmem:[%s1 + $0x7e] sm:$0x1]
    %v1717 = vld [vmem:[%s1 + $0x82] sm:$0x1]
    %v1718 = vld [vmem:[%s1 + $0x86] sm:$0x1]
    %v1719 = vld [vmem:[%s1 + $0x8a] sm:$0x1]
    %v1720 = vld [vmem:[%s1 + $0x8e] sm:$0x1]
    %v1721 = vld [vmem:[%s1 + $0x92] sm:$0x1]
    %v1722 = vld [vmem:[%s1 + $0x96] sm:$0x1]
    %v1723 = vld [vmem:[%s1 + $0x9a] sm:$0x1]
    %v1724 = vld [vmem:[%s1 + $0x9e] sm:$0x1]
    %v1725 = vld [vmem:[%s1 + $0xa2] sm:$0x1]
    %v1726 = vld [vmem:[%s1 + $0xa6] sm:$0x1]
    %v1727 = vld [vmem:[%s1 + $0xaa] sm:$0x1]
    %v1728 = vld [vmem:[%s1 + $0xae] sm:$0x1]
    %v1729 = vld [vmem:[%s1 + $0xb2] sm:$0x1]
    %v1730 = vld [vmem:[%s1 + $0xb6] sm:$0x1]
    %v1731 = vld [vmem:[%s1 + $0xba] sm:$0x1]
    %v1732 = vld [vmem:[%s1 + $0xbe] sm:$0x1]
    %v1781 = vrot.slane %v1590, 7
    %vm1782 = vcmask 1041409
    %v1783 = vsel %vm1782, %v1781, %v1589
    %v1784 = vrot.slane %v1591, 6
    %vm1785 = vcmask 1042434
    %v1786 = vsel %vm1785, %v1784, %v1783
    %v1787 = vrot.slane %v1592, 5
    %vm1788 = vcmask 1043459
    %v1789 = vsel %vm1788, %v1787, %v1786
    %v1790 = vrot.slane %v1593, 4
    %vm1791 = vcmask 1044484
    %v1792 = vsel %vm1791, %v1790, %v1789
    %v1793 = vrot.slane %v1594, 3
    %vm1794 = vcmask 1045509
    %v1795 = vsel %vm1794, %v1793, %v1792
    %v1796 = vrot.slane %v1595, 2
    %vm1797 = vcmask 1046534
    %v1798 = vsel %vm1797, %v1796, %v1795
    %v1799 = vrot.slane %v1596, 1
    %vm1800 = vcmask 1047559
    %v1801 = vsel %vm1800, %v1799, %v1798
    %v1802 = vrot.slane %v1598, 7
    %v1803 = vsel %vm1782, %v1802, %v1597
    %v1804 = vrot.slane %v1599, 6
    %v1805 = vsel %vm1785, %v1804, %v1803
    %v1806 = vrot.slane %v1600, 5
    %v1807 = vsel %vm1788, %v1806, %v1805
    %v1808 = vrot.slane %v1601, 4
    %v1809 = vsel %vm1791, %v1808, %v1807
    %v1810 = vrot.slane %v1602, 3
    %v1811 = vsel %vm1794, %v1810, %v1809
    %v1812 = vrot.slane %v1603, 2
    %v1813 = vsel %vm1797, %v1812, %v1811
    %v1814 = vrot.slane %v1604, 1
    %v1815 = vsel %vm1800, %v1814, %v1813
    %v1816 = vrot.slane %v1606, 7
    %v1817 = vsel %vm1782, %v1816, %v1605
    %v1818 = vrot.slane %v1607, 6
    %v1819 = vsel %vm1785, %v1818, %v1817
    %v1820 = vrot.slane %v1608, 5
    %v1821 = vsel %vm1788, %v1820, %v1819
    %v1822 = vrot.slane %v1609, 4
    %v1823 = vsel %vm1791, %v1822, %v1821
    %v1824 = vrot.slane %v1610, 3
    %v1825 = vsel %vm1794, %v1824, %v1823
    %v1826 = vrot.slane %v1611, 2
    %v1827 = vsel %vm1797, %v1826, %v1825
    %v1828 = vrot.slane %v1612, 1
    %v1829 = vsel %vm1800, %v1828, %v1827
    %v1830 = vrot.slane %v1614, 7
    %v1831 = vsel %vm1782, %v1830, %v1613
    %v1832 = vrot.slane %v1615, 6
    %v1833 = vsel %vm1785, %v1832, %v1831
    %v1834 = vrot.slane %v1616, 5
    %v1835 = vsel %vm1788, %v1834, %v1833
    %v1836 = vrot.slane %v1617, 4
    %v1837 = vsel %vm1791, %v1836, %v1835
    %v1838 = vrot.slane %v1618, 3
    %v1839 = vsel %vm1794, %v1838, %v1837
    %v1840 = vrot.slane %v1619, 2
    %v1841 = vsel %vm1797, %v1840, %v1839
    %v1842 = vrot.slane %v1620, 1
    %v1843 = vsel %vm1800, %v1842, %v1841
    %v1844 = vrot.slane %v1622, 7
    %v1845 = vsel %vm1782, %v1844, %v1621
    %v1846 = vrot.slane %v1623, 6
    %v1847 = vsel %vm1785, %v1846, %v1845
    %v1848 = vrot.slane %v1624, 5
    %v1849 = vsel %vm1788, %v1848, %v1847
    %v1850 = vrot.slane %v1625, 4
    %v1851 = vsel %vm1791, %v1850, %v1849
    %v1852 = vrot.slane %v1626, 3
    %v1853 = vsel %vm1794, %v1852, %v1851
    %v1854 = vrot.slane %v1627, 2
    %v1855 = vsel %vm1797, %v1854, %v1853
    %v1856 = vrot.slane %v1628, 1
    %v1857 = vsel %vm1800, %v1856, %v1855
    %v1858 = vrot.slane %v1630, 7
    %v1859 = vsel %vm1782, %v1858, %v1629
    %v1860 = vrot.slane %v1631, 6
    %v1861 = vsel %vm1785, %v1860, %v1859
    %v1862 = vrot.slane %v1632, 5
    %v1863 = vsel %vm1788, %v1862, %v1861
    %v1864 = vrot.slane %v1633, 4
    %v1865 = vsel %vm1791, %v1864, %v1863
    %v1866 = vrot.slane %v1634, 3
    %v1867 = vsel %vm1794, %v1866, %v1865
    %v1868 = vrot.slane %v1635, 2
    %v1869 = vsel %vm1797, %v1868, %v1867
    %v1870 = vrot.slane %v1636, 1
    %v1871 = vsel %vm1800, %v1870, %v1869
    %v1878 = vmul.f32 %v1175, %v1801
    %v1879 = vmul.f32 %v1181, %v1815
    %v1880 = vmul.f32 %v1187, %v1829
    %v1881 = vmul.f32 %v1193, %v1843
    %v1882 = vmul.f32 %v1199, %v1857
    %v1883 = vmul.f32 %v1205, %v1871
    %v1932 = vrot.slane %v1638, 7
    %v1933 = vsel %vm1782, %v1932, %v1637
    %v1934 = vrot.slane %v1639, 6
    %v1935 = vsel %vm1785, %v1934, %v1933
    %v1936 = vrot.slane %v1640, 5
    %v1937 = vsel %vm1788, %v1936, %v1935
    %v1938 = vrot.slane %v1641, 4
    %v1939 = vsel %vm1791, %v1938, %v1937
    %v1940 = vrot.slane %v1642, 3
    %v1941 = vsel %vm1794, %v1940, %v1939
    %v1942 = vrot.slane %v1643, 2
    %v1943 = vsel %vm1797, %v1942, %v1941
    %v1944 = vrot.slane %v1644, 1
    %v1945 = vsel %vm1800, %v1944, %v1943
    %v1946 = vrot.slane %v1646, 7
    %v1947 = vsel %vm1782, %v1946, %v1645
    %v1948 = vrot.slane %v1647, 6
    %v1949 = vsel %vm1785, %v1948, %v1947
    %v1950 = vrot.slane %v1648, 5
    %v1951 = vsel %vm1788, %v1950, %v1949
    %v1952 = vrot.slane %v1649, 4
    %v1953 = vsel %vm1791, %v1952, %v1951
    %v1954 = vrot.slane %v1650, 3
    %v1955 = vsel %vm1794, %v1954, %v1953
    %v1956 = vrot.slane %v1651, 2
    %v1957 = vsel %vm1797, %v1956, %v1955
    %v1958 = vrot.slane %v1652, 1
    %v1959 = vsel %vm1800, %v1958, %v1957
    %v1960 = vrot.slane %v1654, 7
    %v1961 = vsel %vm1782, %v1960, %v1653
    %v1962 = vrot.slane %v1655, 6
    %v1963 = vsel %vm1785, %v1962, %v1961
    %v1964 = vrot.slane %v1656, 5
    %v1965 = vsel %vm1788, %v1964, %v1963
    %v1966 = vrot.slane %v1657, 4
    %v1967 = vsel %vm1791, %v1966, %v1965
    %v1968 = vrot.slane %v1658, 3
    %v1969 = vsel %vm1794, %v1968, %v1967
    %v1970 = vrot.slane %v1659, 2
    %v1971 = vsel %vm1797, %v1970, %v1969
    %v1972 = vrot.slane %v1660, 1
    %v1973 = vsel %vm1800, %v1972, %v1971
    %v1974 = vrot.slane %v1662, 7
    %v1975 = vsel %vm1782, %v1974, %v1661
    %v1976 = vrot.slane %v1663, 6
    %v1977 = vsel %vm1785, %v1976, %v1975
    %v1978 = vrot.slane %v1664, 5
    %v1979 = vsel %vm1788, %v1978, %v1977
    %v1980 = vrot.slane %v1665, 4
    %v1981 = vsel %vm1791, %v1980, %v1979
    %v1982 = vrot.slane %v1666, 3
    %v1983 = vsel %vm1794, %v1982, %v1981
    %v1984 = vrot.slane %v1667, 2
    %v1985 = vsel %vm1797, %v1984, %v1983
    %v1986 = vrot.slane %v1668, 1
    %v1987 = vsel %vm1800, %v1986, %v1985
    %v1988 = vrot.slane %v1670, 7
    %v1989 = vsel %vm1782, %v1988, %v1669
    %v1990 = vrot.slane %v1671, 6
    %v1991 = vsel %vm1785, %v1990, %v1989
    %v1992 = vrot.slane %v1672, 5
    %v1993 = vsel %vm1788, %v1992, %v1991
    %v1994 = vrot.slane %v1673, 4
    %v1995 = vsel %vm1791, %v1994, %v1993
    %v1996 = vrot.slane %v1674, 3
    %v1997 = vsel %vm1794, %v1996, %v1995
    %v1998 = vrot.slane %v1675, 2
    %v1999 = vsel %vm1797, %v1998, %v1997
    %v2000 = vrot.slane %v1676, 1
    %v2001 = vsel %vm1800, %v2000, %v1999
    %v2002 = vrot.slane %v1678, 7
    %v2003 = vsel %vm1782, %v2002, %v1677
    %v2004 = vrot.slane %v1679, 6
    %v2005 = vsel %vm1785, %v2004, %v2003
    %v2006 = vrot.slane %v1680, 5
    %v2007 = vsel %vm1788, %v2006, %v2005
    %v2008 = vrot.slane %v1681, 4
    %v2009 = vsel %vm1791, %v2008, %v2007
    %v2010 = vrot.slane %v1682, 3
    %v2011 = vsel %vm1794, %v2010, %v2009
    %v2012 = vrot.slane %v1683, 2
    %v2013 = vsel %vm1797, %v2012, %v2011
    %v2014 = vrot.slane %v1684, 1
    %v2015 = vsel %vm1800, %v2014, %v2013
    %v2022 = vmul.f32 %v1177, %v1945
    %v2023 = vmul.f32 %v1183, %v1959
    %v2024 = vmul.f32 %v1189, %v1973
    %v2025 = vmul.f32 %v1195, %v1987
    %v2026 = vmul.f32 %v1201, %v2001
    %v2027 = vmul.f32 %v1207, %v2015
    %v2028 = vadd.f32 %v1878, %v2022
    %v2029 = vadd.f32 %v1879, %v2023
    %v2030 = vadd.f32 %v1880, %v2024
    %v2031 = vadd.f32 %v1881, %v2025
    %v2032 = vadd.f32 %v1882, %v2026
    %v2033 = vadd.f32 %v1883, %v2027
    %v2034 = vmul.f32 %v1177, %v1801
    %v2035 = vmul.f32 %v1183, %v1815
    %v2036 = vmul.f32 %v1189, %v1829
    %v2037 = vmul.f32 %v1195, %v1843
    %v2038 = vmul.f32 %v1201, %v1857
    %v2039 = vmul.f32 %v1207, %v1871
    %v2040 = vmul.f32 %v1175, %v1945
    %v2041 = vmul.f32 %v1181, %v1959
    %v2042 = vmul.f32 %v1187, %v1973
    %v2043 = vmul.f32 %v1193, %v1987
    %v2044 = vmul.f32 %v1199, %v2001
    %v2045 = vmul.f32 %v1205, %v2015
    %v2046 = vsub.f32 %v2034, %v2040
    %v2047 = vsub.f32 %v2035, %v2041
    %v2048 = vsub.f32 %v2036, %v2042
    %v2049 = vsub.f32 %v2037, %v2043
    %v2050 = vsub.f32 %v2038, %v2044
    %v2051 = vsub.f32 %v2039, %v2045
    %v2052 = vand.u32 2147483647, %v2028
    %v2053 = vand.u32 2147483647, %v2029
    %v2054 = vand.u32 2147483647, %v2030
    %v2055 = vand.u32 2147483647, %v2031
    %v2056 = vand.u32 2147483647, %v2032
    %v2057 = vand.u32 2147483647, %v2033
    %vm2058 = vcmp.lt.f32.partialorder %v2052, 1e-10
    %vm2059 = vcmp.lt.f32.partialorder %v2053, 1e-10
    %vm2060 = vcmp.lt.f32.partialorder %v2054, 1e-10
    %vm2061 = vcmp.lt.f32.partialorder %v2055, 1e-10
    %vm2062 = vcmp.lt.f32.partialorder %v2056, 1e-10
    %vm2063 = vcmp.lt.f32.partialorder %v2057, 1e-10
    %v2064 = vsel %vm2058, 1e-10, %v2028
    %v2065 = vsel %vm2059, 1e-10, %v2029
    %v2066 = vsel %vm2060, 1e-10, %v2030
    %v2067 = vsel %vm2061, 1e-10, %v2031
    %v2068 = vsel %vm2062, 1e-10, %v2032
    %v2069 = vsel %vm2063, 1e-10, %v2033
    %v2070 = vand.u32 2147483647, %v2046
    %v2071 = vand.u32 2147483647, %v2047
    %v2072 = vand.u32 2147483647, %v2048
    %v2073 = vand.u32 2147483647, %v2049
    %v2074 = vand.u32 2147483647, %v2050
    %v2075 = vand.u32 2147483647, %v2051
    %vm2076 = vcmp.lt.f32.partialorder %v2070, 1e-10
    %vm2077 = vcmp.lt.f32.partialorder %v2071, 1e-10
    %vm2078 = vcmp.lt.f32.partialorder %v2072, 1e-10
    %vm2079 = vcmp.lt.f32.partialorder %v2073, 1e-10
    %vm2080 = vcmp.lt.f32.partialorder %v2074, 1e-10
    %vm2081 = vcmp.lt.f32.partialorder %v2075, 1e-10
    %v2082 = vsel %vm2076, 1e-10, %v2046
    %v2083 = vsel %vm2077, 1e-10, %v2047
    %v2084 = vsel %vm2078, 1e-10, %v2048
    %v2085 = vsel %vm2079, 1e-10, %v2049
    %v2086 = vsel %vm2080, 1e-10, %v2050
    %v2087 = vsel %vm2081, 1e-10, %v2051
    %v2088 = vand.u32 2147483647, %v2082
    %v2089 = vand.u32 2147483647, %v2083
    %v2090 = vand.u32 2147483647, %v2084
    %v2091 = vand.u32 2147483647, %v2085
    %v2092 = vand.u32 2147483647, %v2086
    %v2093 = vand.u32 2147483647, %v2087
    %v2094 = vand.u32 2147483647, %v2064
    %v2095 = vand.u32 2147483647, %v2065
    %v2096 = vand.u32 2147483647, %v2066
    %v2097 = vand.u32 2147483647, %v2067
    %v2098 = vand.u32 2147483647, %v2068
    %v2099 = vand.u32 2147483647, %v2069
    %v2100 = vmax.f32 %v2088, %v2094
    %v2101 = vmax.f32 %v2089, %v2095
    %v2102 = vmax.f32 %v2090, %v2096
    %v2103 = vmax.f32 %v2091, %v2097
    %v2104 = vmax.f32 %v2092, %v2098
    %v2105 = vmax.f32 %v2093, %v2099
    %v2106 = vmin.f32 %v2088, %v2094
    %v2107 = vmin.f32 %v2089, %v2095
    %v2108 = vmin.f32 %v2090, %v2096
    %v2109 = vmin.f32 %v2091, %v2097
    %v2110 = vmin.f32 %v2092, %v2098
    %v2111 = vmin.f32 %v2093, %v2099
    %v2112 = vrcp.pop %v2100
    %v2113 = vmul.f32 %v2106, %v2112
    %v2114 = vrcp.pop %v2101
    %v2115 = vmul.f32 %v2107, %v2114
    %v2116 = vrcp.pop %v2102
    %v2117 = vmul.f32 %v2108, %v2116
    %v2118 = vrcp.pop %v2103
    %v2119 = vmul.f32 %v2109, %v2118
    %v2120 = vrcp.pop %v2104
    %v2121 = vmul.f32 %v2110, %v2120
    %v2122 = vrcp.pop %v2105
    %v2123 = vmul.f32 %v2111, %v2122
    %vm2124 = vcmp.gt.f32.partialorder %v2113, 0.41421357
    %vm2125 = vcmp.gt.f32.partialorder %v2115, 0.41421357
    %vm2126 = vcmp.gt.f32.partialorder %v2117, 0.41421357
    %vm2127 = vcmp.gt.f32.partialorder %v2119, 0.41421357
    %vm2128 = vcmp.gt.f32.partialorder %v2121, 0.41421357
    %vm2129 = vcmp.gt.f32.partialorder %v2123, 0.41421357
    %v2130 = vsub.f32 %v2113, 1.0
    %v2131 = vsub.f32 %v2115, 1.0
    %v2132 = vsub.f32 %v2117, 1.0
    %v2133 = vsub.f32 %v2119, 1.0
    %v2134 = vsub.f32 %v2121, 1.0
    %v2135 = vsub.f32 %v2123, 1.0
    %v2136 = vadd.f32 %v2113, 1.0
    %v2137 = vadd.f32 %v2115, 1.0
    %v2138 = vadd.f32 %v2117, 1.0
    %v2139 = vadd.f32 %v2119, 1.0
    %v2140 = vadd.f32 %v2121, 1.0
    %v2141 = vadd.f32 %v2123, 1.0
    %v2142 = vrcp.pop %v2136
    %v2143 = vmul.f32 %v2130, %v2142
    %v2144 = vrcp.pop %v2137
    %v2145 = vmul.f32 %v2131, %v2144
    %v2146 = vrcp.pop %v2138
    %v2147 = vmul.f32 %v2132, %v2146
    %v2148 = vrcp.pop %v2139
    %v2149 = vmul.f32 %v2133, %v2148
    %v2150 = vrcp.pop %v2140
    %v2151 = vmul.f32 %v2134, %v2150
    %v2152 = vrcp.pop %v2141
    %v2153 = vmul.f32 %v2135, %v2152
    %v2154 = vsel %vm2124, %v2143, %v2113
    %v2155 = vsel %vm2125, %v2145, %v2115
    %v2156 = vsel %vm2126, %v2147, %v2117
    %v2157 = vsel %vm2127, %v2149, %v2119
    %v2158 = vsel %vm2128, %v2151, %v2121
    %v2159 = vsel %vm2129, %v2153, %v2123
    %v2160 = vmul.f32 %v2154, %v2154
    %v2161 = vmul.f32 %v2155, %v2155
    %v2162 = vmul.f32 %v2156, %v2156
    %v2163 = vmul.f32 %v2157, %v2157
    %v2164 = vmul.f32 %v2158, %v2158
    %v2165 = vmul.f32 %v2159, %v2159
    %v2166 = vmul.f32 %v2160, 0.080537446
    %v2167 = vmul.f32 %v2161, 0.080537446
    %v2168 = vmul.f32 %v2162, 0.080537446
    %v2169 = vmul.f32 %v2163, 0.080537446
    %v2170 = vmul.f32 %v2164, 0.080537446
    %v2171 = vmul.f32 %v2165, 0.080537446
    %v2172 = vsub.f32 %v2166, 0.13877685
    %v2173 = vsub.f32 %v2167, 0.13877685
    %v2174 = vsub.f32 %v2168, 0.13877685
    %v2175 = vsub.f32 %v2169, 0.13877685
    %v2176 = vsub.f32 %v2170, 0.13877685
    %v2177 = vsub.f32 %v2171, 0.13877685
    %v2178 = vmul.f32 %v2172, %v2160
    %v2179 = vmul.f32 %v2173, %v2161
    %v2180 = vmul.f32 %v2174, %v2162
    %v2181 = vmul.f32 %v2175, %v2163
    %v2182 = vmul.f32 %v2176, %v2164
    %v2183 = vmul.f32 %v2177, %v2165
    %v2184 = vadd.f32 %v2178, 0.19977711
    %v2185 = vadd.f32 %v2179, 0.19977711
    %v2186 = vadd.f32 %v2180, 0.19977711
    %v2187 = vadd.f32 %v2181, 0.19977711
    %v2188 = vadd.f32 %v2182, 0.19977711
    %v2189 = vadd.f32 %v2183, 0.19977711
    %v2190 = vmul.f32 %v2184, %v2160
    %v2191 = vmul.f32 %v2185, %v2161
    %v2192 = vmul.f32 %v2186, %v2162
    %v2193 = vmul.f32 %v2187, %v2163
    %v2194 = vmul.f32 %v2188, %v2164
    %v2195 = vmul.f32 %v2189, %v2165
    %v2196 = vsub.f32 %v2190, 0.3333295
    %v2197 = vsub.f32 %v2191, 0.3333295
    %v2198 = vsub.f32 %v2192, 0.3333295
    %v2199 = vsub.f32 %v2193, 0.3333295
    %v2200 = vsub.f32 %v2194, 0.3333295
    %v2201 = vsub.f32 %v2195, 0.3333295
    %v2202 = vmul.f32 %v2196, %v2160
    %v2203 = vmul.f32 %v2197, %v2161
    %v2204 = vmul.f32 %v2198, %v2162
    %v2205 = vmul.f32 %v2199, %v2163
    %v2206 = vmul.f32 %v2200, %v2164
    %v2207 = vmul.f32 %v2201, %v2165
    %v2208 = vmul.f32 %v2202, %v2154
    %v2209 = vmul.f32 %v2203, %v2155
    %v2210 = vmul.f32 %v2204, %v2156
    %v2211 = vmul.f32 %v2205, %v2157
    %v2212 = vmul.f32 %v2206, %v2158
    %v2213 = vmul.f32 %v2207, %v2159
    %v2214 = vadd.f32 %v2208, %v2154
    %v2215 = vadd.f32 %v2209, %v2155
    %v2216 = vadd.f32 %v2210, %v2156
    %v2217 = vadd.f32 %v2211, %v2157
    %v2218 = vadd.f32 %v2212, %v2158
    %v2219 = vadd.f32 %v2213, %v2159
    %v2220 = vadd.f32 %v2214, 0.7853982
    %v2221 = vadd.f32 %v2215, 0.7853982
    %v2222 = vadd.f32 %v2216, 0.7853982
    %v2223 = vadd.f32 %v2217, 0.7853982
    %v2224 = vadd.f32 %v2218, 0.7853982
    %v2225 = vadd.f32 %v2219, 0.7853982
    %v2226 = vsel %vm2124, %v2220, %v2214
    %v2227 = vsel %vm2125, %v2221, %v2215
    %v2228 = vsel %vm2126, %v2222, %v2216
    %v2229 = vsel %vm2127, %v2223, %v2217
    %v2230 = vsel %vm2128, %v2224, %v2218
    %v2231 = vsel %vm2129, %v2225, %v2219
    %vm2232 = vcmp.gt.f32.partialorder %v2088, %v2094
    %vm2233 = vcmp.gt.f32.partialorder %v2089, %v2095
    %vm2234 = vcmp.gt.f32.partialorder %v2090, %v2096
    %vm2235 = vcmp.gt.f32.partialorder %v2091, %v2097
    %vm2236 = vcmp.gt.f32.partialorder %v2092, %v2098
    %vm2237 = vcmp.gt.f32.partialorder %v2093, %v2099
    %v2238 = vsub.f32 1.5707964, %v2226
    %v2239 = vsub.f32 1.5707964, %v2227
    %v2240 = vsub.f32 1.5707964, %v2228
    %v2241 = vsub.f32 1.5707964, %v2229
    %v2242 = vsub.f32 1.5707964, %v2230
    %v2243 = vsub.f32 1.5707964, %v2231
    %v2244 = vsel %vm2232, %v2238, %v2226
    %v2245 = vsel %vm2233, %v2239, %v2227
    %v2246 = vsel %vm2234, %v2240, %v2228
    %v2247 = vsel %vm2235, %v2241, %v2229
    %v2248 = vsel %vm2236, %v2242, %v2230
    %v2249 = vsel %vm2237, %v2243, %v2231
    %vm2250 = vcmp.lt.f32.partialorder %v2064, 0.0
    %vm2251 = vcmp.lt.f32.partialorder %v2065, 0.0
    %vm2252 = vcmp.lt.f32.partialorder %v2066, 0.0
    %vm2253 = vcmp.lt.f32.partialorder %v2067, 0.0
    %vm2254 = vcmp.lt.f32.partialorder %v2068, 0.0
    %vm2255 = vcmp.lt.f32.partialorder %v2069, 0.0
    %v2256 = vsub.f32 3.1415927, %v2244
    %v2257 = vsub.f32 3.1415927, %v2245
    %v2258 = vsub.f32 3.1415927, %v2246
    %v2259 = vsub.f32 3.1415927, %v2247
    %v2260 = vsub.f32 3.1415927, %v2248
    %v2261 = vsub.f32 3.1415927, %v2249
    %v2262 = vsel %vm2250, %v2256, %v2244
    %v2263 = vsel %vm2251, %v2257, %v2245
    %v2264 = vsel %vm2252, %v2258, %v2246
    %v2265 = vsel %vm2253, %v2259, %v2247
    %v2266 = vsel %vm2254, %v2260, %v2248
    %v2267 = vsel %vm2255, %v2261, %v2249
    %v2268 = vadd.f32 %v1561, %v2262
    %v2269 = vadd.f32 %v1566, %v2263
    %v2270 = vadd.f32 %v1571, %v2264
    %v2271 = vadd.f32 %v1576, %v2265
    %v2272 = vadd.f32 %v1581, %v2266
    %v2273 = vadd.f32 %v1586, %v2267
    %v2322 = vrot.slane %v1686, 7
    %v2323 = vsel %vm1782, %v2322, %v1685
    %v2324 = vrot.slane %v1687, 6
    %v2325 = vsel %vm1785, %v2324, %v2323
    %v2326 = vrot.slane %v1688, 5
    %v2327 = vsel %vm1788, %v2326, %v2325
    %v2328 = vrot.slane %v1689, 4
    %v2329 = vsel %vm1791, %v2328, %v2327
    %v2330 = vrot.slane %v1690, 3
    %v2331 = vsel %vm1794, %v2330, %v2329
    %v2332 = vrot.slane %v1691, 2
    %v2333 = vsel %vm1797, %v2332, %v2331
    %v2334 = vrot.slane %v1692, 1
    %v2335 = vsel %vm1800, %v2334, %v2333
    %v2336 = vrot.slane %v1694, 7
    %v2337 = vsel %vm1782, %v2336, %v1693
    %v2338 = vrot.slane %v1695, 6
    %v2339 = vsel %vm1785, %v2338, %v2337
    %v2340 = vrot.slane %v1696, 5
    %v2341 = vsel %vm1788, %v2340, %v2339
    %v2342 = vrot.slane %v1697, 4
    %v2343 = vsel %vm1791, %v2342, %v2341
    %v2344 = vrot.slane %v1698, 3
    %v2345 = vsel %vm1794, %v2344, %v2343
    %v2346 = vrot.slane %v1699, 2
    %v2347 = vsel %vm1797, %v2346, %v2345
    %v2348 = vrot.slane %v1700, 1
    %v2349 = vsel %vm1800, %v2348, %v2347
    %v2350 = vrot.slane %v1702, 7
    %v2351 = vsel %vm1782, %v2350, %v1701
    %v2352 = vrot.slane %v1703, 6
    %v2353 = vsel %vm1785, %v2352, %v2351
    %v2354 = vrot.slane %v1704, 5
    %v2355 = vsel %vm1788, %v2354, %v2353
    %v2356 = vrot.slane %v1705, 4
    %v2357 = vsel %vm1791, %v2356, %v2355
    %v2358 = vrot.slane %v1706, 3
    %v2359 = vsel %vm1794, %v2358, %v2357
    %v2360 = vrot.slane %v1707, 2
    %v2361 = vsel %vm1797, %v2360, %v2359
    %v2362 = vrot.slane %v1708, 1
    %v2363 = vsel %vm1800, %v2362, %v2361
    %v2364 = vrot.slane %v1710, 7
    %v2365 = vsel %vm1782, %v2364, %v1709
    %v2366 = vrot.slane %v1711, 6
    %v2367 = vsel %vm1785, %v2366, %v2365
    %v2368 = vrot.slane %v1712, 5
    %v2369 = vsel %vm1788, %v2368, %v2367
    %v2370 = vrot.slane %v1713, 4
    %v2371 = vsel %vm1791, %v2370, %v2369
    %v2372 = vrot.slane %v1714, 3
    %v2373 = vsel %vm1794, %v2372, %v2371
    %v2374 = vrot.slane %v1715, 2
    %v2375 = vsel %vm1797, %v2374, %v2373
    %v2376 = vrot.slane %v1716, 1
    %v2377 = vsel %vm1800, %v2376, %v2375
    %v2378 = vrot.slane %v1718, 7
    %v2379 = vsel %vm1782, %v2378, %v1717
    %v2380 = vrot.slane %v1719, 6
    %v2381 = vsel %vm1785, %v2380, %v2379
    %v2382 = vrot.slane %v1720, 5
    %v2383 = vsel %vm1788, %v2382, %v2381
    %v2384 = vrot.slane %v1721, 4
    %v2385 = vsel %vm1791, %v2384, %v2383
    %v2386 = vrot.slane %v1722, 3
    %v2387 = vsel %vm1794, %v2386, %v2385
    %v2388 = vrot.slane %v1723, 2
    %v2389 = vsel %vm1797, %v2388, %v2387
    %v2390 = vrot.slane %v1724, 1
    %v2391 = vsel %vm1800, %v2390, %v2389
    %v2392 = vrot.slane %v1726, 7
    %v2393 = vsel %vm1782, %v2392, %v1725
    %v2394 = vrot.slane %v1727, 6
    %v2395 = vsel %vm1785, %v2394, %v2393
    %v2396 = vrot.slane %v1728, 5
    %v2397 = vsel %vm1788, %v2396, %v2395
    %v2398 = vrot.slane %v1729, 4
    %v2399 = vsel %vm1791, %v2398, %v2397
    %v2400 = vrot.slane %v1730, 3
    %v2401 = vsel %vm1794, %v2400, %v2399
    %v2402 = vrot.slane %v1731, 2
    %v2403 = vsel %vm1797, %v2402, %v2401
    %v2404 = vrot.slane %v1732, 1
    %v2405 = vsel %vm1800, %v2404, %v2403
    %v2412 = vmul.f32 %v2268, %v2335
    %v2413 = vmul.f32 %v2269, %v2349
    %v2414 = vmul.f32 %v2270, %v2363
    %v2415 = vmul.f32 %v2271, %v2377
    %v2416 = vmul.f32 %v2272, %v2391
    %v2417 = vmul.f32 %v2273, %v2405
    %v2418 = vlaneseq
    %v2419 = vshrl.u32 %v2418, 7
    %v2420 = vmul.u32 %v2419, 6
    %vm2421 = vcmp.ge.s32.totalorder %v35, %v2420
    %v2422 = vadd.s32 %v2420, 6
    %vm2423 = vcmp.lt.s32.totalorder %v35, %v2422
    %vm2424 = vmand %vm2421, %vm2423
    %v2425 = vsel %vm2424, 1, 0
    %v2426 = vcvt.s32.f32 %v2425
    %vm2427 = vcmask 392192
    %v2429 = vsel %vm2427, %v2426, 0
    %2431 = vmatprep.subr.mxu0 0.0
    %2432 = vmatpush1.msra.mxu0 0.0
    %2433 = vmatprep.subr.mxu0 0.0
    %2434 = vmatpush1.msra.mxu0 0.0
    %2435 = vmatprep.subr.mxu0 0.0
    %2436 = vmatpush1.msra.mxu0 0.0
    %2437 = vmatprep.subr.mxu0 0.0
    %2438 = vmatpush1.msra.mxu0 0.0
    %2439 = vmatprep.subr.mxu0 0.0
    %2440 = vmatpush1.msra.mxu0 0.0
    %2441 = vmatprep.subr.mxu0 0.0
    %2442 = vmatpush1.msra.mxu0 0.0
    %2443 = vmatprep.subr.mxu0 0.0
    %2444 = vmatpush1.msra.mxu0 0.0
    %2445 = vmatprep.subr.mxu0 0.0
    %2446 = vmatpush1.msra.mxu0 0.0
    %2447 = vmatprep.subr.mxu0 0.0
    %2448 = vmatpush1.msra.mxu0 0.0
    %2449 = vmatprep.subr.mxu0 0.0
    %2450 = vmatpush1.msra.mxu0 0.0
    %2451 = vmatprep.subr.mxu0 0.0
    %2452 = vmatpush1.msra.mxu0 %v2417
    %2453 = vmatprep.subr.mxu0 0.0
    %2454 = vmatpush1.msra.mxu0 %v2416
    %2455 = vmatprep.subr.mxu0 0.0
    %2456 = vmatpush1.msra.mxu0 %v2415
    %2457 = vmatprep.subr.mxu0 0.0
    %2458 = vmatpush1.msra.mxu0 %v2414
    %2459 = vmatprep.subr.mxu0 0.0
    %2460 = vmatpush1.msra.mxu0 %v2413
    %2461 = vmatprep.subr.mxu0 0.0
    %2462 = vmatpush1.msra.mxu0 %v2412
    %2463 = vmatprep.subr.mxu0 0.0
    %2464 = vmatpush2.msra.mxu0 0.0
    %2465 = vmatprep.subr.mxu0 0.0
    %2466 = vmatpush2.msra.mxu0 0.0
    %2467 = vmatprep.subr.mxu0 0.0
    %2468 = vmatpush2.msra.mxu0 0.0
    %2469 = vmatprep.subr.mxu0 0.0
    %2470 = vmatpush2.msra.mxu0 0.0
    %2471 = vmatprep.subr.mxu0 0.0
    %2472 = vmatpush2.msra.mxu0 0.0
    %2473 = vmatprep.subr.mxu0 0.0
    %2474 = vmatpush2.msra.mxu0 0.0
    %2475 = vmatprep.subr.mxu0 0.0
    %2476 = vmatpush2.msra.mxu0 0.0
    %2477 = vmatprep.subr.mxu0 0.0
    %2478 = vmatpush2.msra.mxu0 0.0
    %2479 = vmatprep.subr.mxu0 0.0
    %2480 = vmatpush2.msra.mxu0 0.0
    %2481 = vmatprep.subr.mxu0 0.0
    %2482 = vmatpush2.msra.mxu0 0.0
    %2483 = vmatprep.subr.mxu0 0.0
    %2484 = vmatpush2.msra.mxu0 0.0
    %2485 = vmatprep.subr.mxu0 0.0
    %2486 = vmatpush2.msra.mxu0 0.0
    %2487 = vmatprep.subr.mxu0 0.0
    %2488 = vmatpush2.msra.mxu0 0.0
    %2489 = vmatprep.subr.mxu0 0.0
    %2490 = vmatpush2.msra.mxu0 0.0
    %2491 = vmatprep.subr.mxu0 0.0
    %2492 = vmatpush2.msra.mxu0 0.0
    %2493 = vmatprep.subr.mxu0 0.0
    %2494 = vmatpush2.msra.mxu0 0.0
    %2495 = vmatprep.mubr.f32.mxu0 0.0
    %2496 = vmatmul.mubr.f32.gmra.mxu0 %v2429
    %v2497 = vpop.f32.mrf.mxu0
    %v2498 = vadd.f32 0.0, %v2497
    %v2499 = vpop.f32.mrf.mxu0
    %2500 = vdwg.mxu0
    %2501 = vrot.lane.b32.xlu0 %v2498, 64
    %v2502 = vpop.permute.xlu0 %2501
    %v2503 = vadd.f32 %v2498, %v2502
    %vm2504 = vcmp.lt.s32.totalorder %v35, 64
    %v2505 = vsel %vm2504, %v2503, -inf
    %vm2506 = vcmask 523264
    %v2507 = vsel %vm2506, %v2505, -inf
    %2508 = vmax.xlane.f32.xlu0 %v2507
    %v2509 = vpop.xlane.xlu0 %2508
    %vm2510 = vcmp.eq.f32.partialorder %v2505, %v2509
    %v2511 = vsel %vm2510, %v35, 64
    %v2512 = vsel %vm2506, %v2511, 2147483647
    %v2513 = vand.u32 %v2512, 65535
    %v2514 = vshra.s32 %v2512, 16
    %v2515 = vcvt.s32.f32 %v2513
    %v2516 = vcvt.s32.f32 %v2514
    %2517 = vmin.xlane.f32.xlu0 %v2516
    %v2518 = vpop.xlane.xlu0 %2517
    %vm2519 = vcmp.eq.f32.partialorder %v2516, %v2518
    %v2520 = vsel %vm2519, %v2515, inf
    %2521 = vmin.xlane.f32.xlu0 %v2520
    %v2522 = vpop.xlane.xlu0 %2521
    %v2523 = vcvt.f32.s32 %v2522
    %v2524 = vcvt.f32.s32 %v2518
    %v2525 = vshll.u32 %v2524, 16
    %v2526 = vadd.s32 %v2525, %v2523
    %vm2527 = vcmp.eq.s32.totalorder %v35, %v2526
    %v2528 = vsel %vm2527, 1.0, 0.0
    %v2529 = vsel %vm2527, -inf, %v2505
    %v2530 = vsel %vm2506, %v2529, -inf
    %2531 = vmax.xlane.f32.xlu0 %v2530
    %v2532 = vpop.xlane.xlu0 %2531
    %vm2533 = vcmp.eq.f32.partialorder %v2529, %v2532
    %v2534 = vsel %vm2533, %v35, 64
    %v2535 = vsel %vm2506, %v2534, 2147483647
    %v2536 = vand.u32 %v2535, 65535
    %v2537 = vshra.s32 %v2535, 16
    %v2538 = vcvt.s32.f32 %v2536
    %v2539 = vcvt.s32.f32 %v2537
    %2540 = vmin.xlane.f32.xlu0 %v2539
    %v2541 = vpop.xlane.xlu0 %2540
    %vm2542 = vcmp.eq.f32.partialorder %v2539, %v2541
    %v2543 = vsel %vm2542, %v2538, inf
    %2544 = vmin.xlane.f32.xlu0 %v2543
    %v2545 = vpop.xlane.xlu0 %2544
    %v2546 = vcvt.f32.s32 %v2545
    %v2547 = vcvt.f32.s32 %v2541
    %v2548 = vshll.u32 %v2547, 16
    %v2549 = vadd.s32 %v2548, %v2546
    %vm2550 = vcmp.eq.s32.totalorder %v35, %v2549
    %v2551 = vsel %vm2550, 1.0, %v2528
    %v2552 = vsel %vm2550, -inf, %v2529
    %v2553 = vsel %vm2506, %v2552, -inf
    %2554 = vmax.xlane.f32.xlu0 %v2553
    %v2555 = vpop.xlane.xlu0 %2554
    %vm2556 = vcmp.eq.f32.partialorder %v2552, %v2555
    %v2557 = vsel %vm2556, %v35, 64
    %v2558 = vsel %vm2506, %v2557, 2147483647
    %v2559 = vand.u32 %v2558, 65535
    %v2560 = vshra.s32 %v2558, 16
    %v2561 = vcvt.s32.f32 %v2559
    %v2562 = vcvt.s32.f32 %v2560
    %2563 = vmin.xlane.f32.xlu0 %v2562
    %v2564 = vpop.xlane.xlu0 %2563
    %vm2565 = vcmp.eq.f32.partialorder %v2562, %v2564
    %v2566 = vsel %vm2565, %v2561, inf
    %2567 = vmin.xlane.f32.xlu0 %v2566
    %v2568 = vpop.xlane.xlu0 %2567
    %v2569 = vcvt.f32.s32 %v2568
    %v2570 = vcvt.f32.s32 %v2564
    %v2571 = vshll.u32 %v2570, 16
    %v2572 = vadd.s32 %v2571, %v2569
    %vm2573 = vcmp.eq.s32.totalorder %v35, %v2572
    %v2574 = vsel %vm2573, 1.0, %v2551
    %v2575 = vsel %vm2573, -inf, %v2552
    %v2576 = vsel %vm2506, %v2575, -inf
    %2577 = vmax.xlane.f32.xlu0 %v2576
    %v2578 = vpop.xlane.xlu0 %2577
    %vm2579 = vcmp.eq.f32.partialorder %v2575, %v2578
    %v2580 = vsel %vm2579, %v35, 64
    %v2581 = vsel %vm2506, %v2580, 2147483647
    %v2582 = vand.u32 %v2581, 65535
    %v2583 = vshra.s32 %v2581, 16
    %v2584 = vcvt.s32.f32 %v2582
    %v2585 = vcvt.s32.f32 %v2583
    %2586 = vmin.xlane.f32.xlu0 %v2585
    %v2587 = vpop.xlane.xlu0 %2586
    %vm2588 = vcmp.eq.f32.partialorder %v2585, %v2587
    %v2589 = vsel %vm2588, %v2584, inf
    %2590 = vmin.xlane.f32.xlu0 %v2589
    %v2591 = vpop.xlane.xlu0 %2590
    %v2592 = vcvt.f32.s32 %v2591
    %v2593 = vcvt.f32.s32 %v2587
    %v2594 = vshll.u32 %v2593, 16
    %v2595 = vadd.s32 %v2594, %v2592
    %vm2596 = vcmp.eq.s32.totalorder %v35, %v2595
    %v2597 = vsel %vm2596, 1.0, %v2574
    %v2598 = vsel %vm2596, -inf, %v2575
    %v2599 = vsel %vm2506, %v2598, -inf
    %2600 = vmax.xlane.f32.xlu0 %v2599
    %v2601 = vpop.xlane.xlu0 %2600
    %vm2602 = vcmp.eq.f32.partialorder %v2598, %v2601
    %v2603 = vsel %vm2602, %v35, 64
    %v2604 = vsel %vm2506, %v2603, 2147483647
    %v2605 = vand.u32 %v2604, 65535
    %v2606 = vshra.s32 %v2604, 16
    %v2607 = vcvt.s32.f32 %v2605
    %v2608 = vcvt.s32.f32 %v2606
    %2609 = vmin.xlane.f32.xlu0 %v2608
    %v2610 = vpop.xlane.xlu0 %2609
    %vm2611 = vcmp.eq.f32.partialorder %v2608, %v2610
    %v2612 = vsel %vm2611, %v2607, inf
    %2613 = vmin.xlane.f32.xlu0 %v2612
    %v2614 = vpop.xlane.xlu0 %2613
    %v2615 = vcvt.f32.s32 %v2614
    %v2616 = vcvt.f32.s32 %v2610
    %v2617 = vshll.u32 %v2616, 16
    %v2618 = vadd.s32 %v2617, %v2615
    %vm2619 = vcmp.eq.s32.totalorder %v35, %v2618
    %v2620 = vsel %vm2619, 1.0, %v2597
    %v2621 = vsel %vm2619, -inf, %v2598
    %v2622 = vsel %vm2506, %v2621, -inf
    %2623 = vmax.xlane.f32.xlu0 %v2622
    %v2624 = vpop.xlane.xlu0 %2623
    %vm2625 = vcmp.eq.f32.partialorder %v2621, %v2624
    %v2626 = vsel %vm2625, %v35, 64
    %v2627 = vsel %vm2506, %v2626, 2147483647
    %v2628 = vand.u32 %v2627, 65535
    %v2629 = vshra.s32 %v2627, 16
    %v2630 = vcvt.s32.f32 %v2628
    %v2631 = vcvt.s32.f32 %v2629
    %2632 = vmin.xlane.f32.xlu0 %v2631
    %v2633 = vpop.xlane.xlu0 %2632
    %vm2634 = vcmp.eq.f32.partialorder %v2631, %v2633
    %v2635 = vsel %vm2634, %v2630, inf
    %2636 = vmin.xlane.f32.xlu0 %v2635
    %v2637 = vpop.xlane.xlu0 %2636
    %v2638 = vcvt.f32.s32 %v2637
    %v2639 = vcvt.f32.s32 %v2633
    %v2640 = vshll.u32 %v2639, 16
    %v2641 = vadd.s32 %v2640, %v2638
    %vm2642 = vcmp.eq.s32.totalorder %v35, %v2641
    %v2643 = vsel %vm2642, 1.0, %v2620
    %v2644 = vsel %vm2642, -inf, %v2621
    %v2645 = vsel %vm2506, %v2644, -inf
    %2646 = vmax.xlane.f32.xlu0 %v2645
    %v2647 = vpop.xlane.xlu0 %2646
    %vm2648 = vcmp.eq.f32.partialorder %v2644, %v2647
    %v2649 = vsel %vm2648, %v35, 64
    %v2650 = vsel %vm2506, %v2649, 2147483647
    %v2651 = vand.u32 %v2650, 65535
    %v2652 = vshra.s32 %v2650, 16
    %v2653 = vcvt.s32.f32 %v2651
    %v2654 = vcvt.s32.f32 %v2652
    %2655 = vmin.xlane.f32.xlu0 %v2654
    %v2656 = vpop.xlane.xlu0 %2655
    %vm2657 = vcmp.eq.f32.partialorder %v2654, %v2656
    %v2658 = vsel %vm2657, %v2653, inf
    %2659 = vmin.xlane.f32.xlu0 %v2658
    %v2660 = vpop.xlane.xlu0 %2659
    %v2661 = vcvt.f32.s32 %v2660
    %v2662 = vcvt.f32.s32 %v2656
    %v2663 = vshll.u32 %v2662, 16
    %v2664 = vadd.s32 %v2663, %v2661
    %vm2665 = vcmp.eq.s32.totalorder %v35, %v2664
    %v2666 = vsel %vm2665, 1.0, %v2643
    %v2667 = vsel %vm2665, -inf, %v2644
    %v2668 = vsel %vm2506, %v2667, -inf
    %2669 = vmax.xlane.f32.xlu0 %v2668
    %v2670 = vpop.xlane.xlu0 %2669
    %vm2671 = vcmp.eq.f32.partialorder %v2667, %v2670
    %v2672 = vsel %vm2671, %v35, 64
    %v2673 = vsel %vm2506, %v2672, 2147483647
    %v2674 = vand.u32 %v2673, 65535
    %v2675 = vshra.s32 %v2673, 16
    %v2676 = vcvt.s32.f32 %v2674
    %v2677 = vcvt.s32.f32 %v2675
    %2678 = vmin.xlane.f32.xlu0 %v2677
    %v2679 = vpop.xlane.xlu0 %2678
    %vm2680 = vcmp.eq.f32.partialorder %v2677, %v2679
    %v2681 = vsel %vm2680, %v2676, inf
    %2682 = vmin.xlane.f32.xlu0 %v2681
    %v2683 = vpop.xlane.xlu0 %2682
    %v2684 = vcvt.f32.s32 %v2683
    %v2685 = vcvt.f32.s32 %v2679
    %v2686 = vshll.u32 %v2685, 16
    %v2687 = vadd.s32 %v2686, %v2684
    %vm2688 = vcmp.eq.s32.totalorder %v35, %v2687
    %v2689 = vsel %vm2688, 1.0, %v2666
    %v2690 = vld [vmem:[%s3] sm:$0xff]
    %v2691 = vld [vmem:[%s3 + $0x8] sm:$0xff]
    %v2692 = vld [vmem:[%s3 + $0x10] sm:$0xff]
    %v2693 = vld [vmem:[%s3 + $0x18] sm:$0xff]
    %v2694 = vld [vmem:[%s3 + $0x20] sm:$0xff]
    %v2695 = vld [vmem:[%s3 + $0x28] sm:$0xff]
    %v2696 = vld [vmem:[%s3 + $0x30] sm:$0xff]
    %v2697 = vld [vmem:[%s3 + $0x38] sm:$0xff]
    %v2698 = vld [vmem:[%s4] sm:$0x1]
    %v2700 = vlaneseq
    %v2701 = vshrl.u32 %v2700, 7
    %v2702 = vsub.s32 0, %v2701
    %v2703 = vrot.slane %v2698, %v2702
    %v2706 = vsel %vm2506, %v2689, 0
    %2708 = vmatprep.subr.mxu0 0.0
    %2709 = vmatpush1.msra.mxu0 0.0
    %2710 = vmatprep.subr.mxu0 0.0
    %2711 = vmatpush1.msra.mxu0 0.0
    %2712 = vmatprep.subr.mxu0 0.0
    %2713 = vmatpush1.msra.mxu0 0.0
    %2714 = vmatprep.subr.mxu0 0.0
    %2715 = vmatpush1.msra.mxu0 0.0
    %2716 = vmatprep.subr.mxu0 0.0
    %2717 = vmatpush1.msra.mxu0 0.0
    %2718 = vmatprep.subr.mxu0 0.0
    %2719 = vmatpush1.msra.mxu0 0.0
    %2720 = vmatprep.subr.mxu0 0.0
    %2721 = vmatpush1.msra.mxu0 0.0
    %2722 = vmatprep.subr.mxu0 0.0
    %2723 = vmatpush1.msra.mxu0 0.0
    %2724 = vmatprep.subr.mxu0 0.0
    %2725 = vmatpush1.msra.mxu0 %v2697
    %2726 = vmatprep.subr.mxu0 0.0
    %2727 = vmatpush1.msra.mxu0 %v2696
    %2728 = vmatprep.subr.mxu0 0.0
    %2729 = vmatpush1.msra.mxu0 %v2695
    %2730 = vmatprep.subr.mxu0 0.0
    %2731 = vmatpush1.msra.mxu0 %v2694
    %2732 = vmatprep.subr.mxu0 0.0
    %2733 = vmatpush1.msra.mxu0 %v2693
    %2734 = vmatprep.subr.mxu0 0.0
    %2735 = vmatpush1.msra.mxu0 %v2692
    %2736 = vmatprep.subr.mxu0 0.0
    %2737 = vmatpush1.msra.mxu0 %v2691
    %2738 = vmatprep.subr.mxu0 0.0
    %2739 = vmatpush1.msra.mxu0 %v2690
    %2740 = vmatprep.subr.mxu0 0.0
    %2741 = vmatpush2.msra.mxu0 0.0
    %2742 = vmatprep.subr.mxu0 0.0
    %2743 = vmatpush2.msra.mxu0 0.0
    %2744 = vmatprep.subr.mxu0 0.0
    %2745 = vmatpush2.msra.mxu0 0.0
    %2746 = vmatprep.subr.mxu0 0.0
    %2747 = vmatpush2.msra.mxu0 0.0
    %2748 = vmatprep.subr.mxu0 0.0
    %2749 = vmatpush2.msra.mxu0 0.0
    %2750 = vmatprep.subr.mxu0 0.0
    %2751 = vmatpush2.msra.mxu0 0.0
    %2752 = vmatprep.subr.mxu0 0.0
    %2753 = vmatpush2.msra.mxu0 0.0
    %2754 = vmatprep.subr.mxu0 0.0
    %2755 = vmatpush2.msra.mxu0 0.0
    %2756 = vmatprep.subr.mxu0 0.0
    %2757 = vmatpush2.msra.mxu0 0.0
    %2758 = vmatprep.subr.mxu0 0.0
    %2759 = vmatpush2.msra.mxu0 0.0
    %2760 = vmatprep.subr.mxu0 0.0
    %2761 = vmatpush2.msra.mxu0 0.0
    %2762 = vmatprep.subr.mxu0 0.0
    %2763 = vmatpush2.msra.mxu0 0.0
    %2764 = vmatprep.subr.mxu0 0.0
    %2765 = vmatpush2.msra.mxu0 0.0
    %2766 = vmatprep.subr.mxu0 0.0
    %2767 = vmatpush2.msra.mxu0 0.0
    %2768 = vmatprep.subr.mxu0 0.0
    %2769 = vmatpush2.msra.mxu0 0.0
    %2770 = vmatprep.subr.mxu0 0.0
    %2771 = vmatpush2.msra.mxu0 0.0
    %2772 = vmatprep.mubr.f32.mxu0 0.0
    %2773 = vmatmul.mubr.f32.gmra.mxu0 %v2706
    %v2774 = vpop.f32.mrf.mxu0
    %v2775 = vadd.f32 %v2703, %v2774
    %v2776 = vpop.f32.mrf.mxu0
    %2777 = vdwg.mxu0
    %2778 = vst [vmem:[%s5] sm:$0xff] %v2775
    // Predicated region
    $region26: #{fruitfly_forward.1} parent=1 // pred_check
      _
    $region27: #{fruitfly_forward.1} parent=1 // pred_check_branch
      %2780 = sbr.rel (0) target = $region29
    $region28: #{fruitfly_forward.1} parent=1 // pred_region
      _
    $region29: #{fruitfly_forward.1} parent=1 // pred_fallthru
      _
    // Predicated region
    $region30: #{fruitfly_forward.1} parent=1 // pred_check
      _
    $region31: #{fruitfly_forward.1} parent=1 // pred_check_branch
      %2782 = sbr.rel (0) target = $region33
    $region32: #{fruitfly_forward.1} parent=1 // pred_region
      _
    $region33: #{fruitfly_forward.1} parent=1 // pred_fallthru
      _
    %2783 = vsyncpa [#allocation3], 1

</llo_original>
